<compile_context>
chip_gen: v7x
topology: tpu7x:2x2x1
jax: 0.10.0
libtpu: 0.0.40
codegen_flags: <defaults>
</compile_context>

<pallas_src>
import jax
import jax.numpy as jnp
from jax.experimental import pallas as pl
from jax.experimental.pallas import tpu as pltpu


def make_head_params(key, hidden):
    D = 3 * hidden
    F = 3 * D
    k1, k2, k3, k4, k5 = jax.random.split(key, 5)
    return dict(
        w_att=jax.random.normal(k1, (D, 1), jnp.float32) * 0.05,
        b_att=jnp.zeros((1, 1), jnp.float32),
        w1=jax.random.normal(k2, (F, 512), jnp.float32) * 0.02,
        b1=jax.random.normal(k3, (1, 512), jnp.float32) * 0.01,
        w2=jax.random.normal(k4, (512, 3), jnp.float32) * 0.02,
        b2=jax.random.normal(k5, (1, 3), jnp.float32) * 0.01,
    )


def _vmem_capacity_bytes():
    """Physical VMEM of the current chip (64 MiB v7x, 128 MiB v5e/v6e)."""
    try:
        return int(pltpu.get_tpu_info().vmem_capacity_bytes)
    except Exception:
        return 64 * 1024 * 1024        # conservative default = v7x per-TC VMEM


def _pick_batch_tile(B, L, D, budget_bytes):
    """Largest batch tile (multiple of 8, <= 128) whose per-tile footprint fits budget."""
    per_ex = (2 * L * D * 4            # double-buffered f32 x block
              + 4 * 8 * L * 4          # (8, L) mask / exp / softmax-weight temporaries
              + 2 * 8 * D * 4          # (8, D) feature rows + sliced span rows
              + 4 * 8 * 128 * 4        # (8, 1) start/end blocks (lane-padded, 2 bufs)
              + 2 * (512 + 128) * 4)   # MLP hidden + double-buffered (128,) out block
    fit = int(budget_bytes // max(per_ex, 1))
    if B <= 8:
        return B                       # single block: tb == Bp, no 8-alignment needed
    tb = min(fit, B, 128)
    tb = (tb // 8) * 8                 # round DOWN -- never silently exceed the budget
    if tb < 8:
        # TODO(synk): add an inner L grid axis with online (running max / denominator)
        # span softmax when even 8 examples/tile exceed VMEM (very long seqs on v7x).
        tb = 8
    if B >= 16:                        # >= 2 grid steps so v7x dual-TC sharding has work
        tb = min(tb, max(8, ((B // 2) // 8) * 8))
    return tb


def _weight_spec(shape, single_buffer):
    """Constant-index-map weight block; single pipeline buffer when supported."""
    index_map = lambda i, _n=len(shape): (0,) * _n
    if single_buffer:
        try:
            return pl.BlockSpec(shape, index_map, pipeline_mode=pl.Buffered(1))
        except TypeError:              # pipeline_mode kwarg unavailable on this JAX
            pass
    return pl.BlockSpec(shape, index_map)


def _head_forward(bert_outputs, offsets, params, *, weight_dtype, batch_tile,
                  single_buffer_weights):
    B, L, D = bert_outputs.shape
    F = 3 * D
    assert params["w1"].shape == (F, 512)

    # ----- host-side prep ------------------------------------------------------------
    # Clamp guards OOB only; inverted spans (start > end) give NaN exactly like the
    # PyTorch reference.
    offs = jnp.clip(offsets.astype(jnp.int32), 0, L - 1)
    # Three "spans" per example: span0, span1, and the cls token as a width-1 span (so
    # torch.gather becomes one more row of the same batched matmul).  Pad to 8 rows
    # (sublane multiple) with the valid [0, 0] span.
    starts = jnp.pad(jnp.stack([offs[:, 0], offs[:, 2], offs[:, 4]], axis=1),
                     ((0, 0), (0, 5)))                                    # (B, 8)
    ends = jnp.pad(jnp.stack([offs[:, 1], offs[:, 3], offs[:, 4]], axis=1),
                   ((0, 0), (0, 5)))                                      # (B, 8)

    wdt = jnp.dtype(weight_dtype)
    w_att = params["w_att"].reshape(1, 1, D).astype(wdt)
    b_att = params["b_att"].reshape(1, 1).astype(jnp.float32)
    w1 = params["w1"].astype(wdt)
    w1a, w1b, w1c = w1[0:D], w1[D:2 * D], w1[2 * D:3 * D]                 # (D, 512) x3
    b1 = params["b1"].reshape(1, 512).astype(jnp.float32)
    # Lane-dense output path: pad the 3 logits to 128 lanes (dense vst, dense MXU N).
    w2p = jnp.zeros((512, 128), wdt).at[:, :3].set(params["w2"].astype(wdt))
    b2p = jnp.zeros((1, 128), jnp.float32).at[:, :3].set(
        params["b2"].reshape(1, 3).astype(jnp.float32))

    # ----- per-generation VMEM budget & batch tile -------------------------------------
    vmem_cap = _vmem_capacity_bytes()
    vmem_limit = max(16 << 20, min(100 << 20, int(vmem_cap * 0.85)))
    nbuf = 1 if single_buffer_weights else 2
    weights_resident = (nbuf * (3 * D * 512 + D + 512 * 128) * wdt.itemsize
                        + nbuf * (2 * 512 + 2 * 128) * 4)
    tb = batch_tile if batch_tile is not None else _pick_batch_tile(
        B, L, D, vmem_limit - weights_resident)

    Bp = int(pl.cdiv(B, tb)) * tb
    if Bp != B:    # padded rows use the valid [0, 0] span; their outputs are sliced off
        bert_outputs = jnp.pad(bert_outputs, ((0, Bp - B), (0, 0), (0, 0)))
        starts = jnp.pad(starts, ((0, Bp - B), (0, 0)))
        ends = jnp.pad(ends, ((0, Bp - B), (0, 0)))
    starts = starts.reshape(Bp, 8, 1)
    ends = ends.reshape(Bp, 8, 1)

    # ----- kernel ----------------------------------------------------------------------
    def kernel(x_ref, st_ref, en_ref, watt_ref, batt_ref,
               w1a_ref, w1b_ref, w1c_ref, b1_ref, w2_ref, b2_ref, o_ref):
        f32 = jnp.float32
        x = x_ref[...]                                                # (tb, L, D) f32

        # (1) Global attention logits on the MXU, laid out (tb, 1, L): L on lanes.
        watt = jnp.broadcast_to(watt_ref[...].astype(f32), (tb, 1, D))
        logits = jnp.einsum("bqd,bld->bql", watt, x,
                            preferred_element_type=f32) + batt_ref[...]   # (tb, 1, L)

        # (2) Masked span softmax for all rows (span0, span1, cls, padding) in one
        #     lane-dense pass over (tb, 8, L).
        pos = jax.lax.broadcasted_iota(jnp.int32, (tb, 8, L), 2)
        mask = (pos >= st_ref[...]) & (pos <= en_ref[...])            # inclusive spans
        ml = jnp.where(mask, logits, -jnp.inf)
        m = jnp.max(ml, axis=-1, keepdims=True)
        e = jnp.where(mask, jnp.exp(ml - m), 0.0)
        wsoft = e / jnp.sum(e, axis=-1, keepdims=True)                # (tb, 8, L)

        # (3) Span weighted sums (and the cls-token gather, as a width-1 span) as ONE
        #     batched MXU matmul: (tb, 8, L) @ (tb, L, D) -> (tb, 8, D).
        feats = jnp.einsum("bkl,bld->bkd", wsoft, x, preferred_element_type=f32)
        s0 = feats[:, 0, :]                                           # (tb, D)
        s1 = feats[:, 1, :]
        tok = feats[:, 2, :]

        # (4) MLP with w1 split into three (D, 512) chunks: no (tb, F) concat scratch,
        #     no masked single-row stores.  nn.Dropout(0.1) is identity at inference.
        def dot(a, w_ref):
            w = w_ref[...]
            if w.dtype == jnp.bfloat16:
                a = a.astype(jnp.bfloat16)                            # bf16 MXU, f32 acc
            return jnp.dot(a, w, preferred_element_type=f32)

        h = dot(s0, w1a_ref) + dot(s1, w1b_ref) + dot(tok, w1c_ref) + b1_ref[...]
        h = jnp.maximum(h, 0.0)                                       # ReLU
        o_ref[...] = (dot(h, w2_ref) + b2_ref[...]).astype(o_ref.dtype)

    wspec = lambda shape: _weight_spec(shape, single_buffer_weights)
    in_specs = [
        pl.BlockSpec((tb, L, D), lambda i: (i, 0, 0)),                # x batch tile
        pl.BlockSpec((tb, 8, 1), lambda i: (i, 0, 0)),                # span starts
        pl.BlockSpec((tb, 8, 1), lambda i: (i, 0, 0)),                # span ends
        wspec((1, 1, D)),                                             # w_att
        wspec((1, 1)),                                                # b_att
        wspec((D, 512)), wspec((D, 512)), wspec((D, 512)),            # w1 chunks
        wspec((1, 512)),                                              # b1
        wspec((512, 128)),                                            # w2 (lane-padded)
        wspec((1, 128)),                                              # b2 (lane-padded)
    ]

    out = pl.pallas_call(
        kernel,
        grid=(Bp // tb,),
        in_specs=in_specs,
        out_specs=pl.BlockSpec((tb, 128), lambda i: (i, 0)),
        out_shape=jax.ShapeDtypeStruct((Bp, 128), jnp.float32),
        compiler_params=pltpu.CompilerParams(
            dimension_semantics=("parallel",),        # independent batch tiles
            vmem_limit_bytes=vmem_limit,
        ),
    )(bert_outputs, starts, ends, w_att, b_att, w1a, w1b, w1c, b1, w2p, b2p)

    return out[:B, :3]


def head_forward(bert_outputs, offsets, params, *, weight_dtype=jnp.float32,
                 batch_tile=None):
    """Head forward pass (eval mode) as a batch-tiled Pallas TPU kernel."""
    try:
        return _head_forward(bert_outputs, offsets, params, weight_dtype=weight_dtype,
                             batch_tile=batch_tile, single_buffer_weights=True)
    except Exception:
        # pl.Buffered(1) single-buffered weights not supported by this JAX/libtpu:
        # fall back to default double-buffered weight blocks (identical numerics).
        return _head_forward(bert_outputs, offsets, params, weight_dtype=weight_dtype,
                             batch_tile=batch_tile, single_buffer_weights=False)


def head_reference(x, offsets, params):
    """Pure-JAX reference of the PyTorch forward pass (eval mode)."""
    B, L, D = x.shape
    logits = x @ params["w_att"] + params["b_att"][0, 0]              # (B, L, 1)
    pos = jnp.arange(L)[None, :, None]

    def span(st, en):
        mask = (pos >= st[:, None, None]) & (pos <= en[:, None, None])
        ml = jnp.where(mask, logits, -jnp.inf)
        w = jax.nn.softmax(ml, axis=1)
        return jnp.sum(w * x, axis=1)

    s0 = span(offsets[:, 0], offsets[:, 1])
    s1 = span(offsets[:, 2], offsets[:, 3])
    tok = x[jnp.arange(B), offsets[:, 4]]
    feats = jnp.concatenate([s0, s1, tok], axis=1)                    # (B, 9H)
    h = jax.nn.relu(feats @ params["w1"] + params["b1"])
    return h @ params["w2"] + params["b2"]


if __name__ == "__main__":
    B, H, L = 2, 32, 16          # batch, bert_hidden_size, seq_len
    D = 3 * H                    # bert_outputs feature dim = 3H = 96

    key = jax.random.PRNGKey(0)
    k_x, k_p, k_s, k_w, k_c = jax.random.split(key, 5)

    bert_outputs = jax.random.normal(k_x, (B, L, D), jnp.float32)
    params = make_head_params(k_p, H)

    starts = jax.random.randint(k_s, (B, 2), 0, L // 2)
    widths = jax.random.randint(k_w, (B, 2), 0, L // 2)
    ends = jnp.minimum(starts + widths, L - 1)
    cls_idx = jax.random.randint(k_c, (B, 1), 0, L)
    offsets = jnp.stack(
        [starts[:, 0], ends[:, 0], starts[:, 1], ends[:, 1], cls_idx[:, 0]],
        axis=1).astype(jnp.int32)                                     # (B, 5)

    ref = head_reference(bert_outputs, offsets, params)

    # f32-weight path (MXU matmuls at default precision -> allow ~1e-3 drift vs XLA ref).
    out = jax.block_until_ready(head_forward(bert_outputs, offsets, params))
    assert out.shape == (B, 3)
    assert jnp.allclose(out, ref, atol=5e-3, rtol=5e-3), (out, ref)

    # bf16-weight path (half the weight HBM/VMEM traffic, f32 accumulation).
    out_bf16 = jax.block_until_ready(
        head_forward(bert_outputs, offsets, params, weight_dtype=jnp.bfloat16))
    assert out_bf16.shape == (B, 3)
    assert jnp.allclose(out_bf16, ref, atol=5e-2, rtol=5e-2), (out_bf16, ref)

    print("KERNEL_OK")
</pallas_src>

<mosaic_0001>
module attributes {stable_mosaic.version = 11 : i64} {
  func.func @kernel(%arg0: i32, %arg1: memref<2x16x96xf32, #tpu.memory_space<vmem>>, %arg2: memref<2x8x1xi32, #tpu.memory_space<vmem>>, %arg3: memref<2x8x1xi32, #tpu.memory_space<vmem>>, %arg4: memref<1x1x96xf32, #tpu.memory_space<vmem>>, %arg5: memref<1x1xf32, #tpu.memory_space<vmem>>, %arg6: memref<96x512xf32, #tpu.memory_space<vmem>>, %arg7: memref<96x512xf32, #tpu.memory_space<vmem>>, %arg8: memref<96x512xf32, #tpu.memory_space<vmem>>, %arg9: memref<1x512xf32, #tpu.memory_space<vmem>>, %arg10: memref<512x128xf32, #tpu.memory_space<vmem>>, %arg11: memref<1x128xf32, #tpu.memory_space<vmem>>, %arg12: memref<2x128xf32, #tpu.memory_space<vmem>>) attributes {dimension_semantics = [#tpu.dimension_semantics<parallel>], iteration_bounds = array<i64: 1>, scalar_prefetch = 0 : i64, scratch_operands = 0 : i64, tpu.core_type = #tpu.core_type<tc>, window_params = [{transform_indices = @transform_0, window_bounds = array<i64: 2, 16, 96>}, {transform_indices = @transform_1, window_bounds = array<i64: 2, 8, 1>}, {transform_indices = @transform_2, window_bounds = array<i64: 2, 8, 1>}, {pipeline_mode = #tpu.pipeline_mode<synchronous>, transform_indices = @transform_3, window_bounds = array<i64: 1, 1, 96>}, {pipeline_mode = #tpu.pipeline_mode<synchronous>, transform_indices = @transform_4, window_bounds = array<i64: 1, 1>}, {pipeline_mode = #tpu.pipeline_mode<synchronous>, transform_indices = @transform_5, window_bounds = array<i64: 96, 512>}, {pipeline_mode = #tpu.pipeline_mode<synchronous>, transform_indices = @transform_6, window_bounds = array<i64: 96, 512>}, {pipeline_mode = #tpu.pipeline_mode<synchronous>, transform_indices = @transform_7, window_bounds = array<i64: 96, 512>}, {pipeline_mode = #tpu.pipeline_mode<synchronous>, transform_indices = @transform_8, window_bounds = array<i64: 1, 512>}, {pipeline_mode = #tpu.pipeline_mode<synchronous>, transform_indices = @transform_9, window_bounds = array<i64: 512, 128>}, {pipeline_mode = #tpu.pipeline_mode<synchronous>, transform_indices = @transform_10, window_bounds = array<i64: 1, 128>}, {transform_indices = @transform_11, window_bounds = array<i64: 2, 128>}]} {
    %c0 = arith.constant 0 : index
    %c0_0 = arith.constant 0 : index
    %c0_1 = arith.constant 0 : index
    %0 = vector.load %arg1[%c0, %c0_0, %c0_1] : memref<2x16x96xf32, #tpu.memory_space<vmem>>, vector<2x16x96xf32>
    %c0_2 = arith.constant 0 : index
    %c0_3 = arith.constant 0 : index
    %c0_4 = arith.constant 0 : index
    %1 = vector.load %arg4[%c0_2, %c0_3, %c0_4] : memref<1x1x96xf32, #tpu.memory_space<vmem>>, vector<1x1x96xf32>
    %2 = vector.shape_cast %1 : vector<1x1x96xf32> to vector<1x1x96xf32>
    %3 = vector.broadcast %2 : vector<1x1x96xf32> to vector<2x1x96xf32>
    "tpu.trace_start"() <{level = 10 : i32, message = "bqd,bld->bql"}> : () -> ()
    %cst = arith.constant dense<0.000000e+00> : vector<2x1x16xf32>
    %4 = tpu.matmul %3, %0, %cst {dimension_numbers = #tpu.dot_dimension_numbers<[2], [2], [1], [1], [0, 0, 0, 1, 1, 1], [0], [0]>} : vector<2x1x96xf32>, vector<2x16x96xf32>, vector<2x1x16xf32> -> vector<2x1x16xf32>
    "tpu.trace_stop"() : () -> ()
    %c0_5 = arith.constant 0 : index
    %c0_6 = arith.constant 0 : index
    %5 = vector.load %arg5[%c0_5, %c0_6] : memref<1x1xf32, #tpu.memory_space<vmem>>, vector<1x1xf32>
    %6 = vector.shape_cast %5 : vector<1x1xf32> to vector<1x1x1xf32>
    %7 = vector.broadcast %6 : vector<1x1x1xf32> to vector<2x1x16xf32>
    %8 = arith.addf %4, %7 : vector<2x1x16xf32>
    %9 = tpu.iota {dimensions = array<i32: 2>} : vector<2x8x16xi32>
    %c0_7 = arith.constant 0 : index
    %c0_8 = arith.constant 0 : index
    %c0_9 = arith.constant 0 : index
    %10 = vector.load %arg2[%c0_7, %c0_8, %c0_9] : memref<2x8x1xi32, #tpu.memory_space<vmem>>, vector<2x8x1xi32>
    %11 = vector.broadcast %10 : vector<2x8x1xi32> to vector<2x8x16xi32>
    %12 = arith.cmpi sge, %9, %11 : vector<2x8x16xi32>
    %c0_10 = arith.constant 0 : index
    %c0_11 = arith.constant 0 : index
    %c0_12 = arith.constant 0 : index
    %13 = vector.load %arg3[%c0_10, %c0_11, %c0_12] : memref<2x8x1xi32, #tpu.memory_space<vmem>>, vector<2x8x1xi32>
    %14 = vector.broadcast %13 : vector<2x8x1xi32> to vector<2x8x16xi32>
    %15 = arith.cmpi sle, %9, %14 : vector<2x8x16xi32>
    %16 = arith.andi %12, %15 : vector<2x8x16xi1>
    %cst_13 = arith.constant 0xFF800000 : f32
    %17 = vector.shape_cast %8 : vector<2x1x16xf32> to vector<2x1x16xf32>
    %18 = vector.broadcast %17 : vector<2x1x16xf32> to vector<2x8x16xf32>
    %19 = vector.broadcast %cst_13 : f32 to vector<2x8x16xf32>
    %20 = arith.select %16, %18, %19 : vector<2x8x16xi1>, vector<2x8x16xf32>
    %cst_14 = arith.constant dense<0xFF800000> : vector<2x8xf32>
    %21 = vector.multi_reduction <maximumf>, %20, %cst_14 [2] : vector<2x8x16xf32> to vector<2x8xf32>
    %22 = vector.shape_cast %21 : vector<2x8xf32> to vector<2x8x1xf32>
    %23 = vector.broadcast %22 : vector<2x8x1xf32> to vector<2x8x16xf32>
    %24 = arith.subf %20, %23 : vector<2x8x16xf32>
    %25 = math.exp %24 : vector<2x8x16xf32>
    %cst_15 = arith.constant 0.000000e+00 : f32
    %26 = vector.broadcast %cst_15 : f32 to vector<2x8x16xf32>
    %27 = arith.select %16, %25, %26 : vector<2x8x16xi1>, vector<2x8x16xf32>
    %cst_16 = arith.constant dense<0.000000e+00> : vector<2x8xf32>
    %28 = vector.multi_reduction <add>, %27, %cst_16 [2] : vector<2x8x16xf32> to vector<2x8xf32>
    %29 = vector.shape_cast %28 : vector<2x8xf32> to vector<2x8x1xf32>
    %30 = vector.broadcast %29 : vector<2x8x1xf32> to vector<2x8x16xf32>
    %31 = arith.divf %27, %30 : vector<2x8x16xf32>
    "tpu.trace_start"() <{level = 10 : i32, message = "bkl,bld->bkd"}> : () -> ()
    %cst_17 = arith.constant dense<0.000000e+00> : vector<2x8x96xf32>
    %32 = tpu.matmul %31, %0, %cst_17 {dimension_numbers = #tpu.dot_dimension_numbers<[2], [1], [1], [2], [0, 0, 0, 1, 1, 2], [0], [0]>} : vector<2x8x16xf32>, vector<2x16x96xf32>, vector<2x8x96xf32> -> vector<2x8x96xf32>
    "tpu.trace_stop"() : () -> ()
    %33 = vector.extract_strided_slice %32 {offsets = [0, 0, 0], sizes = [2, 1, 96], strides = [1, 1, 1]} : vector<2x8x96xf32> to vector<2x1x96xf32>
    %34 = vector.shape_cast %33 : vector<2x1x96xf32> to vector<2x96xf32>
    %35 = vector.extract_strided_slice %32 {offsets = [0, 1, 0], sizes = [2, 1, 96], strides = [1, 1, 1]} : vector<2x8x96xf32> to vector<2x1x96xf32>
    %36 = vector.shape_cast %35 : vector<2x1x96xf32> to vector<2x96xf32>
    %37 = vector.extract_strided_slice %32 {offsets = [0, 2, 0], sizes = [2, 1, 96], strides = [1, 1, 1]} : vector<2x8x96xf32> to vector<2x1x96xf32>
    %38 = vector.shape_cast %37 : vector<2x1x96xf32> to vector<2x96xf32>
    %c0_18 = arith.constant 0 : index
    %c0_19 = arith.constant 0 : index
    %39 = vector.load %arg6[%c0_18, %c0_19] : memref<96x512xf32, #tpu.memory_space<vmem>>, vector<96x512xf32>
    %cst_20 = arith.constant dense<0.000000e+00> : vector<2x512xf32>
    %40 = tpu.matmul %34, %39, %cst_20 {dimension_numbers = #tpu.dot_dimension_numbers<[1], [0], [0], [1], [0, 0, 1, 1], [], []>} : vector<2x96xf32>, vector<96x512xf32>, vector<2x512xf32> -> vector<2x512xf32>
    %c0_21 = arith.constant 0 : index
    %c0_22 = arith.constant 0 : index
    %41 = vector.load %arg7[%c0_21, %c0_22] : memref<96x512xf32, #tpu.memory_space<vmem>>, vector<96x512xf32>
    %cst_23 = arith.constant dense<0.000000e+00> : vector<2x512xf32>
    %42 = tpu.matmul %36, %41, %cst_23 {dimension_numbers = #tpu.dot_dimension_numbers<[1], [0], [0], [1], [0, 0, 1, 1], [], []>} : vector<2x96xf32>, vector<96x512xf32>, vector<2x512xf32> -> vector<2x512xf32>
    %43 = arith.addf %40, %42 : vector<2x512xf32>
    %c0_24 = arith.constant 0 : index
    %c0_25 = arith.constant 0 : index
    %44 = vector.load %arg8[%c0_24, %c0_25] : memref<96x512xf32, #tpu.memory_space<vmem>>, vector<96x512xf32>
    %cst_26 = arith.constant dense<0.000000e+00> : vector<2x512xf32>
    %45 = tpu.matmul %38, %44, %cst_26 {dimension_numbers = #tpu.dot_dimension_numbers<[1], [0], [0], [1], [0, 0, 1, 1], [], []>} : vector<2x96xf32>, vector<96x512xf32>, vector<2x512xf32> -> vector<2x512xf32>
    %46 = arith.addf %43, %45 : vector<2x512xf32>
    %c0_27 = arith.constant 0 : index
    %c0_28 = arith.constant 0 : index
    %47 = vector.load %arg9[%c0_27, %c0_28] : memref<1x512xf32, #tpu.memory_space<vmem>>, vector<1x512xf32>
    %48 = vector.broadcast %47 : vector<1x512xf32> to vector<2x512xf32>
    %49 = arith.addf %46, %48 : vector<2x512xf32>
    %cst_29 = arith.constant 0.000000e+00 : f32
    %50 = vector.broadcast %cst_29 : f32 to vector<2x512xf32>
    %51 = arith.maximumf %49, %50 : vector<2x512xf32>
    %c0_30 = arith.constant 0 : index
    %c0_31 = arith.constant 0 : index
    %52 = vector.load %arg10[%c0_30, %c0_31] : memref<512x128xf32, #tpu.memory_space<vmem>>, vector<512x128xf32>
    %cst_32 = arith.constant dense<0.000000e+00> : vector<2x128xf32>
    %53 = tpu.matmul %51, %52, %cst_32 {dimension_numbers = #tpu.dot_dimension_numbers<[1], [0], [0], [1], [0, 0, 1, 1], [], []>} : vector<2x512xf32>, vector<512x128xf32>, vector<2x128xf32> -> vector<2x128xf32>
    %c0_33 = arith.constant 0 : index
    %c0_34 = arith.constant 0 : index
    %54 = vector.load %arg11[%c0_33, %c0_34] : memref<1x128xf32, #tpu.memory_space<vmem>>, vector<1x128xf32>
    %55 = vector.broadcast %54 : vector<1x128xf32> to vector<2x128xf32>
    %56 = arith.addf %53, %55 : vector<2x128xf32>
    %c0_35 = arith.constant 0 : index
    %c0_36 = arith.constant 0 : index
    %57 = vector.load %arg12[%c0_35, %c0_36] : memref<2x128xf32, #tpu.memory_space<vmem>>, vector<2x128xf32>
    tpu.vector_store %arg12[%c0_35, %c0_36], %56 {strides = array<i32>} : memref<2x128xf32, #tpu.memory_space<vmem>>, vector<2x128xf32>,
    return
  }
  func.func @transform_0(%arg0: i32) -> (i32, i32, i32) {
    %c0_i32 = arith.constant 0 : i32
    %c0_i32_0 = arith.constant 0 : i32
    %c0_i32_1 = arith.constant 0 : i32
    return %arg0, %c0_i32, %c0_i32_0 : i32, i32, i32
  }
  func.func @transform_1(%arg0: i32) -> (i32, i32, i32) {
    %c0_i32 = arith.constant 0 : i32
    %c0_i32_0 = arith.constant 0 : i32
    %c0_i32_1 = arith.constant 0 : i32
    return %arg0, %c0_i32, %c0_i32_0 : i32, i32, i32
  }
  func.func @transform_2(%arg0: i32) -> (i32, i32, i32) {
    %c0_i32 = arith.constant 0 : i32
    %c0_i32_0 = arith.constant 0 : i32
    %c0_i32_1 = arith.constant 0 : i32
    return %arg0, %c0_i32, %c0_i32_0 : i32, i32, i32
  }
  func.func @transform_3(%arg0: i32) -> (i32, i32, i32) {
    %c0_i32 = arith.constant 0 : i32
    %c0_i32_0 = arith.constant 0 : i32
    %c0_i32_1 = arith.constant 0 : i32
    %c0_i32_2 = arith.constant 0 : i32
    return %c0_i32, %c0_i32_0, %c0_i32_1 : i32, i32, i32
  }
  func.func @transform_4(%arg0: i32) -> (i32, i32) {
    %c0_i32 = arith.constant 0 : i32
    %c0_i32_0 = arith.constant 0 : i32
    %c0_i32_1 = arith.constant 0 : i32
    return %c0_i32, %c0_i32_0 : i32, i32
  }
  func.func @transform_5(%arg0: i32) -> (i32, i32) {
    %c0_i32 = arith.constant 0 : i32
    %c0_i32_0 = arith.constant 0 : i32
    %c0_i32_1 = arith.constant 0 : i32
    return %c0_i32, %c0_i32_0 : i32, i32
  }
  func.func @transform_6(%arg0: i32) -> (i32, i32) {
    %c0_i32 = arith.constant 0 : i32
    %c0_i32_0 = arith.constant 0 : i32
    %c0_i32_1 = arith.constant 0 : i32
    return %c0_i32, %c0_i32_0 : i32, i32
  }
  func.func @transform_7(%arg0: i32) -> (i32, i32) {
    %c0_i32 = arith.constant 0 : i32
    %c0_i32_0 = arith.constant 0 : i32
    %c0_i32_1 = arith.constant 0 : i32
    return %c0_i32, %c0_i32_0 : i32, i32
  }
  func.func @transform_8(%arg0: i32) -> (i32, i32) {
    %c0_i32 = arith.constant 0 : i32
    %c0_i32_0 = arith.constant 0 : i32
    %c0_i32_1 = arith.constant 0 : i32
    return %c0_i32, %c0_i32_0 : i32, i32
  }
  func.func @transform_9(%arg0: i32) -> (i32, i32) {
    %c0_i32 = arith.constant 0 : i32
    %c0_i32_0 = arith.constant 0 : i32
    %c0_i32_1 = arith.constant 0 : i32
    return %c0_i32, %c0_i32_0 : i32, i32
  }
  func.func @transform_10(%arg0: i32) -> (i32, i32) {
    %c0_i32 = arith.constant 0 : i32
    %c0_i32_0 = arith.constant 0 : i32
    %c0_i32_1 = arith.constant 0 : i32
    return %c0_i32, %c0_i32_0 : i32, i32
  }
  func.func @transform_11(%arg0: i32) -> (i32, i32) {
    %c0_i32 = arith.constant 0 : i32
    %c0_i32_0 = arith.constant 0 : i32
    return %arg0, %c0_i32 : i32, i32
  }
}

module attributes {stable_mosaic.version = 11 : i64} {
  func.func @kernel(%arg0: i32, %arg1: memref<2x16x96xf32, #tpu.memory_space<vmem>>, %arg2: memref<2x8x1xi32, #tpu.memory_space<vmem>>, %arg3: memref<2x8x1xi32, #tpu.memory_space<vmem>>, %arg4: memref<1x1x96xf32, #tpu.memory_space<vmem>>, %arg5: memref<1x1xf32, #tpu.memory_space<vmem>>, %arg6: memref<96x512xf32, #tpu.memory_space<vmem>>, %arg7: memref<96x512xf32, #tpu.memory_space<vmem>>, %arg8: memref<96x512xf32, #tpu.memory_space<vmem>>, %arg9: memref<1x512xf32, #tpu.memory_space<vmem>>, %arg10: memref<512x128xf32, #tpu.memory_space<vmem>>, %arg11: memref<1x128xf32, #tpu.memory_space<vmem>>, %arg12: memref<2x128xf32, #tpu.memory_space<vmem>>) attributes {dimension_semantics = [#tpu.dimension_semantics<parallel>], iteration_bounds = array<i64: 1>, scalar_prefetch = 0 : i64, scratch_operands = 0 : i64, tpu.core_type = #tpu.core_type<tc>, window_params = [{transform_indices = @transform_0, window_bounds = array<i64: 2, 16, 96>}, {transform_indices = @transform_1, window_bounds = array<i64: 2, 8, 1>}, {transform_indices = @transform_2, window_bounds = array<i64: 2, 8, 1>}, {pipeline_mode = #tpu.pipeline_mode<synchronous>, transform_indices = @transform_3, window_bounds = array<i64: 1, 1, 96>}, {pipeline_mode = #tpu.pipeline_mode<synchronous>, transform_indices = @transform_4, window_bounds = array<i64: 1, 1>}, {pipeline_mode = #tpu.pipeline_mode<synchronous>, transform_indices = @transform_5, window_bounds = array<i64: 96, 512>}, {pipeline_mode = #tpu.pipeline_mode<synchronous>, transform_indices = @transform_6, window_bounds = array<i64: 96, 512>}, {pipeline_mode = #tpu.pipeline_mode<synchronous>, transform_indices = @transform_7, window_bounds = array<i64: 96, 512>}, {pipeline_mode = #tpu.pipeline_mode<synchronous>, transform_indices = @transform_8, window_bounds = array<i64: 1, 512>}, {pipeline_mode = #tpu.pipeline_mode<synchronous>, transform_indices = @transform_9, window_bounds = array<i64: 512, 128>}, {pipeline_mode = #tpu.pipeline_mode<synchronous>, transform_indices = @transform_10, window_bounds = array<i64: 1, 128>}, {transform_indices = @transform_11, window_bounds = array<i64: 2, 128>}]} {
    %c0 = arith.constant 0 : index
    %c0_0 = arith.constant 0 : index
    %c0_1 = arith.constant 0 : index
    %0 = vector.load %arg1[%c0, %c0_0, %c0_1] : memref<2x16x96xf32, #tpu.memory_space<vmem>>, vector<2x16x96xf32>
    %c0_2 = arith.constant 0 : index
    %c0_3 = arith.constant 0 : index
    %c0_4 = arith.constant 0 : index
    %1 = vector.load %arg4[%c0_2, %c0_3, %c0_4] : memref<1x1x96xf32, #tpu.memory_space<vmem>>, vector<1x1x96xf32>
    %2 = vector.shape_cast %1 : vector<1x1x96xf32> to vector<1x1x96xf32>
    %3 = vector.broadcast %2 : vector<1x1x96xf32> to vector<2x1x96xf32>
    "tpu.trace_start"() <{level = 10 : i32, message = "bqd,bld->bql"}> : () -> ()
    %cst = arith.constant dense<0.000000e+00> : vector<2x1x16xf32>
    %4 = tpu.matmul %3, %0, %cst {dimension_numbers = #tpu.dot_dimension_numbers<[2], [2], [1], [1], [0, 0, 0, 1, 1, 1], [0], [0]>} : vector<2x1x96xf32>, vector<2x16x96xf32>, vector<2x1x16xf32> -> vector<2x1x16xf32>
    "tpu.trace_stop"() : () -> ()
    %c0_5 = arith.constant 0 : index
    %c0_6 = arith.constant 0 : index
    %5 = vector.load %arg5[%c0_5, %c0_6] : memref<1x1xf32, #tpu.memory_space<vmem>>, vector<1x1xf32>
    %6 = vector.shape_cast %5 : vector<1x1xf32> to vector<1x1x1xf32>
    %7 = vector.broadcast %6 : vector<1x1x1xf32> to vector<2x1x16xf32>
    %8 = arith.addf %4, %7 : vector<2x1x16xf32>
    %9 = tpu.iota {dimensions = array<i32: 2>} : vector<2x8x16xi32>
    %c0_7 = arith.constant 0 : index
    %c0_8 = arith.constant 0 : index
    %c0_9 = arith.constant 0 : index
    %10 = vector.load %arg2[%c0_7, %c0_8, %c0_9] : memref<2x8x1xi32, #tpu.memory_space<vmem>>, vector<2x8x1xi32>
    %11 = vector.broadcast %10 : vector<2x8x1xi32> to vector<2x8x16xi32>
    %12 = arith.cmpi sge, %9, %11 : vector<2x8x16xi32>
    %c0_10 = arith.constant 0 : index
    %c0_11 = arith.constant 0 : index
    %c0_12 = arith.constant 0 : index
    %13 = vector.load %arg3[%c0_10, %c0_11, %c0_12] : memref<2x8x1xi32, #tpu.memory_space<vmem>>, vector<2x8x1xi32>
    %14 = vector.broadcast %13 : vector<2x8x1xi32> to vector<2x8x16xi32>
    %15 = arith.cmpi sle, %9, %14 : vector<2x8x16xi32>
    %16 = arith.andi %12, %15 : vector<2x8x16xi1>
    %cst_13 = arith.constant 0xFF800000 : f32
    %17 = vector.shape_cast %8 : vector<2x1x16xf32> to vector<2x1x16xf32>
    %18 = vector.broadcast %17 : vector<2x1x16xf32> to vector<2x8x16xf32>
    %19 = vector.broadcast %cst_13 : f32 to vector<2x8x16xf32>
    %20 = arith.select %16, %18, %19 : vector<2x8x16xi1>, vector<2x8x16xf32>
    %cst_14 = arith.constant dense<0xFF800000> : vector<2x8xf32>
    %21 = vector.multi_reduction <maximumf>, %20, %cst_14 [2] : vector<2x8x16xf32> to vector<2x8xf32>
    %22 = vector.shape_cast %21 : vector<2x8xf32> to vector<2x8x1xf32>
    %23 = vector.broadcast %22 : vector<2x8x1xf32> to vector<2x8x16xf32>
    %24 = arith.subf %20, %23 : vector<2x8x16xf32>
    %25 = math.exp %24 : vector<2x8x16xf32>
    %cst_15 = arith.constant 0.000000e+00 : f32
    %26 = vector.broadcast %cst_15 : f32 to vector<2x8x16xf32>
    %27 = arith.select %16, %25, %26 : vector<2x8x16xi1>, vector<2x8x16xf32>
    %cst_16 = arith.constant dense<0.000000e+00> : vector<2x8xf32>
    %28 = vector.multi_reduction <add>, %27, %cst_16 [2] : vector<2x8x16xf32> to vector<2x8xf32>
    %29 = vector.shape_cast %28 : vector<2x8xf32> to vector<2x8x1xf32>
    %30 = vector.broadcast %29 : vector<2x8x1xf32> to vector<2x8x16xf32>
    %31 = arith.divf %27, %30 : vector<2x8x16xf32>
    "tpu.trace_start"() <{level = 10 : i32, message = "bkl,bld->bkd"}> : () -> ()
    %cst_17 = arith.constant dense<0.000000e+00> : vector<2x8x96xf32>
    %32 = tpu.matmul %31, %0, %cst_17 {dimension_numbers = #tpu.dot_dimension_numbers<[2], [1], [1], [2], [0, 0, 0, 1, 1, 2], [0], [0]>} : vector<2x8x16xf32>, vector<2x16x96xf32>, vector<2x8x96xf32> -> vector<2x8x96xf32>
    "tpu.trace_stop"() : () -> ()
    %33 = vector.extract_strided_slice %32 {offsets = [0, 0, 0], sizes = [2, 1, 96], strides = [1, 1, 1]} : vector<2x8x96xf32> to vector<2x1x96xf32>
    %34 = vector.shape_cast %33 : vector<2x1x96xf32> to vector<2x96xf32>
    %35 = vector.extract_strided_slice %32 {offsets = [0, 1, 0], sizes = [2, 1, 96], strides = [1, 1, 1]} : vector<2x8x96xf32> to vector<2x1x96xf32>
    %36 = vector.shape_cast %35 : vector<2x1x96xf32> to vector<2x96xf32>
    %37 = vector.extract_strided_slice %32 {offsets = [0, 2, 0], sizes = [2, 1, 96], strides = [1, 1, 1]} : vector<2x8x96xf32> to vector<2x1x96xf32>
    %38 = vector.shape_cast %37 : vector<2x1x96xf32> to vector<2x96xf32>
    %c0_18 = arith.constant 0 : index
    %c0_19 = arith.constant 0 : index
    %39 = vector.load %arg6[%c0_18, %c0_19] : memref<96x512xf32, #tpu.memory_space<vmem>>, vector<96x512xf32>
    %cst_20 = arith.constant dense<0.000000e+00> : vector<2x512xf32>
    %40 = tpu.matmul %34, %39, %cst_20 {dimension_numbers = #tpu.dot_dimension_numbers<[1], [0], [0], [1], [0, 0, 1, 1], [], []>} : vector<2x96xf32>, vector<96x512xf32>, vector<2x512xf32> -> vector<2x512xf32>
    %c0_21 = arith.constant 0 : index
    %c0_22 = arith.constant 0 : index
    %41 = vector.load %arg7[%c0_21, %c0_22] : memref<96x512xf32, #tpu.memory_space<vmem>>, vector<96x512xf32>
    %cst_23 = arith.constant dense<0.000000e+00> : vector<2x512xf32>
    %42 = tpu.matmul %36, %41, %cst_23 {dimension_numbers = #tpu.dot_dimension_numbers<[1], [0], [0], [1], [0, 0, 1, 1], [], []>} : vector<2x96xf32>, vector<96x512xf32>, vector<2x512xf32> -> vector<2x512xf32>
    %43 = arith.addf %40, %42 : vector<2x512xf32>
    %c0_24 = arith.constant 0 : index
    %c0_25 = arith.constant 0 : index
    %44 = vector.load %arg8[%c0_24, %c0_25] : memref<96x512xf32, #tpu.memory_space<vmem>>, vector<96x512xf32>
    %cst_26 = arith.constant dense<0.000000e+00> : vector<2x512xf32>
    %45 = tpu.matmul %38, %44, %cst_26 {dimension_numbers = #tpu.dot_dimension_numbers<[1], [0], [0], [1], [0, 0, 1, 1], [], []>} : vector<2x96xf32>, vector<96x512xf32>, vector<2x512xf32> -> vector<2x512xf32>
    %46 = arith.addf %43, %45 : vector<2x512xf32>
    %c0_27 = arith.constant 0 : index
    %c0_28 = arith.constant 0 : index
    %47 = vector.load %arg9[%c0_27, %c0_28] : memref<1x512xf32, #tpu.memory_space<vmem>>, vector<1x512xf32>
    %48 = vector.broadcast %47 : vector<1x512xf32> to vector<2x512xf32>
    %49 = arith.addf %46, %48 : vector<2x512xf32>
    %cst_29 = arith.constant 0.000000e+00 : f32
    %50 = vector.broadcast %cst_29 : f32 to vector<2x512xf32>
    %51 = arith.maximumf %49, %50 : vector<2x512xf32>
    %c0_30 = arith.constant 0 : index
    %c0_31 = arith.constant 0 : index
    %52 = vector.load %arg10[%c0_30, %c0_31] : memref<512x128xf32, #tpu.memory_space<vmem>>, vector<512x128xf32>
    %cst_32 = arith.constant dense<0.000000e+00> : vector<2x128xf32>
    %53 = tpu.matmul %51, %52, %cst_32 {dimension_numbers = #tpu.dot_dimension_numbers<[1], [0], [0], [1], [0, 0, 1, 1], [], []>} : vector<2x512xf32>, vector<512x128xf32>, vector<2x128xf32> -> vector<2x128xf32>
    %c0_33 = arith.constant 0 : index
    %c0_34 = arith.constant 0 : index
    %54 = vector.load %arg11[%c0_33, %c0_34] : memref<1x128xf32, #tpu.memory_space<vmem>>, vector<1x128xf32>
    %55 = vector.broadcast %54 : vector<1x128xf32> to vector<2x128xf32>
    %56 = arith.addf %53, %55 : vector<2x128xf32>
    %c0_35 = arith.constant 0 : index
    %c0_36 = arith.constant 0 : index
    %57 = vector.load %arg12[%c0_35, %c0_36] : memref<2x128xf32, #tpu.memory_space<vmem>>, vector<2x128xf32>
    tpu.vector_store %arg12[%c0_35, %c0_36], %56 {strides = array<i32>} : memref<2x128xf32, #tpu.memory_space<vmem>>, vector<2x128xf32>,
    return
  }
  func.func @transform_0(%arg0: i32) -> (i32, i32, i32) {
    %c0_i32 = arith.constant 0 : i32
    %c0_i32_0 = arith.constant 0 : i32
    %c0_i32_1 = arith.constant 0 : i32
    return %arg0, %c0_i32, %c0_i32_0 : i32, i32, i32
  }
  func.func @transform_1(%arg0: i32) -> (i32, i32, i32) {
    %c0_i32 = arith.constant 0 : i32
    %c0_i32_0 = arith.constant 0 : i32
    %c0_i32_1 = arith.constant 0 : i32
    return %arg0, %c0_i32, %c0_i32_0 : i32, i32, i32
  }
  func.func @transform_2(%arg0: i32) -> (i32, i32, i32) {
    %c0_i32 = arith.constant 0 : i32
    %c0_i32_0 = arith.constant 0 : i32
    %c0_i32_1 = arith.constant 0 : i32
    return %arg0, %c0_i32, %c0_i32_0 : i32, i32, i32
  }
  func.func @transform_3(%arg0: i32) -> (i32, i32, i32) {
    %c0_i32 = arith.constant 0 : i32
    %c0_i32_0 = arith.constant 0 : i32
    %c0_i32_1 = arith.constant 0 : i32
    %c0_i32_2 = arith.constant 0 : i32
    return %c0_i32, %c0_i32_0, %c0_i32_1 : i32, i32, i32
  }
  func.func @transform_4(%arg0: i32) -> (i32, i32) {
    %c0_i32 = arith.constant 0 : i32
    %c0_i32_0 = arith.constant 0 : i32
    %c0_i32_1 = arith.constant 0 : i32
    return %c0_i32, %c0_i32_0 : i32, i32
  }
  func.func @transform_5(%arg0: i32) -> (i32, i32) {
    %c0_i32 = arith.constant 0 : i32
    %c0_i32_0 = arith.constant 0 : i32
    %c0_i32_1 = arith.constant 0 : i32
    return %c0_i32, %c0_i32_0 : i32, i32
  }
  func.func @transform_6(%arg0: i32) -> (i32, i32) {
    %c0_i32 = arith.constant 0 : i32
    %c0_i32_0 = arith.constant 0 : i32
    %c0_i32_1 = arith.constant 0 : i32
    return %c0_i32, %c0_i32_0 : i32, i32
  }
  func.func @transform_7(%arg0: i32) -> (i32, i32) {
    %c0_i32 = arith.constant 0 : i32
    %c0_i32_0 = arith.constant 0 : i32
    %c0_i32_1 = arith.constant 0 : i32
    return %c0_i32, %c0_i32_0 : i32, i32
  }
  func.func @transform_8(%arg0: i32) -> (i32, i32) {
    %c0_i32 = arith.constant 0 : i32
    %c0_i32_0 = arith.constant 0 : i32
    %c0_i32_1 = arith.constant 0 : i32
    return %c0_i32, %c0_i32_0 : i32, i32
  }
  func.func @transform_9(%arg0: i32) -> (i32, i32) {
    %c0_i32 = arith.constant 0 : i32
    %c0_i32_0 = arith.constant 0 : i32
    %c0_i32_1 = arith.constant 0 : i32
    return %c0_i32, %c0_i32_0 : i32, i32
  }
  func.func @transform_10(%arg0: i32) -> (i32, i32) {
    %c0_i32 = arith.constant 0 : i32
    %c0_i32_0 = arith.constant 0 : i32
    %c0_i32_1 = arith.constant 0 : i32
    return %c0_i32, %c0_i32_0 : i32, i32
  }
  func.func @transform_11(%arg0: i32) -> (i32, i32) {
    %c0_i32 = arith.constant 0 : i32
    %c0_i32_0 = arith.constant 0 : i32
    return %arg0, %c0_i32 : i32, i32
  }
}

</mosaic_0001>

<llo_original>
// kernel: tpu_custom_call.1
$region0: #{tpu_custom_call.1}
  #allocation0 [shape = 'u32[]', space=smem, size = 0x4, offset = 0x4, fixed_abs, tag = 'smem constant byte address 0x4 - core index']
  #allocation1 [shape = 'u32[144,128]{1,0:T(1,128)}', space=vmem, size = 0x12000, scoped, tag = 'internal scratch']
  #allocation2 [shape = 'f32[1,1]{1,0:T(1,128)S(1)}', space=vmem, size = 0x200, scoped, tag = 'scoped memory for tpu_custom_call.1']
  %s0 = inlined_call_operand.vmem [shape: f32[2,16,96], index: 0, kind: input, shape index: {}]
  %s1 = inlined_call_operand.vmem [shape: s32[2,8,1], index: 1, kind: input, shape index: {}]
  %s2 = inlined_call_operand.vmem [shape: s32[2,8,1], index: 2, kind: input, shape index: {}]
  %s3 = inlined_call_operand.vmem [shape: f32[1,1,96], index: 3, kind: input, shape index: {}]
  %s4 = inlined_call_operand.<no memory space> [shape: f32[1,1], index: 4, kind: input, shape index: {}]
  %s5 = inlined_call_operand.hbm [shape: f32[96,512], index: 5, kind: input, shape index: {}]
  %s6 = inlined_call_operand.hbm [shape: f32[96,512], index: 6, kind: input, shape index: {}]
  %s7 = inlined_call_operand.hbm [shape: f32[96,512], index: 7, kind: input, shape index: {}]
  %s8 = inlined_call_operand.vmem [shape: f32[1,512], index: 8, kind: input, shape index: {}]
  %s9 = inlined_call_operand.hbm [shape: f32[512,128], index: 9, kind: input, shape index: {}]
  %s10 = inlined_call_operand.vmem [shape: f32[1,128], index: 10, kind: input, shape index: {}]
  %s11 = inlined_call_operand.hbm [shape: f32[2,128], index: 11, kind: output, shape index: {}]
  %s12 = sld [smem:[#allocation0]]
  $region70: #{tpu_custom_call.1} parent=0
    _
  %s14 = ssub.s32 1, %s12
  %s15 = scalar_select 0, %s14, %s12
  %v16 = vstv %s4
  %17 = vst [vmem:[#allocation2] sm:$0x1] %v16
  $region1: #{tpu_custom_call.1} parent=0
    #allocation3 [shape = 'u8[196608]{0}', space=vmem, size = 0x30000, scoped, tag = 'input window, operand 5, single buffered']
    #allocation4 [shape = 's32[1]{0}', space=sflag, size = 0x4, scoped, tag = 'scoped memory for tpu_custom_call.1']
    #allocation5 [shape = 's32[1]{0}', space=sflag, size = 0x4, scoped, tag = 'scoped memory for tpu_custom_call.1']
    #allocation6 [shape = 'u8[196608]{0}', space=vmem, size = 0x30000, scoped, tag = 'input window, operand 6, single buffered']
    #allocation7 [shape = 's32[1]{0}', space=sflag, size = 0x4, scoped, tag = 'scoped memory for tpu_custom_call.1']
    #allocation8 [shape = 'u8[196608]{0}', space=vmem, size = 0x30000, scoped, tag = 'input window, operand 7, single buffered']
    #allocation9 [shape = 'u8[262144]{0}', space=vmem, size = 0x40000, scoped, tag = 'input window, operand 9, single buffered']
    #allocation10 [shape = 's32[1]{0}', space=sflag, size = 0x4, scoped, tag = 'scoped memory for tpu_custom_call.1']
    #allocation11 [shape = 'u8[1024]{0}', space=vmem, size = 0x400, scoped, tag = 'output window, operand 0, single buffered']
    %18 = vsyncpa [#allocation4], 0
    %19 = vsyncpa [#allocation7], 0
    %20 = vsyncpa [#allocation10], 0
    %21 = vsyncpa [#allocation5], 0
    // Predicated region
    $region2: #{tpu_custom_call.1} parent=1 // pred_check
      _
    $region3: #{tpu_custom_call.1} parent=1 // pred_check_branch
      %23 = sbr.rel (0) target = $region5
    $region4: #{tpu_custom_call.1} parent=1 // pred_region
      _
    $region5: #{tpu_custom_call.1} parent=1 // pred_fallthru
      _
    // Predicated region
    $region6: #{tpu_custom_call.1} parent=1 // pred_check
      _
    $region7: #{tpu_custom_call.1} parent=1 // pred_check_branch
      %25 = sbr.rel (0) target = $region9
    $region8: #{tpu_custom_call.1} parent=1 // pred_region
      _
    $region9: #{tpu_custom_call.1} parent=1 // pred_fallthru
      _
    // Predicated region
    $region10: #{tpu_custom_call.1} parent=1 // pred_check
      _
    $region11: #{tpu_custom_call.1} parent=1 // pred_check_branch
      %27 = sbr.rel (0) target = $region13
    $region12: #{tpu_custom_call.1} parent=1 // pred_region
      _
    $region13: #{tpu_custom_call.1} parent=1 // pred_fallthru
      _
    // Predicated region
    $region14: #{tpu_custom_call.1} parent=1 // pred_check
      _
    $region15: #{tpu_custom_call.1} parent=1 // pred_check_branch
      %29 = sbr.rel (0) target = $region17
    $region16: #{tpu_custom_call.1} parent=1 // pred_region
      _
    $region17: #{tpu_custom_call.1} parent=1 // pred_fallthru
      _
    // Predicated region
    $region18: #{tpu_custom_call.1} parent=1 // pred_check
      _
    $region19: #{tpu_custom_call.1} parent=1 // pred_check_branch
      %31 = sbr.rel (0) target = $region21
    $region20: #{tpu_custom_call.1} parent=1 // pred_region
      _
    $region21: #{tpu_custom_call.1} parent=1 // pred_fallthru
      _
    // Predicated region
    $region22: #{tpu_custom_call.1} parent=1 // pred_check
      _
    $region23: #{tpu_custom_call.1} parent=1 // pred_check_branch
      %33 = sbr.rel (0) target = $region25
    $region24: #{tpu_custom_call.1} parent=1 // pred_region
      %s35 = ssub.s32 6144, 6144
      %36 = vsyncadd [#allocation4], %s35
      %s37 = sshll.u32 [#allocation3], 4
      %s38 = int_to_ptr.vmem [resolvable:$true] %s37
      %43 = dma.hbm_to_vmem [thread:$0]  %s5, 6144, %s38, [#allocation4], 512, 512, 32
    $region25: #{tpu_custom_call.1} parent=1 // pred_fallthru
      _
    // Predicated region
    $region26: #{tpu_custom_call.1} parent=1 // pred_check
      _
    $region27: #{tpu_custom_call.1} parent=1 // pred_check_branch
      %45 = sbr.rel (0) target = $region29
    $region28: #{tpu_custom_call.1} parent=1 // pred_region
      %s47 = ssub.s32 6144, 6144
      %48 = vsyncadd [#allocation7], %s47
      %s49 = sshll.u32 [#allocation6], 4
      %s50 = int_to_ptr.vmem [resolvable:$true] %s49
      %55 = dma.hbm_to_vmem [thread:$0]  %s6, 6144, %s50, [#allocation7], 512, 512, 32
    $region29: #{tpu_custom_call.1} parent=1 // pred_fallthru
      _
    // Predicated region
    $region30: #{tpu_custom_call.1} parent=1 // pred_check
      _
    $region31: #{tpu_custom_call.1} parent=1 // pred_check_branch
      %57 = sbr.rel (0) target = $region33
    $region32: #{tpu_custom_call.1} parent=1 // pred_region
      %s59 = ssub.s32 6144, 6144
      %60 = vsyncadd [#allocation7], %s59
      %s61 = sshll.u32 [#allocation8], 4
      %s62 = int_to_ptr.vmem [resolvable:$true] %s61
      %67 = dma.hbm_to_vmem [thread:$0]  %s7, 6144, %s62, [#allocation7], 512, 512, 32
    $region33: #{tpu_custom_call.1} parent=1 // pred_fallthru
      _
    // Predicated region
    $region34: #{tpu_custom_call.1} parent=1 // pred_check
      _
    $region35: #{tpu_custom_call.1} parent=1 // pred_check_branch
      %69 = sbr.rel (0) target = $region37
    $region36: #{tpu_custom_call.1} parent=1 // pred_region
      _
    $region37: #{tpu_custom_call.1} parent=1 // pred_fallthru
      _
    // Predicated region
    $region38: #{tpu_custom_call.1} parent=1 // pred_check
      _
    $region39: #{tpu_custom_call.1} parent=1 // pred_check_branch
      %71 = sbr.rel (0) target = $region41
    $region40: #{tpu_custom_call.1} parent=1 // pred_region
      %s73 = ssub.s32 8192, 8192
      %74 = vsyncadd [#allocation10], %s73
      %s75 = sshll.u32 [#allocation9], 4
      %s76 = int_to_ptr.vmem [resolvable:$true] %s75
      %81 = dma.hbm_to_vmem [thread:$0]  %s9, 8192, %s76, [#allocation10], 128, 128, 8
    $region41: #{tpu_custom_call.1} parent=1 // pred_fallthru
      _
    // Predicated region
    $region42: #{tpu_custom_call.1} parent=1 // pred_check
      _
    $region43: #{tpu_custom_call.1} parent=1 // pred_check_branch
      %83 = sbr.rel (0) target = $region45
    $region44: #{tpu_custom_call.1} parent=1 // pred_region
      _
    $region45: #{tpu_custom_call.1} parent=1 // pred_fallthru
      _
    // Predicated region
    $region46: #{tpu_custom_call.1} parent=1 // pred_check
      _
    $region47: #{tpu_custom_call.1} parent=1 // pred_check_branch
      %85 = sbr.rel (0) target = $region49
    $region48: #{tpu_custom_call.1} parent=1 // pred_region
      %86 = dma.done [#allocation4], 6144
    $region49: #{tpu_custom_call.1} parent=1 // pred_fallthru
      _
    // Predicated region
    $region50: #{tpu_custom_call.1} parent=1 // pred_check
      _
    $region51: #{tpu_custom_call.1} parent=1 // pred_check_branch
      %88 = sbr.rel (0) target = $region53
    $region52: #{tpu_custom_call.1} parent=1 // pred_region
      %89 = dma.done [#allocation7], 6144
    $region53: #{tpu_custom_call.1} parent=1 // pred_fallthru
      _
    // Predicated region
    $region54: #{tpu_custom_call.1} parent=1 // pred_check
      _
    $region55: #{tpu_custom_call.1} parent=1 // pred_check_branch
      %91 = sbr.rel (0) target = $region57
    $region56: #{tpu_custom_call.1} parent=1 // pred_region
      %92 = dma.done [#allocation7], 6144
    $region57: #{tpu_custom_call.1} parent=1 // pred_fallthru
      _
    // Predicated region
    $region58: #{tpu_custom_call.1} parent=1 // pred_check
      _
    $region59: #{tpu_custom_call.1} parent=1 // pred_check_branch
      %94 = sbr.rel (0) target = $region61
    $region60: #{tpu_custom_call.1} parent=1 // pred_region
      %95 = dma.done [#allocation10], 8192
    $region61: #{tpu_custom_call.1} parent=1 // pred_fallthru
      _
    %v96 = vld [vmem:[%s0] sm:$0xff]
    %v97 = vld [vmem:[%s0 + $0x8] sm:$0xff]
    %v98 = vld [vmem:[%s0 + $0x10] sm:$0xff]
    %v99 = vld [vmem:[%s0 + $0x18] sm:$0xff]
    %v100 = vld [vmem:[%s3] sm:$0x1]
    %v101 = vld [vmem:[#allocation2] sm:$0x1]
    %103 = vset.pattern.permute.xlu0 0
    %104 = vperm.xlu0 %103, %v101
    %v105 = vpop.permute.xlu0 %104
    %v107 = vlaneseq
    %v108 = vshrl.u32 %v107, 7
    %v109 = vsub.s32 0, %v108
    %v110 = vrot.slane %v105, %v109
    %vm111 = vcmask 785408
    %v113 = vsel %vm111, %v100, 0
    %v116 = vsel %vm111, %v96, 0
    %v119 = vsel %vm111, %v97, 0
    %121 = vmatprep.subr.mxu0 0.0
    %122 = vmatpush1.xpose.msra.mxu0 %v116
    %123 = vmatprep.subr.mxu0 0.0
    %124 = vmatpush1.xpose.msra.mxu0 %v119
    %125 = vmatprep.subr.mxu0 0.0
    %126 = vmatpush1.xpose.msra.mxu0 0.0
    %127 = vmatprep.subr.mxu0 0.0
    %128 = vmatpush1.xpose.msra.mxu0 0.0
    %129 = vmatprep.subr.mxu0 0.0
    %130 = vmatpush1.xpose.msra.mxu0 0.0
    %131 = vmatprep.subr.mxu0 0.0
    %132 = vmatpush1.xpose.msra.mxu0 0.0
    %133 = vmatprep.subr.mxu0 0.0
    %134 = vmatpush1.xpose.msra.mxu0 0.0
    %135 = vmatprep.subr.mxu0 0.0
    %136 = vmatpush1.xpose.msra.mxu0 0.0
    %137 = vmatprep.subr.mxu0 0.0
    %138 = vmatpush1.xpose.msra.mxu0 0.0
    %139 = vmatprep.subr.mxu0 0.0
    %140 = vmatpush1.xpose.msra.mxu0 0.0
    %141 = vmatprep.subr.mxu0 0.0
    %142 = vmatpush1.xpose.msra.mxu0 0.0
    %143 = vmatprep.subr.mxu0 0.0
    %144 = vmatpush1.xpose.msra.mxu0 0.0
    %145 = vmatprep.subr.mxu0 0.0
    %146 = vmatpush1.xpose.msra.mxu0 0.0
    %147 = vmatprep.subr.mxu0 0.0
    %148 = vmatpush1.xpose.msra.mxu0 0.0
    %149 = vmatprep.subr.mxu0 0.0
    %150 = vmatpush1.xpose.msra.mxu0 0.0
    %151 = vmatprep.subr.mxu0 0.0
    %152 = vmatpush1.xpose.msra.mxu0 0.0
    %153 = vmatprep.subr.mxu0 0.0
    %154 = vmatpush1.xpose.msra.mxu0 0.0
    %155 = vmatprep.subr.mxu0 0.0
    %156 = vmatpush1.xpose.msra.mxu0 0.0
    %157 = vmatprep.subr.mxu0 0.0
    %158 = vmatpush1.xpose.msra.mxu0 0.0
    %159 = vmatprep.subr.mxu0 0.0
    %160 = vmatpush1.xpose.msra.mxu0 0.0
    %161 = vmatprep.subr.mxu0 0.0
    %162 = vmatpush1.xpose.msra.mxu0 0.0
    %163 = vmatprep.subr.mxu0 0.0
    %164 = vmatpush1.xpose.msra.mxu0 0.0
    %165 = vmatprep.subr.mxu0 0.0
    %166 = vmatpush1.xpose.msra.mxu0 0.0
    %167 = vmatprep.subr.mxu0 0.0
    %168 = vmatpush1.xpose.msra.mxu0 0.0
    %169 = vmatprep.subr.mxu0 0.0
    %170 = vmatpush1.xpose.msra.mxu0 0.0
    %171 = vmatprep.subr.mxu0 0.0
    %172 = vmatpush1.xpose.msra.mxu0 0.0
    %173 = vmatprep.subr.mxu0 0.0
    %174 = vmatpush1.xpose.msra.mxu0 0.0
    %175 = vmatprep.subr.mxu0 0.0
    %176 = vmatpush1.xpose.msra.mxu0 0.0
    %177 = vmatprep.subr.mxu0 0.0
    %178 = vmatpush1.xpose.msra.mxu0 0.0
    %179 = vmatprep.subr.mxu0 0.0
    %180 = vmatpush1.xpose.msra.mxu0 0.0
    %181 = vmatprep.subr.mxu0 0.0
    %182 = vmatpush1.xpose.msra.mxu0 0.0
    %183 = vmatprep.subr.mxu0 0.0
    %184 = vmatpush1.xpose.msra.mxu0 0.0
    %185 = vmatprep.mubr.f32.mxu0 0.0
    %186 = vmatmul.mubr.f32.gmra.mrb[0].mxu0 %v113
    %v187 = vpop.f32.mrb[0].mxu0
    %v188 = vadd.f32 %v110, %v187
    %v189 = vpop.f32.mrb[0].mxu0
    %190 = vdwg.mxu0
    %v192 = vsel %vm111, %v98, 0
    %v195 = vsel %vm111, %v99, 0
    %197 = vmatprep.subr.mxu0 0.0
    %198 = vmatpush1.xpose.msra.mxu0 %v192
    %199 = vmatprep.subr.mxu0 0.0
    %200 = vmatpush1.xpose.msra.mxu0 %v195
    %201 = vmatprep.subr.mxu0 0.0
    %202 = vmatpush1.xpose.msra.mxu0 0.0
    %203 = vmatprep.subr.mxu0 0.0
    %204 = vmatpush1.xpose.msra.mxu0 0.0
    %205 = vmatprep.subr.mxu0 0.0
    %206 = vmatpush1.xpose.msra.mxu0 0.0
    %207 = vmatprep.subr.mxu0 0.0
    %208 = vmatpush1.xpose.msra.mxu0 0.0
    %209 = vmatprep.subr.mxu0 0.0
    %210 = vmatpush1.xpose.msra.mxu0 0.0
    %211 = vmatprep.subr.mxu0 0.0
    %212 = vmatpush1.xpose.msra.mxu0 0.0
    %213 = vmatprep.subr.mxu0 0.0
    %214 = vmatpush1.xpose.msra.mxu0 0.0
    %215 = vmatprep.subr.mxu0 0.0
    %216 = vmatpush1.xpose.msra.mxu0 0.0
    %217 = vmatprep.subr.mxu0 0.0
    %218 = vmatpush1.xpose.msra.mxu0 0.0
    %219 = vmatprep.subr.mxu0 0.0
    %220 = vmatpush1.xpose.msra.mxu0 0.0
    %221 = vmatprep.subr.mxu0 0.0
    %222 = vmatpush1.xpose.msra.mxu0 0.0
    %223 = vmatprep.subr.mxu0 0.0
    %224 = vmatpush1.xpose.msra.mxu0 0.0
    %225 = vmatprep.subr.mxu0 0.0
    %226 = vmatpush1.xpose.msra.mxu0 0.0
    %227 = vmatprep.subr.mxu0 0.0
    %228 = vmatpush1.xpose.msra.mxu0 0.0
    %229 = vmatprep.subr.mxu0 0.0
    %230 = vmatpush1.xpose.msra.mxu0 0.0
    %231 = vmatprep.subr.mxu0 0.0
    %232 = vmatpush1.xpose.msra.mxu0 0.0
    %233 = vmatprep.subr.mxu0 0.0
    %234 = vmatpush1.xpose.msra.mxu0 0.0
    %235 = vmatprep.subr.mxu0 0.0
    %236 = vmatpush1.xpose.msra.mxu0 0.0
    %237 = vmatprep.subr.mxu0 0.0
    %238 = vmatpush1.xpose.msra.mxu0 0.0
    %239 = vmatprep.subr.mxu0 0.0
    %240 = vmatpush1.xpose.msra.mxu0 0.0
    %241 = vmatprep.subr.mxu0 0.0
    %242 = vmatpush1.xpose.msra.mxu0 0.0
    %243 = vmatprep.subr.mxu0 0.0
    %244 = vmatpush1.xpose.msra.mxu0 0.0
    %245 = vmatprep.subr.mxu0 0.0
    %246 = vmatpush1.xpose.msra.mxu0 0.0
    %247 = vmatprep.subr.mxu0 0.0
    %248 = vmatpush1.xpose.msra.mxu0 0.0
    %249 = vmatprep.subr.mxu0 0.0
    %250 = vmatpush1.xpose.msra.mxu0 0.0
    %251 = vmatprep.subr.mxu0 0.0
    %252 = vmatpush1.xpose.msra.mxu0 0.0
    %253 = vmatprep.subr.mxu0 0.0
    %254 = vmatpush1.xpose.msra.mxu0 0.0
    %255 = vmatprep.subr.mxu0 0.0
    %256 = vmatpush1.xpose.msra.mxu0 0.0
    %257 = vmatprep.subr.mxu0 0.0
    %258 = vmatpush1.xpose.msra.mxu0 0.0
    %259 = vmatprep.subr.mxu0 0.0
    %260 = vmatpush1.xpose.msra.mxu0 0.0
    %261 = vmatprep.mubr.f32.mxu0 0.0
    %262 = vmatmul.mubr.f32.gmra.mrb[0].mxu0 %v113
    %v263 = vpop.f32.mrb[0].mxu0
    %v264 = vadd.f32 %v110, %v263
    %v265 = vpop.f32.mrb[0].mxu0
    %266 = vdwg.mxu0
    %v267 = vlaneseq
    %v268 = vand.u32 %v267, 127
    %v269 = vld [vmem:[%s1] sm:$0xff]
    %v270 = vld [vmem:[%s1 + $0x8] sm:$0xff]
    %271 = vset.pattern.permute.xlu0 0
    %272 = vperm.xlu0 %271, %v269
    %v273 = vpop.permute.xlu0 %272
    %274 = vset.pattern.permute.xlu0 0
    %275 = vperm.xlu0 %274, %v270
    %v276 = vpop.permute.xlu0 %275
    %vm277 = vcmp.ge.s32.totalorder %v268, %v273
    %vm278 = vcmp.ge.s32.totalorder %v268, %v276
    %v279 = vld [vmem:[%s2] sm:$0xff]
    %v280 = vld [vmem:[%s2 + $0x8] sm:$0xff]
    %281 = vset.pattern.permute.xlu0 0
    %282 = vperm.xlu0 %281, %v279
    %v283 = vpop.permute.xlu0 %282
    %284 = vset.pattern.permute.xlu0 0
    %285 = vperm.xlu0 %284, %v280
    %v286 = vpop.permute.xlu0 %285
    %vm287 = vcmp.le.s32.totalorder %v268, %v283
    %vm288 = vcmp.le.s32.totalorder %v268, %v286
    %vm289 = vmand %vm277, %vm287
    %vm290 = vmand %vm278, %vm288
    %v291 = vlaneseq
    %v292 = vshrl.u32 %v291, 7
    %v293 = vsub.s32 0, %v292
    %v294 = vrot.slane %v188, %v293
    %v295 = vlaneseq
    %v296 = vshrl.u32 %v295, 7
    %v297 = vsub.s32 0, %v296
    %v298 = vrot.slane %v264, %v297
    %v299 = vsel %vm289, %v294, -inf
    %v300 = vsel %vm290, %v298, -inf
    %vm301 = vcmask 130048
    %v302 = vsel %vm301, %v299, -inf
    %303 = vmax.xlane.f32.xlu0 %v302
    %v304 = vpop.xlane.xlu0 %303
    %v305 = vsel %vm301, %v300, -inf
    %306 = vmax.xlane.f32.xlu0 %v305
    %v307 = vpop.xlane.xlu0 %306
    %v308 = vsub.f32 %v299, %v304
    %v309 = vsub.f32 %v300, %v307
    %v310 = vmul.f32 %v308, 1.442695
    %v311 = vpow.pop %v310
    %v312 = vmul.f32 %v309, 1.442695
    %v313 = vpow.pop %v312
    %v314 = vsel %vm289, %v311, 0.0
    %v315 = vsel %vm290, %v313, 0.0
    %v316 = vsel %vm301, %v314, 0.0
    %317 = vadd.xlane.f32.xlu0 %v316
    %v318 = vpop.xlane.xlu0 %317
    %v319 = vsel %vm301, %v315, 0.0
    %320 = vadd.xlane.f32.xlu0 %v319
    %v321 = vpop.xlane.xlu0 %320
    %v322 = vrcp.pop %v318
    %v323 = vmul.f32 %v314, %v322
    %v324 = vrcp.pop %v321
    %v325 = vmul.f32 %v315, %v324
    %v327 = vsel %vm301, %v323, 0
    %329 = vmatprep.subr.mxu0 0.0
    %330 = vmatpush1.msra.mxu0 %v96
    %331 = vmatprep.subr.mxu0 0.0
    %332 = vmatpush1.msra.mxu0 %v97
    %333 = vmatprep.subr.mxu0 0.0
    %334 = vmatpush1.msra.mxu0 0.0
    %335 = vmatprep.subr.mxu0 0.0
    %336 = vmatpush1.msra.mxu0 0.0
    %337 = vmatprep.subr.mxu0 0.0
    %338 = vmatpush1.msra.mxu0 0.0
    %339 = vmatprep.subr.mxu0 0.0
    %340 = vmatpush1.msra.mxu0 0.0
    %341 = vmatprep.subr.mxu0 0.0
    %342 = vmatpush1.msra.mxu0 0.0
    %343 = vmatprep.subr.mxu0 0.0
    %344 = vmatpush1.msra.mxu0 0.0
    %345 = vmatprep.subr.mxu0 0.0
    %346 = vmatpush1.msra.mxu0 0.0
    %347 = vmatprep.subr.mxu0 0.0
    %348 = vmatpush1.msra.mxu0 0.0
    %349 = vmatprep.subr.mxu0 0.0
    %350 = vmatpush1.msra.mxu0 0.0
    %351 = vmatprep.subr.mxu0 0.0
    %352 = vmatpush1.msra.mxu0 0.0
    %353 = vmatprep.subr.mxu0 0.0
    %354 = vmatpush1.msra.mxu0 0.0
    %355 = vmatprep.subr.mxu0 0.0
    %356 = vmatpush1.msra.mxu0 0.0
    %357 = vmatprep.subr.mxu0 0.0
    %358 = vmatpush1.msra.mxu0 0.0
    %359 = vmatprep.subr.mxu0 0.0
    %360 = vmatpush1.msra.mxu0 0.0
    %361 = vmatprep.subr.mxu0 0.0
    %362 = vmatpush1.msra.mxu0 0.0
    %363 = vmatprep.subr.mxu0 0.0
    %364 = vmatpush1.msra.mxu0 0.0
    %365 = vmatprep.subr.mxu0 0.0
    %366 = vmatpush1.msra.mxu0 0.0
    %367 = vmatprep.subr.mxu0 0.0
    %368 = vmatpush1.msra.mxu0 0.0
    %369 = vmatprep.subr.mxu0 0.0
    %370 = vmatpush1.msra.mxu0 0.0
    %371 = vmatprep.subr.mxu0 0.0
    %372 = vmatpush1.msra.mxu0 0.0
    %373 = vmatprep.subr.mxu0 0.0
    %374 = vmatpush1.msra.mxu0 0.0
    %375 = vmatprep.subr.mxu0 0.0
    %376 = vmatpush1.msra.mxu0 0.0
    %377 = vmatprep.subr.mxu0 0.0
    %378 = vmatpush1.msra.mxu0 0.0
    %379 = vmatprep.subr.mxu0 0.0
    %380 = vmatpush1.msra.mxu0 0.0
    %381 = vmatprep.subr.mxu0 0.0
    %382 = vmatpush1.msra.mxu0 0.0
    %383 = vmatprep.subr.mxu0 0.0
    %384 = vmatpush1.msra.mxu0 0.0
    %385 = vmatprep.subr.mxu0 0.0
    %386 = vmatpush1.msra.mxu0 0.0
    %387 = vmatprep.subr.mxu0 0.0
    %388 = vmatpush1.msra.mxu0 0.0
    %389 = vmatprep.subr.mxu0 0.0
    %390 = vmatpush1.msra.mxu0 0.0
    %391 = vmatprep.subr.mxu0 0.0
    %392 = vmatpush1.msra.mxu0 0.0
    %393 = vmatprep.mubr.f32.mxu0 0.0
    %394 = vmatmul.mubr.f32.gmra.mrb[0].mxu0 %v327
    %v395 = vpop.f32.mrb[0].mxu0
    %v396 = vadd.f32 0.0, %v395
    %v397 = vpop.f32.mrb[0].mxu0
    %398 = vdwg.mxu0
    %v400 = vsel %vm301, %v325, 0
    %402 = vmatprep.subr.mxu0 0.0
    %403 = vmatpush1.msra.mxu0 %v98
    %404 = vmatprep.subr.mxu0 0.0
    %405 = vmatpush1.msra.mxu0 %v99
    %406 = vmatprep.subr.mxu0 0.0
    %407 = vmatpush1.msra.mxu0 0.0
    %408 = vmatprep.subr.mxu0 0.0
    %409 = vmatpush1.msra.mxu0 0.0
    %410 = vmatprep.subr.mxu0 0.0
    %411 = vmatpush1.msra.mxu0 0.0
    %412 = vmatprep.subr.mxu0 0.0
    %413 = vmatpush1.msra.mxu0 0.0
    %414 = vmatprep.subr.mxu0 0.0
    %415 = vmatpush1.msra.mxu0 0.0
    %416 = vmatprep.subr.mxu0 0.0
    %417 = vmatpush1.msra.mxu0 0.0
    %418 = vmatprep.subr.mxu0 0.0
    %419 = vmatpush1.msra.mxu0 0.0
    %420 = vmatprep.subr.mxu0 0.0
    %421 = vmatpush1.msra.mxu0 0.0
    %422 = vmatprep.subr.mxu0 0.0
    %423 = vmatpush1.msra.mxu0 0.0
    %424 = vmatprep.subr.mxu0 0.0
    %425 = vmatpush1.msra.mxu0 0.0
    %426 = vmatprep.subr.mxu0 0.0
    %427 = vmatpush1.msra.mxu0 0.0
    %428 = vmatprep.subr.mxu0 0.0
    %429 = vmatpush1.msra.mxu0 0.0
    %430 = vmatprep.subr.mxu0 0.0
    %431 = vmatpush1.msra.mxu0 0.0
    %432 = vmatprep.subr.mxu0 0.0
    %433 = vmatpush1.msra.mxu0 0.0
    %434 = vmatprep.subr.mxu0 0.0
    %435 = vmatpush1.msra.mxu0 0.0
    %436 = vmatprep.subr.mxu0 0.0
    %437 = vmatpush1.msra.mxu0 0.0
    %438 = vmatprep.subr.mxu0 0.0
    %439 = vmatpush1.msra.mxu0 0.0
    %440 = vmatprep.subr.mxu0 0.0
    %441 = vmatpush1.msra.mxu0 0.0
    %442 = vmatprep.subr.mxu0 0.0
    %443 = vmatpush1.msra.mxu0 0.0
    %444 = vmatprep.subr.mxu0 0.0
    %445 = vmatpush1.msra.mxu0 0.0
    %446 = vmatprep.subr.mxu0 0.0
    %447 = vmatpush1.msra.mxu0 0.0
    %448 = vmatprep.subr.mxu0 0.0
    %449 = vmatpush1.msra.mxu0 0.0
    %450 = vmatprep.subr.mxu0 0.0
    %451 = vmatpush1.msra.mxu0 0.0
    %452 = vmatprep.subr.mxu0 0.0
    %453 = vmatpush1.msra.mxu0 0.0
    %454 = vmatprep.subr.mxu0 0.0
    %455 = vmatpush1.msra.mxu0 0.0
    %456 = vmatprep.subr.mxu0 0.0
    %457 = vmatpush1.msra.mxu0 0.0
    %458 = vmatprep.subr.mxu0 0.0
    %459 = vmatpush1.msra.mxu0 0.0
    %460 = vmatprep.subr.mxu0 0.0
    %461 = vmatpush1.msra.mxu0 0.0
    %462 = vmatprep.subr.mxu0 0.0
    %463 = vmatpush1.msra.mxu0 0.0
    %464 = vmatprep.subr.mxu0 0.0
    %465 = vmatpush1.msra.mxu0 0.0
    %466 = vmatprep.mubr.f32.mxu0 0.0
    %467 = vmatmul.mubr.f32.gmra.mrb[0].mxu0 %v400
    %v468 = vpop.f32.mrb[0].mxu0
    %v469 = vadd.f32 0.0, %v468
    %v470 = vpop.f32.mrb[0].mxu0
    %471 = vdwg.mxu0
    %v472 = vld [vmem:[#allocation3] sm:$0xff]
    %v473 = vld [vmem:[#allocation3 + $0x8] sm:$0xff]
    %v474 = vld [vmem:[#allocation3 + $0x10] sm:$0xff]
    %v475 = vld [vmem:[#allocation3 + $0x18] sm:$0xff]
    %v476 = vld [vmem:[#allocation3 + $0x20] sm:$0xff]
    %v477 = vld [vmem:[#allocation3 + $0x28] sm:$0xff]
    %v478 = vld [vmem:[#allocation3 + $0x30] sm:$0xff]
    %v479 = vld [vmem:[#allocation3 + $0x38] sm:$0xff]
    %v480 = vld [vmem:[#allocation3 + $0x40] sm:$0xff]
    %v481 = vld [vmem:[#allocation3 + $0x48] sm:$0xff]
    %v482 = vld [vmem:[#allocation3 + $0x50] sm:$0xff]
    %v483 = vld [vmem:[#allocation3 + $0x58] sm:$0xff]
    %v484 = vld [vmem:[#allocation3 + $0x60] sm:$0xff]
    %v485 = vld [vmem:[#allocation3 + $0x68] sm:$0xff]
    %v486 = vld [vmem:[#allocation3 + $0x70] sm:$0xff]
    %v487 = vld [vmem:[#allocation3 + $0x78] sm:$0xff]
    %v488 = vld [vmem:[#allocation3 + $0x80] sm:$0xff]
    %v489 = vld [vmem:[#allocation3 + $0x88] sm:$0xff]
    %v490 = vld [vmem:[#allocation3 + $0x90] sm:$0xff]
    %v491 = vld [vmem:[#allocation3 + $0x98] sm:$0xff]
    %v492 = vld [vmem:[#allocation3 + $0xa0] sm:$0xff]
    %v493 = vld [vmem:[#allocation3 + $0xa8] sm:$0xff]
    %v494 = vld [vmem:[#allocation3 + $0xb0] sm:$0xff]
    %v495 = vld [vmem:[#allocation3 + $0xb8] sm:$0xff]
    %v496 = vld [vmem:[#allocation3 + $0xc0] sm:$0xff]
    %v497 = vld [vmem:[#allocation3 + $0xc8] sm:$0xff]
    %v498 = vld [vmem:[#allocation3 + $0xd0] sm:$0xff]
    %v499 = vld [vmem:[#allocation3 + $0xd8] sm:$0xff]
    %v500 = vld [vmem:[#allocation3 + $0xe0] sm:$0xff]
    %v501 = vld [vmem:[#allocation3 + $0xe8] sm:$0xff]
    %v502 = vld [vmem:[#allocation3 + $0xf0] sm:$0xff]
    %v503 = vld [vmem:[#allocation3 + $0xf8] sm:$0xff]
    %v504 = vld [vmem:[#allocation3 + $0x100] sm:$0xff]
    %v505 = vld [vmem:[#allocation3 + $0x108] sm:$0xff]
    %v506 = vld [vmem:[#allocation3 + $0x110] sm:$0xff]
    %v507 = vld [vmem:[#allocation3 + $0x118] sm:$0xff]
    %v508 = vld [vmem:[#allocation3 + $0x120] sm:$0xff]
    %v509 = vld [vmem:[#allocation3 + $0x128] sm:$0xff]
    %v510 = vld [vmem:[#allocation3 + $0x130] sm:$0xff]
    %v511 = vld [vmem:[#allocation3 + $0x138] sm:$0xff]
    %v512 = vld [vmem:[#allocation3 + $0x140] sm:$0xff]
    %v513 = vld [vmem:[#allocation3 + $0x148] sm:$0xff]
    %v514 = vld [vmem:[#allocation3 + $0x150] sm:$0xff]
    %v515 = vld [vmem:[#allocation3 + $0x158] sm:$0xff]
    %v516 = vld [vmem:[#allocation3 + $0x160] sm:$0xff]
    %v517 = vld [vmem:[#allocation3 + $0x168] sm:$0xff]
    %v518 = vld [vmem:[#allocation3 + $0x170] sm:$0xff]
    %v519 = vld [vmem:[#allocation3 + $0x178] sm:$0xff]
    %v520 = vld [vmem:[#allocation6] sm:$0xff]
    %v521 = vld [vmem:[#allocation6 + $0x8] sm:$0xff]
    %v522 = vld [vmem:[#allocation6 + $0x10] sm:$0xff]
    %v523 = vld [vmem:[#allocation6 + $0x18] sm:$0xff]
    %v524 = vld [vmem:[#allocation6 + $0x20] sm:$0xff]
    %v525 = vld [vmem:[#allocation6 + $0x28] sm:$0xff]
    %v526 = vld [vmem:[#allocation6 + $0x30] sm:$0xff]
    %v527 = vld [vmem:[#allocation6 + $0x38] sm:$0xff]
    %v528 = vld [vmem:[#allocation6 + $0x40] sm:$0xff]
    %v529 = vld [vmem:[#allocation6 + $0x48] sm:$0xff]
    %v530 = vld [vmem:[#allocation6 + $0x50] sm:$0xff]
    %v531 = vld [vmem:[#allocation6 + $0x58] sm:$0xff]
    %v532 = vld [vmem:[#allocation6 + $0x60] sm:$0xff]
    %v533 = vld [vmem:[#allocation6 + $0x68] sm:$0xff]
    %v534 = vld [vmem:[#allocation6 + $0x70] sm:$0xff]
    %v535 = vld [vmem:[#allocation6 + $0x78] sm:$0xff]
    %v536 = vld [vmem:[#allocation6 + $0x80] sm:$0xff]
    %v537 = vld [vmem:[#allocation6 + $0x88] sm:$0xff]
    %v538 = vld [vmem:[#allocation6 + $0x90] sm:$0xff]
    %v539 = vld [vmem:[#allocation6 + $0x98] sm:$0xff]
    %v540 = vld [vmem:[#allocation6 + $0xa0] sm:$0xff]
    %v541 = vld [vmem:[#allocation6 + $0xa8] sm:$0xff]
    %v542 = vld [vmem:[#allocation6 + $0xb0] sm:$0xff]
    %v543 = vld [vmem:[#allocation6 + $0xb8] sm:$0xff]
    %v544 = vld [vmem:[#allocation6 + $0xc0] sm:$0xff]
    %v545 = vld [vmem:[#allocation6 + $0xc8] sm:$0xff]
    %v546 = vld [vmem:[#allocation6 + $0xd0] sm:$0xff]
    %v547 = vld [vmem:[#allocation6 + $0xd8] sm:$0xff]
    %v548 = vld [vmem:[#allocation6 + $0xe0] sm:$0xff]
    %v549 = vld [vmem:[#allocation6 + $0xe8] sm:$0xff]
    %v550 = vld [vmem:[#allocation6 + $0xf0] sm:$0xff]
    %v551 = vld [vmem:[#allocation6 + $0xf8] sm:$0xff]
    %v552 = vld [vmem:[#allocation6 + $0x100] sm:$0xff]
    %v553 = vld [vmem:[#allocation6 + $0x108] sm:$0xff]
    %v554 = vld [vmem:[#allocation6 + $0x110] sm:$0xff]
    %v555 = vld [vmem:[#allocation6 + $0x118] sm:$0xff]
    %v556 = vld [vmem:[#allocation6 + $0x120] sm:$0xff]
    %v557 = vld [vmem:[#allocation6 + $0x128] sm:$0xff]
    %v558 = vld [vmem:[#allocation6 + $0x130] sm:$0xff]
    %v559 = vld [vmem:[#allocation6 + $0x138] sm:$0xff]
    %v560 = vld [vmem:[#allocation6 + $0x140] sm:$0xff]
    %v561 = vld [vmem:[#allocation6 + $0x148] sm:$0xff]
    %v562 = vld [vmem:[#allocation6 + $0x150] sm:$0xff]
    %v563 = vld [vmem:[#allocation6 + $0x158] sm:$0xff]
    %v564 = vld [vmem:[#allocation6 + $0x160] sm:$0xff]
    %v565 = vld [vmem:[#allocation6 + $0x168] sm:$0xff]
    %v566 = vld [vmem:[#allocation6 + $0x170] sm:$0xff]
    %v567 = vld [vmem:[#allocation6 + $0x178] sm:$0xff]
    %v570 = vrot.slane %v396, 1
    %vm571 = vcmask 1041409
    %v572 = vsel %vm571, %v469, %v570
    %v573 = vsel %vm111, %v572, 0
    %575 = vmatprep.subr.mxu0 %v521
    %576 = vmatpush1.msra.mxu0 %v520
    %577 = vmatprep.subr.mxu0 %v525
    %578 = vmatpush1.msra.mxu0 %v524
    %579 = vmatprep.subr.mxu0 %v529
    %580 = vmatpush1.msra.mxu0 %v528
    %581 = vmatprep.subr.mxu0 %v533
    %582 = vmatpush1.msra.mxu0 %v532
    %583 = vmatprep.subr.mxu0 %v537
    %584 = vmatpush1.msra.mxu0 %v536
    %585 = vmatprep.subr.mxu0 %v541
    %586 = vmatpush1.msra.mxu0 %v540
    %587 = vmatprep.subr.mxu0 %v545
    %588 = vmatpush1.msra.mxu0 %v544
    %589 = vmatprep.subr.mxu0 %v549
    %590 = vmatpush1.msra.mxu0 %v548
    %591 = vmatprep.subr.mxu0 %v553
    %592 = vmatpush1.msra.mxu0 %v552
    %593 = vmatprep.subr.mxu0 %v557
    %594 = vmatpush1.msra.mxu0 %v556
    %595 = vmatprep.subr.mxu0 %v561
    %596 = vmatpush1.msra.mxu0 %v560
    %597 = vmatprep.subr.mxu0 %v565
    %598 = vmatpush1.msra.mxu0 %v564
    %599 = vmatprep.subr.mxu0 0.0
    %600 = vmatpush1.msra.mxu0 0.0
    %601 = vmatprep.subr.mxu0 0.0
    %602 = vmatpush1.msra.mxu0 0.0
    %603 = vmatprep.subr.mxu0 0.0
    %604 = vmatpush1.msra.mxu0 0.0
    %605 = vmatprep.subr.mxu0 0.0
    %606 = vmatpush1.msra.mxu0 0.0
    %607 = vmatprep.subr.mxu0 0.0
    %608 = vmatpush1.msra.mxu0 0.0
    %609 = vmatprep.subr.mxu0 0.0
    %610 = vmatpush1.msra.mxu0 0.0
    %611 = vmatprep.subr.mxu0 0.0
    %612 = vmatpush1.msra.mxu0 0.0
    %613 = vmatprep.subr.mxu0 0.0
    %614 = vmatpush1.msra.mxu0 0.0
    %615 = vmatprep.subr.mxu0 0.0
    %616 = vmatpush1.msra.mxu0 0.0
    %617 = vmatprep.subr.mxu0 0.0
    %618 = vmatpush1.msra.mxu0 0.0
    %619 = vmatprep.subr.mxu0 0.0
    %620 = vmatpush1.msra.mxu0 0.0
    %621 = vmatprep.subr.mxu0 0.0
    %622 = vmatpush1.msra.mxu0 0.0
    %623 = vmatprep.subr.mxu0 0.0
    %624 = vmatpush1.msra.mxu0 0.0
    %625 = vmatprep.subr.mxu0 0.0
    %626 = vmatpush1.msra.mxu0 0.0
    %627 = vmatprep.subr.mxu0 0.0
    %628 = vmatpush1.msra.mxu0 0.0
    %629 = vmatprep.subr.mxu0 0.0
    %630 = vmatpush1.msra.mxu0 0.0
    %631 = vmatprep.subr.mxu0 0.0
    %632 = vmatpush1.msra.mxu0 0.0
    %633 = vmatprep.subr.mxu0 0.0
    %634 = vmatpush1.msra.mxu0 0.0
    %635 = vmatprep.subr.mxu0 0.0
    %636 = vmatpush1.msra.mxu0 0.0
    %637 = vmatprep.subr.mxu0 0.0
    %638 = vmatpush1.msra.mxu0 0.0
    %639 = vmatprep.mubr.f32.mxu0 0.0
    %640 = vmatmul.mubr.f32.gmra.mrb[0].mxu0 %v573
    %v641 = vpop.f32.mrb[0].mxu0
    %v642 = vadd.f32 0.0, %v641
    %v643 = vpop.f32.mrb[0].mxu0
    %v644 = vadd.f32 0.0, %v643
    %645 = vdwg.mxu0
    %646 = vmatprep.subr.mxu0 %v523
    %647 = vmatpush1.msra.mxu0 %v522
    %648 = vmatprep.subr.mxu0 %v527
    %649 = vmatpush1.msra.mxu0 %v526
    %650 = vmatprep.subr.mxu0 %v531
    %651 = vmatpush1.msra.mxu0 %v530
    %652 = vmatprep.subr.mxu0 %v535
    %653 = vmatpush1.msra.mxu0 %v534
    %654 = vmatprep.subr.mxu0 %v539
    %655 = vmatpush1.msra.mxu0 %v538
    %656 = vmatprep.subr.mxu0 %v543
    %657 = vmatpush1.msra.mxu0 %v542
    %658 = vmatprep.subr.mxu0 %v547
    %659 = vmatpush1.msra.mxu0 %v546
    %660 = vmatprep.subr.mxu0 %v551
    %661 = vmatpush1.msra.mxu0 %v550
    %662 = vmatprep.subr.mxu0 %v555
    %663 = vmatpush1.msra.mxu0 %v554
    %664 = vmatprep.subr.mxu0 %v559
    %665 = vmatpush1.msra.mxu0 %v558
    %666 = vmatprep.subr.mxu0 %v563
    %667 = vmatpush1.msra.mxu0 %v562
    %668 = vmatprep.subr.mxu0 %v567
    %669 = vmatpush1.msra.mxu0 %v566
    %670 = vmatprep.subr.mxu0 0.0
    %671 = vmatpush1.msra.mxu0 0.0
    %672 = vmatprep.subr.mxu0 0.0
    %673 = vmatpush1.msra.mxu0 0.0
    %674 = vmatprep.subr.mxu0 0.0
    %675 = vmatpush1.msra.mxu0 0.0
    %676 = vmatprep.subr.mxu0 0.0
    %677 = vmatpush1.msra.mxu0 0.0
    %678 = vmatprep.subr.mxu0 0.0
    %679 = vmatpush1.msra.mxu0 0.0
    %680 = vmatprep.subr.mxu0 0.0
    %681 = vmatpush1.msra.mxu0 0.0
    %682 = vmatprep.subr.mxu0 0.0
    %683 = vmatpush1.msra.mxu0 0.0
    %684 = vmatprep.subr.mxu0 0.0
    %685 = vmatpush1.msra.mxu0 0.0
    %686 = vmatprep.subr.mxu0 0.0
    %687 = vmatpush1.msra.mxu0 0.0
    %688 = vmatprep.subr.mxu0 0.0
    %689 = vmatpush1.msra.mxu0 0.0
    %690 = vmatprep.subr.mxu0 0.0
    %691 = vmatpush1.msra.mxu0 0.0
    %692 = vmatprep.subr.mxu0 0.0
    %693 = vmatpush1.msra.mxu0 0.0
    %694 = vmatprep.subr.mxu0 0.0
    %695 = vmatpush1.msra.mxu0 0.0
    %696 = vmatprep.subr.mxu0 0.0
    %697 = vmatpush1.msra.mxu0 0.0
    %698 = vmatprep.subr.mxu0 0.0
    %699 = vmatpush1.msra.mxu0 0.0
    %700 = vmatprep.subr.mxu0 0.0
    %701 = vmatpush1.msra.mxu0 0.0
    %702 = vmatprep.subr.mxu0 0.0
    %703 = vmatpush1.msra.mxu0 0.0
    %704 = vmatprep.subr.mxu0 0.0
    %705 = vmatpush1.msra.mxu0 0.0
    %706 = vmatprep.subr.mxu0 0.0
    %707 = vmatpush1.msra.mxu0 0.0
    %708 = vmatprep.subr.mxu0 0.0
    %709 = vmatpush1.msra.mxu0 0.0
    %710 = vmatprep.mubr.f32.mxu0 0.0
    %711 = vmatmul.mubr.f32.gmra.mrb[0].mxu0 %v573
    %v712 = vpop.f32.mrb[0].mxu0
    %v713 = vadd.f32 0.0, %v712
    %v714 = vpop.f32.mrb[0].mxu0
    %v715 = vadd.f32 0.0, %v714
    %716 = vdwg.mxu0
    %v717 = vrot.slane %v469, 7
    %v718 = vsel %vm571, %v717, %v396
    %v719 = vsel %vm111, %v718, 0
    %721 = vmatprep.subr.mxu0 %v473
    %722 = vmatpush1.msra.mxu0 %v472
    %723 = vmatprep.subr.mxu0 %v477
    %724 = vmatpush1.msra.mxu0 %v476
    %725 = vmatprep.subr.mxu0 %v481
    %726 = vmatpush1.msra.mxu0 %v480
    %727 = vmatprep.subr.mxu0 %v485
    %728 = vmatpush1.msra.mxu0 %v484
    %729 = vmatprep.subr.mxu0 %v489
    %730 = vmatpush1.msra.mxu0 %v488
    %731 = vmatprep.subr.mxu0 %v493
    %732 = vmatpush1.msra.mxu0 %v492
    %733 = vmatprep.subr.mxu0 %v497
    %734 = vmatpush1.msra.mxu0 %v496
    %735 = vmatprep.subr.mxu0 %v501
    %736 = vmatpush1.msra.mxu0 %v500
    %737 = vmatprep.subr.mxu0 %v505
    %738 = vmatpush1.msra.mxu0 %v504
    %739 = vmatprep.subr.mxu0 %v509
    %740 = vmatpush1.msra.mxu0 %v508
    %741 = vmatprep.subr.mxu0 %v513
    %742 = vmatpush1.msra.mxu0 %v512
    %743 = vmatprep.subr.mxu0 %v517
    %744 = vmatpush1.msra.mxu0 %v516
    %745 = vmatprep.subr.mxu0 0.0
    %746 = vmatpush1.msra.mxu0 0.0
    %747 = vmatprep.subr.mxu0 0.0
    %748 = vmatpush1.msra.mxu0 0.0
    %749 = vmatprep.subr.mxu0 0.0
    %750 = vmatpush1.msra.mxu0 0.0
    %751 = vmatprep.subr.mxu0 0.0
    %752 = vmatpush1.msra.mxu0 0.0
    %753 = vmatprep.subr.mxu0 0.0
    %754 = vmatpush1.msra.mxu0 0.0
    %755 = vmatprep.subr.mxu0 0.0
    %756 = vmatpush1.msra.mxu0 0.0
    %757 = vmatprep.subr.mxu0 0.0
    %758 = vmatpush1.msra.mxu0 0.0
    %759 = vmatprep.subr.mxu0 0.0
    %760 = vmatpush1.msra.mxu0 0.0
    %761 = vmatprep.subr.mxu0 0.0
    %762 = vmatpush1.msra.mxu0 0.0
    %763 = vmatprep.subr.mxu0 0.0
    %764 = vmatpush1.msra.mxu0 0.0
    %765 = vmatprep.subr.mxu0 0.0
    %766 = vmatpush1.msra.mxu0 0.0
    %767 = vmatprep.subr.mxu0 0.0
    %768 = vmatpush1.msra.mxu0 0.0
    %769 = vmatprep.subr.mxu0 0.0
    %770 = vmatpush1.msra.mxu0 0.0
    %771 = vmatprep.subr.mxu0 0.0
    %772 = vmatpush1.msra.mxu0 0.0
    %773 = vmatprep.subr.mxu0 0.0
    %774 = vmatpush1.msra.mxu0 0.0
    %775 = vmatprep.subr.mxu0 0.0
    %776 = vmatpush1.msra.mxu0 0.0
    %777 = vmatprep.subr.mxu0 0.0
    %778 = vmatpush1.msra.mxu0 0.0
    %779 = vmatprep.subr.mxu0 0.0
    %780 = vmatpush1.msra.mxu0 0.0
    %781 = vmatprep.subr.mxu0 0.0
    %782 = vmatpush1.msra.mxu0 0.0
    %783 = vmatprep.subr.mxu0 0.0
    %784 = vmatpush1.msra.mxu0 0.0
    %785 = vmatprep.mubr.f32.mxu0 0.0
    %786 = vmatmul.mubr.f32.gmra.mrb[0].mxu0 %v719
    %v787 = vpop.f32.mrb[0].mxu0
    %v788 = vadd.f32 %v642, %v787
    %v789 = vpop.f32.mrb[0].mxu0
    %v790 = vadd.f32 %v644, %v789
    %791 = vdwg.mxu0
    %792 = vmatprep.subr.mxu0 %v475
    %793 = vmatpush1.msra.mxu0 %v474
    %794 = vmatprep.subr.mxu0 %v479
    %795 = vmatpush1.msra.mxu0 %v478
    %796 = vmatprep.subr.mxu0 %v483
    %797 = vmatpush1.msra.mxu0 %v482
    %798 = vmatprep.subr.mxu0 %v487
    %799 = vmatpush1.msra.mxu0 %v486
    %800 = vmatprep.subr.mxu0 %v491
    %801 = vmatpush1.msra.mxu0 %v490
    %802 = vmatprep.subr.mxu0 %v495
    %803 = vmatpush1.msra.mxu0 %v494
    %804 = vmatprep.subr.mxu0 %v499
    %805 = vmatpush1.msra.mxu0 %v498
    %806 = vmatprep.subr.mxu0 %v503
    %807 = vmatpush1.msra.mxu0 %v502
    %808 = vmatprep.subr.mxu0 %v507
    %809 = vmatpush1.msra.mxu0 %v506
    %810 = vmatprep.subr.mxu0 %v511
    %811 = vmatpush1.msra.mxu0 %v510
    %812 = vmatprep.subr.mxu0 %v515
    %813 = vmatpush1.msra.mxu0 %v514
    %814 = vmatprep.subr.mxu0 %v519
    %815 = vmatpush1.msra.mxu0 %v518
    %816 = vmatprep.subr.mxu0 0.0
    %817 = vmatpush1.msra.mxu0 0.0
    %818 = vmatprep.subr.mxu0 0.0
    %819 = vmatpush1.msra.mxu0 0.0
    %820 = vmatprep.subr.mxu0 0.0
    %821 = vmatpush1.msra.mxu0 0.0
    %822 = vmatprep.subr.mxu0 0.0
    %823 = vmatpush1.msra.mxu0 0.0
    %824 = vmatprep.subr.mxu0 0.0
    %825 = vmatpush1.msra.mxu0 0.0
    %826 = vmatprep.subr.mxu0 0.0
    %827 = vmatpush1.msra.mxu0 0.0
    %828 = vmatprep.subr.mxu0 0.0
    %829 = vmatpush1.msra.mxu0 0.0
    %830 = vmatprep.subr.mxu0 0.0
    %831 = vmatpush1.msra.mxu0 0.0
    %832 = vmatprep.subr.mxu0 0.0
    %833 = vmatpush1.msra.mxu0 0.0
    %834 = vmatprep.subr.mxu0 0.0
    %835 = vmatpush1.msra.mxu0 0.0
    %836 = vmatprep.subr.mxu0 0.0
    %837 = vmatpush1.msra.mxu0 0.0
    %838 = vmatprep.subr.mxu0 0.0
    %839 = vmatpush1.msra.mxu0 0.0
    %840 = vmatprep.subr.mxu0 0.0
    %841 = vmatpush1.msra.mxu0 0.0
    %842 = vmatprep.subr.mxu0 0.0
    %843 = vmatpush1.msra.mxu0 0.0
    %844 = vmatprep.subr.mxu0 0.0
    %845 = vmatpush1.msra.mxu0 0.0
    %846 = vmatprep.subr.mxu0 0.0
    %847 = vmatpush1.msra.mxu0 0.0
    %848 = vmatprep.subr.mxu0 0.0
    %849 = vmatpush1.msra.mxu0 0.0
    %850 = vmatprep.subr.mxu0 0.0
    %851 = vmatpush1.msra.mxu0 0.0
    %852 = vmatprep.subr.mxu0 0.0
    %853 = vmatpush1.msra.mxu0 0.0
    %854 = vmatprep.subr.mxu0 0.0
    %855 = vmatpush1.msra.mxu0 0.0
    %856 = vmatprep.mubr.f32.mxu0 0.0
    %857 = vmatmul.mubr.f32.gmra.mrb[0].mxu0 %v719
    %v858 = vpop.f32.mrb[0].mxu0
    %v859 = vadd.f32 %v713, %v858
    %v860 = vpop.f32.mrb[0].mxu0
    %v861 = vadd.f32 %v715, %v860
    %862 = vdwg.mxu0
    %v863 = vld [vmem:[#allocation8] sm:$0xff]
    %v864 = vld [vmem:[#allocation8 + $0x8] sm:$0xff]
    %v865 = vld [vmem:[#allocation8 + $0x10] sm:$0xff]
    %v866 = vld [vmem:[#allocation8 + $0x18] sm:$0xff]
    %v867 = vld [vmem:[#allocation8 + $0x20] sm:$0xff]
    %v868 = vld [vmem:[#allocation8 + $0x28] sm:$0xff]
    %v869 = vld [vmem:[#allocation8 + $0x30] sm:$0xff]
    %v870 = vld [vmem:[#allocation8 + $0x38] sm:$0xff]
    %v871 = vld [vmem:[#allocation8 + $0x40] sm:$0xff]
    %v872 = vld [vmem:[#allocation8 + $0x48] sm:$0xff]
    %v873 = vld [vmem:[#allocation8 + $0x50] sm:$0xff]
    %v874 = vld [vmem:[#allocation8 + $0x58] sm:$0xff]
    %v875 = vld [vmem:[#allocation8 + $0x60] sm:$0xff]
    %v876 = vld [vmem:[#allocation8 + $0x68] sm:$0xff]
    %v877 = vld [vmem:[#allocation8 + $0x70] sm:$0xff]
    %v878 = vld [vmem:[#allocation8 + $0x78] sm:$0xff]
    %v879 = vld [vmem:[#allocation8 + $0x80] sm:$0xff]
    %v880 = vld [vmem:[#allocation8 + $0x88] sm:$0xff]
    %v881 = vld [vmem:[#allocation8 + $0x90] sm:$0xff]
    %v882 = vld [vmem:[#allocation8 + $0x98] sm:$0xff]
    %v883 = vld [vmem:[#allocation8 + $0xa0] sm:$0xff]
    %v884 = vld [vmem:[#allocation8 + $0xa8] sm:$0xff]
    %v885 = vld [vmem:[#allocation8 + $0xb0] sm:$0xff]
    %v886 = vld [vmem:[#allocation8 + $0xb8] sm:$0xff]
    %v887 = vld [vmem:[#allocation8 + $0xc0] sm:$0xff]
    %v888 = vld [vmem:[#allocation8 + $0xc8] sm:$0xff]
    %v889 = vld [vmem:[#allocation8 + $0xd0] sm:$0xff]
    %v890 = vld [vmem:[#allocation8 + $0xd8] sm:$0xff]
    %v891 = vld [vmem:[#allocation8 + $0xe0] sm:$0xff]
    %v892 = vld [vmem:[#allocation8 + $0xe8] sm:$0xff]
    %v893 = vld [vmem:[#allocation8 + $0xf0] sm:$0xff]
    %v894 = vld [vmem:[#allocation8 + $0xf8] sm:$0xff]
    %v895 = vld [vmem:[#allocation8 + $0x100] sm:$0xff]
    %v896 = vld [vmem:[#allocation8 + $0x108] sm:$0xff]
    %v897 = vld [vmem:[#allocation8 + $0x110] sm:$0xff]
    %v898 = vld [vmem:[#allocation8 + $0x118] sm:$0xff]
    %v899 = vld [vmem:[#allocation8 + $0x120] sm:$0xff]
    %v900 = vld [vmem:[#allocation8 + $0x128] sm:$0xff]
    %v901 = vld [vmem:[#allocation8 + $0x130] sm:$0xff]
    %v902 = vld [vmem:[#allocation8 + $0x138] sm:$0xff]
    %v903 = vld [vmem:[#allocation8 + $0x140] sm:$0xff]
    %v904 = vld [vmem:[#allocation8 + $0x148] sm:$0xff]
    %v905 = vld [vmem:[#allocation8 + $0x150] sm:$0xff]
    %v906 = vld [vmem:[#allocation8 + $0x158] sm:$0xff]
    %v907 = vld [vmem:[#allocation8 + $0x160] sm:$0xff]
    %v908 = vld [vmem:[#allocation8 + $0x168] sm:$0xff]
    %v909 = vld [vmem:[#allocation8 + $0x170] sm:$0xff]
    %v910 = vld [vmem:[#allocation8 + $0x178] sm:$0xff]
    %v911 = vrot.slane %v396, 2
    %v912 = vrot.slane %v469, 1
    %v913 = vsel %vm571, %v912, %v911
    %v914 = vsel %vm111, %v913, 0
    %916 = vmatprep.subr.mxu0 %v864
    %917 = vmatpush1.msra.mxu0 %v863
    %918 = vmatprep.subr.mxu0 %v868
    %919 = vmatpush1.msra.mxu0 %v867
    %920 = vmatprep.subr.mxu0 %v872
    %921 = vmatpush1.msra.mxu0 %v871
    %922 = vmatprep.subr.mxu0 %v876
    %923 = vmatpush1.msra.mxu0 %v875
    %924 = vmatprep.subr.mxu0 %v880
    %925 = vmatpush1.msra.mxu0 %v879
    %926 = vmatprep.subr.mxu0 %v884
    %927 = vmatpush1.msra.mxu0 %v883
    %928 = vmatprep.subr.mxu0 %v888
    %929 = vmatpush1.msra.mxu0 %v887
    %930 = vmatprep.subr.mxu0 %v892
    %931 = vmatpush1.msra.mxu0 %v891
    %932 = vmatprep.subr.mxu0 %v896
    %933 = vmatpush1.msra.mxu0 %v895
    %934 = vmatprep.subr.mxu0 %v900
    %935 = vmatpush1.msra.mxu0 %v899
    %936 = vmatprep.subr.mxu0 %v904
    %937 = vmatpush1.msra.mxu0 %v903
    %938 = vmatprep.subr.mxu0 %v908
    %939 = vmatpush1.msra.mxu0 %v907
    %940 = vmatprep.subr.mxu0 0.0
    %941 = vmatpush1.msra.mxu0 0.0
    %942 = vmatprep.subr.mxu0 0.0
    %943 = vmatpush1.msra.mxu0 0.0
    %944 = vmatprep.subr.mxu0 0.0
    %945 = vmatpush1.msra.mxu0 0.0
    %946 = vmatprep.subr.mxu0 0.0
    %947 = vmatpush1.msra.mxu0 0.0
    %948 = vmatprep.subr.mxu0 0.0
    %949 = vmatpush1.msra.mxu0 0.0
    %950 = vmatprep.subr.mxu0 0.0
    %951 = vmatpush1.msra.mxu0 0.0
    %952 = vmatprep.subr.mxu0 0.0
    %953 = vmatpush1.msra.mxu0 0.0
    %954 = vmatprep.subr.mxu0 0.0
    %955 = vmatpush1.msra.mxu0 0.0
    %956 = vmatprep.subr.mxu0 0.0
    %957 = vmatpush1.msra.mxu0 0.0
    %958 = vmatprep.subr.mxu0 0.0
    %959 = vmatpush1.msra.mxu0 0.0
    %960 = vmatprep.subr.mxu0 0.0
    %961 = vmatpush1.msra.mxu0 0.0
    %962 = vmatprep.subr.mxu0 0.0
    %963 = vmatpush1.msra.mxu0 0.0
    %964 = vmatprep.subr.mxu0 0.0
    %965 = vmatpush1.msra.mxu0 0.0
    %966 = vmatprep.subr.mxu0 0.0
    %967 = vmatpush1.msra.mxu0 0.0
    %968 = vmatprep.subr.mxu0 0.0
    %969 = vmatpush1.msra.mxu0 0.0
    %970 = vmatprep.subr.mxu0 0.0
    %971 = vmatpush1.msra.mxu0 0.0
    %972 = vmatprep.subr.mxu0 0.0
    %973 = vmatpush1.msra.mxu0 0.0
    %974 = vmatprep.subr.mxu0 0.0
    %975 = vmatpush1.msra.mxu0 0.0
    %976 = vmatprep.subr.mxu0 0.0
    %977 = vmatpush1.msra.mxu0 0.0
    %978 = vmatprep.subr.mxu0 0.0
    %979 = vmatpush1.msra.mxu0 0.0
    %980 = vmatprep.mubr.f32.mxu0 0.0
    %981 = vmatmul.mubr.f32.gmra.mrb[0].mxu0 %v914
    %v982 = vpop.f32.mrb[0].mxu0
    %v983 = vadd.f32 0.0, %v982
    %v984 = vpop.f32.mrb[0].mxu0
    %v985 = vadd.f32 0.0, %v984
    %986 = vdwg.mxu0
    %987 = vmatprep.subr.mxu0 %v866
    %988 = vmatpush1.msra.mxu0 %v865
    %989 = vmatprep.subr.mxu0 %v870
    %990 = vmatpush1.msra.mxu0 %v869
    %991 = vmatprep.subr.mxu0 %v874
    %992 = vmatpush1.msra.mxu0 %v873
    %993 = vmatprep.subr.mxu0 %v878
    %994 = vmatpush1.msra.mxu0 %v877
    %995 = vmatprep.subr.mxu0 %v882
    %996 = vmatpush1.msra.mxu0 %v881
    %997 = vmatprep.subr.mxu0 %v886
    %998 = vmatpush1.msra.mxu0 %v885
    %999 = vmatprep.subr.mxu0 %v890
    %1000 = vmatpush1.msra.mxu0 %v889
    %1001 = vmatprep.subr.mxu0 %v894
    %1002 = vmatpush1.msra.mxu0 %v893
    %1003 = vmatprep.subr.mxu0 %v898
    %1004 = vmatpush1.msra.mxu0 %v897
    %1005 = vmatprep.subr.mxu0 %v902
    %1006 = vmatpush1.msra.mxu0 %v901
    %1007 = vmatprep.subr.mxu0 %v906
    %1008 = vmatpush1.msra.mxu0 %v905
    %1009 = vmatprep.subr.mxu0 %v910
    %1010 = vmatpush1.msra.mxu0 %v909
    %1011 = vmatprep.subr.mxu0 0.0
    %1012 = vmatpush1.msra.mxu0 0.0
    %1013 = vmatprep.subr.mxu0 0.0
    %1014 = vmatpush1.msra.mxu0 0.0
    %1015 = vmatprep.subr.mxu0 0.0
    %1016 = vmatpush1.msra.mxu0 0.0
    %1017 = vmatprep.subr.mxu0 0.0
    %1018 = vmatpush1.msra.mxu0 0.0
    %1019 = vmatprep.subr.mxu0 0.0
    %1020 = vmatpush1.msra.mxu0 0.0
    %1021 = vmatprep.subr.mxu0 0.0
    %1022 = vmatpush1.msra.mxu0 0.0
    %1023 = vmatprep.subr.mxu0 0.0
    %1024 = vmatpush1.msra.mxu0 0.0
    %1025 = vmatprep.subr.mxu0 0.0
    %1026 = vmatpush1.msra.mxu0 0.0
    %1027 = vmatprep.subr.mxu0 0.0
    %1028 = vmatpush1.msra.mxu0 0.0
    %1029 = vmatprep.subr.mxu0 0.0
    %1030 = vmatpush1.msra.mxu0 0.0
    %1031 = vmatprep.subr.mxu0 0.0
    %1032 = vmatpush1.msra.mxu0 0.0
    %1033 = vmatprep.subr.mxu0 0.0
    %1034 = vmatpush1.msra.mxu0 0.0
    %1035 = vmatprep.subr.mxu0 0.0
    %1036 = vmatpush1.msra.mxu0 0.0
    %1037 = vmatprep.subr.mxu0 0.0
    %1038 = vmatpush1.msra.mxu0 0.0
    %1039 = vmatprep.subr.mxu0 0.0
    %1040 = vmatpush1.msra.mxu0 0.0
    %1041 = vmatprep.subr.mxu0 0.0
    %1042 = vmatpush1.msra.mxu0 0.0
    %1043 = vmatprep.subr.mxu0 0.0
    %1044 = vmatpush1.msra.mxu0 0.0
    %1045 = vmatprep.subr.mxu0 0.0
    %1046 = vmatpush1.msra.mxu0 0.0
    %1047 = vmatprep.subr.mxu0 0.0
    %1048 = vmatpush1.msra.mxu0 0.0
    %1049 = vmatprep.subr.mxu0 0.0
    %1050 = vmatpush1.msra.mxu0 0.0
    %1051 = vmatprep.mubr.f32.mxu0 0.0
    %1052 = vmatmul.mubr.f32.gmra.mrb[0].mxu0 %v914
    %v1053 = vpop.f32.mrb[0].mxu0
    %v1054 = vadd.f32 0.0, %v1053
    %v1055 = vpop.f32.mrb[0].mxu0
    %v1056 = vadd.f32 0.0, %v1055
    %1057 = vdwg.mxu0
    %v1058 = vadd.f32 %v788, %v983
    %v1059 = vadd.f32 %v790, %v985
    %v1060 = vadd.f32 %v859, %v1054
    %v1061 = vadd.f32 %v861, %v1056
    %v1062 = vld [vmem:[%s8] sm:$0xf]
    %v1064 = vlaneseq
    %v1065 = vshrl.u32 %v1064, 7
    %v1066 = vsub.s32 0, %v1065
    %v1067 = vrot.slane %v1062, %v1066
    %v1068 = vlaneseq
    %v1069 = vshrl.u32 %v1068, 7
    %v1070 = vsub.s32 1, %v1069
    %v1071 = vrot.slane %v1062, %v1070
    %v1072 = vlaneseq
    %v1073 = vshrl.u32 %v1072, 7
    %v1074 = vsub.s32 2, %v1073
    %v1075 = vrot.slane %v1062, %v1074
    %v1076 = vlaneseq
    %v1077 = vshrl.u32 %v1076, 7
    %v1078 = vsub.s32 3, %v1077
    %v1079 = vrot.slane %v1062, %v1078
    %v1084 = vadd.f32 %v1058, %v1067
    %v1085 = vadd.f32 %v1059, %v1071
    %v1086 = vadd.f32 %v1060, %v1075
    %v1087 = vadd.f32 %v1061, %v1079
    %v1088 = vmax.f32 %v1084, 0.0
    %v1089 = vmax.f32 %v1085, 0.0
    %v1090 = vmax.f32 %v1086, 0.0
    %v1091 = vmax.f32 %v1087, 0.0
    %v1092 = vld [vmem:[#allocation9] sm:$0xff]
    %v1093 = vld [vmem:[#allocation9 + $0x8] sm:$0xff]
    %v1094 = vld [vmem:[#allocation9 + $0x10] sm:$0xff]
    %v1095 = vld [vmem:[#allocation9 + $0x18] sm:$0xff]
    %v1096 = vld [vmem:[#allocation9 + $0x20] sm:$0xff]
    %v1097 = vld [vmem:[#allocation9 + $0x28] sm:$0xff]
    %v1098 = vld [vmem:[#allocation9 + $0x30] sm:$0xff]
    %v1099 = vld [vmem:[#allocation9 + $0x38] sm:$0xff]
    %v1100 = vld [vmem:[#allocation9 + $0x40] sm:$0xff]
    %v1101 = vld [vmem:[#allocation9 + $0x48] sm:$0xff]
    %v1102 = vld [vmem:[#allocation9 + $0x50] sm:$0xff]
    %v1103 = vld [vmem:[#allocation9 + $0x58] sm:$0xff]
    %v1104 = vld [vmem:[#allocation9 + $0x60] sm:$0xff]
    %v1105 = vld [vmem:[#allocation9 + $0x68] sm:$0xff]
    %v1106 = vld [vmem:[#allocation9 + $0x70] sm:$0xff]
    %v1107 = vld [vmem:[#allocation9 + $0x78] sm:$0xff]
    %v1108 = vld [vmem:[#allocation9 + $0x80] sm:$0xff]
    %v1109 = vld [vmem:[#allocation9 + $0x88] sm:$0xff]
    %v1110 = vld [vmem:[#allocation9 + $0x90] sm:$0xff]
    %v1111 = vld [vmem:[#allocation9 + $0x98] sm:$0xff]
    %v1112 = vld [vmem:[#allocation9 + $0xa0] sm:$0xff]
    %v1113 = vld [vmem:[#allocation9 + $0xa8] sm:$0xff]
    %v1114 = vld [vmem:[#allocation9 + $0xb0] sm:$0xff]
    %v1115 = vld [vmem:[#allocation9 + $0xb8] sm:$0xff]
    %v1116 = vld [vmem:[#allocation9 + $0xc0] sm:$0xff]
    %v1117 = vld [vmem:[#allocation9 + $0xc8] sm:$0xff]
    %v1118 = vld [vmem:[#allocation9 + $0xd0] sm:$0xff]
    %v1119 = vld [vmem:[#allocation9 + $0xd8] sm:$0xff]
    %v1120 = vld [vmem:[#allocation9 + $0xe0] sm:$0xff]
    %v1121 = vld [vmem:[#allocation9 + $0xe8] sm:$0xff]
    %v1122 = vld [vmem:[#allocation9 + $0xf0] sm:$0xff]
    %v1123 = vld [vmem:[#allocation9 + $0xf8] sm:$0xff]
    %v1124 = vld [vmem:[#allocation9 + $0x100] sm:$0xff]
    %v1125 = vld [vmem:[#allocation9 + $0x108] sm:$0xff]
    %v1126 = vld [vmem:[#allocation9 + $0x110] sm:$0xff]
    %v1127 = vld [vmem:[#allocation9 + $0x118] sm:$0xff]
    %v1128 = vld [vmem:[#allocation9 + $0x120] sm:$0xff]
    %v1129 = vld [vmem:[#allocation9 + $0x128] sm:$0xff]
    %v1130 = vld [vmem:[#allocation9 + $0x130] sm:$0xff]
    %v1131 = vld [vmem:[#allocation9 + $0x138] sm:$0xff]
    %v1132 = vld [vmem:[#allocation9 + $0x140] sm:$0xff]
    %v1133 = vld [vmem:[#allocation9 + $0x148] sm:$0xff]
    %v1134 = vld [vmem:[#allocation9 + $0x150] sm:$0xff]
    %v1135 = vld [vmem:[#allocation9 + $0x158] sm:$0xff]
    %v1136 = vld [vmem:[#allocation9 + $0x160] sm:$0xff]
    %v1137 = vld [vmem:[#allocation9 + $0x168] sm:$0xff]
    %v1138 = vld [vmem:[#allocation9 + $0x170] sm:$0xff]
    %v1139 = vld [vmem:[#allocation9 + $0x178] sm:$0xff]
    %v1140 = vld [vmem:[#allocation9 + $0x180] sm:$0xff]
    %v1141 = vld [vmem:[#allocation9 + $0x188] sm:$0xff]
    %v1142 = vld [vmem:[#allocation9 + $0x190] sm:$0xff]
    %v1143 = vld [vmem:[#allocation9 + $0x198] sm:$0xff]
    %v1144 = vld [vmem:[#allocation9 + $0x1a0] sm:$0xff]
    %v1145 = vld [vmem:[#allocation9 + $0x1a8] sm:$0xff]
    %v1146 = vld [vmem:[#allocation9 + $0x1b0] sm:$0xff]
    %v1147 = vld [vmem:[#allocation9 + $0x1b8] sm:$0xff]
    %v1148 = vld [vmem:[#allocation9 + $0x1c0] sm:$0xff]
    %v1149 = vld [vmem:[#allocation9 + $0x1c8] sm:$0xff]
    %v1150 = vld [vmem:[#allocation9 + $0x1d0] sm:$0xff]
    %v1151 = vld [vmem:[#allocation9 + $0x1d8] sm:$0xff]
    %v1152 = vld [vmem:[#allocation9 + $0x1e0] sm:$0xff]
    %v1153 = vld [vmem:[#allocation9 + $0x1e8] sm:$0xff]
    %v1154 = vld [vmem:[#allocation9 + $0x1f0] sm:$0xff]
    %v1155 = vld [vmem:[#allocation9 + $0x1f8] sm:$0xff]
    %v1156 = vld [vmem:[%s10] sm:$0x1]
    %v1158 = vlaneseq
    %v1159 = vshrl.u32 %v1158, 7
    %v1160 = vsub.s32 0, %v1159
    %v1161 = vrot.slane %v1156, %v1160
    %1163 = vmatprep.subr.mxu0 0.0
    %1164 = vmatpush1.msra.mxu0 %v1092
    %1165 = vmatprep.subr.mxu0 0.0
    %1166 = vmatpush1.msra.mxu0 %v1093
    %1167 = vmatprep.subr.mxu0 0.0
    %1168 = vmatpush1.msra.mxu0 %v1094
    %1169 = vmatprep.subr.mxu0 0.0
    %1170 = vmatpush1.msra.mxu0 %v1095
    %1171 = vmatprep.subr.mxu0 0.0
    %1172 = vmatpush1.msra.mxu0 %v1096
    %1173 = vmatprep.subr.mxu0 0.0
    %1174 = vmatpush1.msra.mxu0 %v1097
    %1175 = vmatprep.subr.mxu0 0.0
    %1176 = vmatpush1.msra.mxu0 %v1098
    %1177 = vmatprep.subr.mxu0 0.0
    %1178 = vmatpush1.msra.mxu0 %v1099
    %1179 = vmatprep.subr.mxu0 0.0
    %1180 = vmatpush1.msra.mxu0 %v1100
    %1181 = vmatprep.subr.mxu0 0.0
    %1182 = vmatpush1.msra.mxu0 %v1101
    %1183 = vmatprep.subr.mxu0 0.0
    %1184 = vmatpush1.msra.mxu0 %v1102
    %1185 = vmatprep.subr.mxu0 0.0
    %1186 = vmatpush1.msra.mxu0 %v1103
    %1187 = vmatprep.subr.mxu0 0.0
    %1188 = vmatpush1.msra.mxu0 %v1104
    %1189 = vmatprep.subr.mxu0 0.0
    %1190 = vmatpush1.msra.mxu0 %v1105
    %1191 = vmatprep.subr.mxu0 0.0
    %1192 = vmatpush1.msra.mxu0 %v1106
    %1193 = vmatprep.subr.mxu0 0.0
    %1194 = vmatpush1.msra.mxu0 %v1107
    %1195 = vmatprep.subr.mxu0 0.0
    %1196 = vmatpush1.msra.mxu0 %v1108
    %1197 = vmatprep.subr.mxu0 0.0
    %1198 = vmatpush1.msra.mxu0 %v1109
    %1199 = vmatprep.subr.mxu0 0.0
    %1200 = vmatpush1.msra.mxu0 %v1110
    %1201 = vmatprep.subr.mxu0 0.0
    %1202 = vmatpush1.msra.mxu0 %v1111
    %1203 = vmatprep.subr.mxu0 0.0
    %1204 = vmatpush1.msra.mxu0 %v1112
    %1205 = vmatprep.subr.mxu0 0.0
    %1206 = vmatpush1.msra.mxu0 %v1113
    %1207 = vmatprep.subr.mxu0 0.0
    %1208 = vmatpush1.msra.mxu0 %v1114
    %1209 = vmatprep.subr.mxu0 0.0
    %1210 = vmatpush1.msra.mxu0 %v1115
    %1211 = vmatprep.subr.mxu0 0.0
    %1212 = vmatpush1.msra.mxu0 %v1116
    %1213 = vmatprep.subr.mxu0 0.0
    %1214 = vmatpush1.msra.mxu0 %v1117
    %1215 = vmatprep.subr.mxu0 0.0
    %1216 = vmatpush1.msra.mxu0 %v1118
    %1217 = vmatprep.subr.mxu0 0.0
    %1218 = vmatpush1.msra.mxu0 %v1119
    %1219 = vmatprep.subr.mxu0 0.0
    %1220 = vmatpush1.msra.mxu0 %v1120
    %1221 = vmatprep.subr.mxu0 0.0
    %1222 = vmatpush1.msra.mxu0 %v1121
    %1223 = vmatprep.subr.mxu0 0.0
    %1224 = vmatpush1.msra.mxu0 %v1122
    %1225 = vmatprep.subr.mxu0 0.0
    %1226 = vmatpush1.msra.mxu0 %v1123
    %1227 = vmatprep.mubr.f32.mxu0 %v1089
    %1228 = vmatmul.mubr.f32.gmra.mrb[0].mxu0 %v1088
    %v1229 = vpop.f32.mrb[0].mxu0
    %v1230 = vadd.f32 %v1161, %v1229
    %v1231 = vpop.f32.mrb[0].mxu0
    %1232 = vdwg.mxu0
    %1233 = vmatprep.subr.mxu0 0.0
    %1234 = vmatpush1.msra.mxu0 %v1124
    %1235 = vmatprep.subr.mxu0 0.0
    %1236 = vmatpush1.msra.mxu0 %v1125
    %1237 = vmatprep.subr.mxu0 0.0
    %1238 = vmatpush1.msra.mxu0 %v1126
    %1239 = vmatprep.subr.mxu0 0.0
    %1240 = vmatpush1.msra.mxu0 %v1127
    %1241 = vmatprep.subr.mxu0 0.0
    %1242 = vmatpush1.msra.mxu0 %v1128
    %1243 = vmatprep.subr.mxu0 0.0
    %1244 = vmatpush1.msra.mxu0 %v1129
    %1245 = vmatprep.subr.mxu0 0.0
    %1246 = vmatpush1.msra.mxu0 %v1130
    %1247 = vmatprep.subr.mxu0 0.0
    %1248 = vmatpush1.msra.mxu0 %v1131
    %1249 = vmatprep.subr.mxu0 0.0
    %1250 = vmatpush1.msra.mxu0 %v1132
    %1251 = vmatprep.subr.mxu0 0.0
    %1252 = vmatpush1.msra.mxu0 %v1133
    %1253 = vmatprep.subr.mxu0 0.0
    %1254 = vmatpush1.msra.mxu0 %v1134
    %1255 = vmatprep.subr.mxu0 0.0
    %1256 = vmatpush1.msra.mxu0 %v1135
    %1257 = vmatprep.subr.mxu0 0.0
    %1258 = vmatpush1.msra.mxu0 %v1136
    %1259 = vmatprep.subr.mxu0 0.0
    %1260 = vmatpush1.msra.mxu0 %v1137
    %1261 = vmatprep.subr.mxu0 0.0
    %1262 = vmatpush1.msra.mxu0 %v1138
    %1263 = vmatprep.subr.mxu0 0.0
    %1264 = vmatpush1.msra.mxu0 %v1139
    %1265 = vmatprep.subr.mxu0 0.0
    %1266 = vmatpush1.msra.mxu0 %v1140
    %1267 = vmatprep.subr.mxu0 0.0
    %1268 = vmatpush1.msra.mxu0 %v1141
    %1269 = vmatprep.subr.mxu0 0.0
    %1270 = vmatpush1.msra.mxu0 %v1142
    %1271 = vmatprep.subr.mxu0 0.0
    %1272 = vmatpush1.msra.mxu0 %v1143
    %1273 = vmatprep.subr.mxu0 0.0
    %1274 = vmatpush1.msra.mxu0 %v1144
    %1275 = vmatprep.subr.mxu0 0.0
    %1276 = vmatpush1.msra.mxu0 %v1145
    %1277 = vmatprep.subr.mxu0 0.0
    %1278 = vmatpush1.msra.mxu0 %v1146
    %1279 = vmatprep.subr.mxu0 0.0
    %1280 = vmatpush1.msra.mxu0 %v1147
    %1281 = vmatprep.subr.mxu0 0.0
    %1282 = vmatpush1.msra.mxu0 %v1148
    %1283 = vmatprep.subr.mxu0 0.0
    %1284 = vmatpush1.msra.mxu0 %v1149
    %1285 = vmatprep.subr.mxu0 0.0
    %1286 = vmatpush1.msra.mxu0 %v1150
    %1287 = vmatprep.subr.mxu0 0.0
    %1288 = vmatpush1.msra.mxu0 %v1151
    %1289 = vmatprep.subr.mxu0 0.0
    %1290 = vmatpush1.msra.mxu0 %v1152
    %1291 = vmatprep.subr.mxu0 0.0
    %1292 = vmatpush1.msra.mxu0 %v1153
    %1293 = vmatprep.subr.mxu0 0.0
    %1294 = vmatpush1.msra.mxu0 %v1154
    %1295 = vmatprep.subr.mxu0 0.0
    %1296 = vmatpush1.msra.mxu0 %v1155
    %1297 = vmatprep.mubr.f32.mxu0 %v1091
    %1298 = vmatmul.mubr.f32.gmra.mrb[0].mxu0 %v1090
    %v1299 = vpop.f32.mrb[0].mxu0
    %v1300 = vadd.f32 %v1230, %v1299
    %v1301 = vpop.f32.mrb[0].mxu0
    %1302 = vdwg.mxu0
    %1303 = vst [vmem:[#allocation11] sm:$0x3] %v1300
    // Predicated region
    $region62: #{tpu_custom_call.1} parent=1 // pred_check
      _
    $region63: #{tpu_custom_call.1} parent=1 // pred_check_branch
      %1305 = sbr.rel (0) target = $region65
    $region64: #{tpu_custom_call.1} parent=1 // pred_region
      %s1307 = ssub.s32 32, 32
      %1308 = vsyncadd [#allocation5], %s1307
      %s1310 = sshll.u32 [#allocation11], 4
      %s1311 = int_to_ptr.vmem [resolvable:$true] %s1310
      %1313 = dma.vmem_to_hbm [thread:$0]  %s1311, 32, %s11, [#allocation5]
    $region65: #{tpu_custom_call.1} parent=1 // pred_fallthru
      _
    // Predicated region
    $region66: #{tpu_custom_call.1} parent=1 // pred_check
      _
    $region67: #{tpu_custom_call.1} parent=1 // pred_check_branch
      %1315 = sbr.rel (0) target = $region69
    $region68: #{tpu_custom_call.1} parent=1 // pred_region
      %1316 = dma.done [#allocation5], 32
    $region69: #{tpu_custom_call.1} parent=1 // pred_fallthru
      _
    %1317 = vsyncpa [#allocation4], 1
    %1318 = vsyncpa [#allocation7], 1
    %1319 = vsyncpa [#allocation10], 1
    %1320 = vsyncpa [#allocation5], 1

// kernel: tpu_custom_call.1
$region0: #{tpu_custom_call.1}
  #allocation0 [shape = 'u32[]', space=smem, size = 0x4, offset = 0x4, fixed_abs, tag = 'smem constant byte address 0x4 - core index']
  #allocation1 [shape = 'u32[144,128]{1,0:T(1,128)}', space=vmem, size = 0x12000, scoped, tag = 'internal scratch']
  #allocation2 [shape = 'f32[1,1]{1,0:T(1,128)S(1)}', space=vmem, size = 0x200, scoped, tag = 'scoped memory for tpu_custom_call.1']
  %s0 = inlined_call_operand.vmem [shape: f32[2,16,96], index: 0, kind: input, shape index: {}]
  %s1 = inlined_call_operand.vmem [shape: s32[2,8,1], index: 1, kind: input, shape index: {}]
  %s2 = inlined_call_operand.vmem [shape: s32[2,8,1], index: 2, kind: input, shape index: {}]
  %s3 = inlined_call_operand.vmem [shape: f32[1,1,96], index: 3, kind: input, shape index: {}]
  %s4 = inlined_call_operand.<no memory space> [shape: f32[1,1], index: 4, kind: input, shape index: {}]
  %s5 = inlined_call_operand.hbm [shape: f32[96,512], index: 5, kind: input, shape index: {}]
  %s6 = inlined_call_operand.hbm [shape: f32[96,512], index: 6, kind: input, shape index: {}]
  %s7 = inlined_call_operand.hbm [shape: f32[96,512], index: 7, kind: input, shape index: {}]
  %s8 = inlined_call_operand.vmem [shape: f32[1,512], index: 8, kind: input, shape index: {}]
  %s9 = inlined_call_operand.hbm [shape: f32[512,128], index: 9, kind: input, shape index: {}]
  %s10 = inlined_call_operand.vmem [shape: f32[1,128], index: 10, kind: input, shape index: {}]
  %s11 = inlined_call_operand.hbm [shape: f32[2,128], index: 11, kind: output, shape index: {}]
  %s12 = sld [smem:[#allocation0]]
  $region70: #{tpu_custom_call.1} parent=0
    _
  %s14 = ssub.s32 1, %s12
  %s15 = scalar_select 0, %s14, %s12
  %v16 = vstv %s4
  %17 = vst [vmem:[#allocation2] sm:$0x1] %v16
  $region1: #{tpu_custom_call.1} parent=0
    #allocation3 [shape = 'u8[196608]{0}', space=vmem, size = 0x30000, scoped, tag = 'input window, operand 5, single buffered']
    #allocation4 [shape = 's32[1]{0}', space=sflag, size = 0x4, scoped, tag = 'scoped memory for tpu_custom_call.1']
    #allocation5 [shape = 's32[1]{0}', space=sflag, size = 0x4, scoped, tag = 'scoped memory for tpu_custom_call.1']
    #allocation6 [shape = 'u8[196608]{0}', space=vmem, size = 0x30000, scoped, tag = 'input window, operand 6, single buffered']
    #allocation7 [shape = 's32[1]{0}', space=sflag, size = 0x4, scoped, tag = 'scoped memory for tpu_custom_call.1']
    #allocation8 [shape = 'u8[196608]{0}', space=vmem, size = 0x30000, scoped, tag = 'input window, operand 7, single buffered']
    #allocation9 [shape = 'u8[262144]{0}', space=vmem, size = 0x40000, scoped, tag = 'input window, operand 9, single buffered']
    #allocation10 [shape = 's32[1]{0}', space=sflag, size = 0x4, scoped, tag = 'scoped memory for tpu_custom_call.1']
    #allocation11 [shape = 'u8[1024]{0}', space=vmem, size = 0x400, scoped, tag = 'output window, operand 0, single buffered']
    %18 = vsyncpa [#allocation4], 0
    %19 = vsyncpa [#allocation7], 0
    %20 = vsyncpa [#allocation10], 0
    %21 = vsyncpa [#allocation5], 0
    // Predicated region
    $region2: #{tpu_custom_call.1} parent=1 // pred_check
      _
    $region3: #{tpu_custom_call.1} parent=1 // pred_check_branch
      %23 = sbr.rel (0) target = $region5
    $region4: #{tpu_custom_call.1} parent=1 // pred_region
      _
    $region5: #{tpu_custom_call.1} parent=1 // pred_fallthru
      _
    // Predicated region
    $region6: #{tpu_custom_call.1} parent=1 // pred_check
      _
    $region7: #{tpu_custom_call.1} parent=1 // pred_check_branch
      %25 = sbr.rel (0) target = $region9
    $region8: #{tpu_custom_call.1} parent=1 // pred_region
      _
    $region9: #{tpu_custom_call.1} parent=1 // pred_fallthru
      _
    // Predicated region
    $region10: #{tpu_custom_call.1} parent=1 // pred_check
      _
    $region11: #{tpu_custom_call.1} parent=1 // pred_check_branch
      %27 = sbr.rel (0) target = $region13
    $region12: #{tpu_custom_call.1} parent=1 // pred_region
      _
    $region13: #{tpu_custom_call.1} parent=1 // pred_fallthru
      _
    // Predicated region
    $region14: #{tpu_custom_call.1} parent=1 // pred_check
      _
    $region15: #{tpu_custom_call.1} parent=1 // pred_check_branch
      %29 = sbr.rel (0) target = $region17
    $region16: #{tpu_custom_call.1} parent=1 // pred_region
      _
    $region17: #{tpu_custom_call.1} parent=1 // pred_fallthru
      _
    // Predicated region
    $region18: #{tpu_custom_call.1} parent=1 // pred_check
      _
    $region19: #{tpu_custom_call.1} parent=1 // pred_check_branch
      %31 = sbr.rel (0) target = $region21
    $region20: #{tpu_custom_call.1} parent=1 // pred_region
      _
    $region21: #{tpu_custom_call.1} parent=1 // pred_fallthru
      _
    // Predicated region
    $region22: #{tpu_custom_call.1} parent=1 // pred_check
      _
    $region23: #{tpu_custom_call.1} parent=1 // pred_check_branch
      %33 = sbr.rel (0) target = $region25
    $region24: #{tpu_custom_call.1} parent=1 // pred_region
      %s35 = ssub.s32 6144, 6144
      %36 = vsyncadd [#allocation4], %s35
      %s37 = sshll.u32 [#allocation3], 4
      %s38 = int_to_ptr.vmem [resolvable:$true] %s37
      %43 = dma.hbm_to_vmem [thread:$0]  %s5, 6144, %s38, [#allocation4], 512, 512, 32
    $region25: #{tpu_custom_call.1} parent=1 // pred_fallthru
      _
    // Predicated region
    $region26: #{tpu_custom_call.1} parent=1 // pred_check
      _
    $region27: #{tpu_custom_call.1} parent=1 // pred_check_branch
      %45 = sbr.rel (0) target = $region29
    $region28: #{tpu_custom_call.1} parent=1 // pred_region
      %s47 = ssub.s32 6144, 6144
      %48 = vsyncadd [#allocation7], %s47
      %s49 = sshll.u32 [#allocation6], 4
      %s50 = int_to_ptr.vmem [resolvable:$true] %s49
      %55 = dma.hbm_to_vmem [thread:$0]  %s6, 6144, %s50, [#allocation7], 512, 512, 32
    $region29: #{tpu_custom_call.1} parent=1 // pred_fallthru
      _
    // Predicated region
    $region30: #{tpu_custom_call.1} parent=1 // pred_check
      _
    $region31: #{tpu_custom_call.1} parent=1 // pred_check_branch
      %57 = sbr.rel (0) target = $region33
    $region32: #{tpu_custom_call.1} parent=1 // pred_region
      %s59 = ssub.s32 6144, 6144
      %60 = vsyncadd [#allocation7], %s59
      %s61 = sshll.u32 [#allocation8], 4
      %s62 = int_to_ptr.vmem [resolvable:$true] %s61
      %67 = dma.hbm_to_vmem [thread:$0]  %s7, 6144, %s62, [#allocation7], 512, 512, 32
    $region33: #{tpu_custom_call.1} parent=1 // pred_fallthru
      _
    // Predicated region
    $region34: #{tpu_custom_call.1} parent=1 // pred_check
      _
    $region35: #{tpu_custom_call.1} parent=1 // pred_check_branch
      %69 = sbr.rel (0) target = $region37
    $region36: #{tpu_custom_call.1} parent=1 // pred_region
      _
    $region37: #{tpu_custom_call.1} parent=1 // pred_fallthru
      _
    // Predicated region
    $region38: #{tpu_custom_call.1} parent=1 // pred_check
      _
    $region39: #{tpu_custom_call.1} parent=1 // pred_check_branch
      %71 = sbr.rel (0) target = $region41
    $region40: #{tpu_custom_call.1} parent=1 // pred_region
      %s73 = ssub.s32 8192, 8192
      %74 = vsyncadd [#allocation10], %s73
      %s75 = sshll.u32 [#allocation9], 4
      %s76 = int_to_ptr.vmem [resolvable:$true] %s75
      %81 = dma.hbm_to_vmem [thread:$0]  %s9, 8192, %s76, [#allocation10], 128, 128, 8
    $region41: #{tpu_custom_call.1} parent=1 // pred_fallthru
      _
    // Predicated region
    $region42: #{tpu_custom_call.1} parent=1 // pred_check
      _
    $region43: #{tpu_custom_call.1} parent=1 // pred_check_branch
      %83 = sbr.rel (0) target = $region45
    $region44: #{tpu_custom_call.1} parent=1 // pred_region
      _
    $region45: #{tpu_custom_call.1} parent=1 // pred_fallthru
      _
    // Predicated region
    $region46: #{tpu_custom_call.1} parent=1 // pred_check
      _
    $region47: #{tpu_custom_call.1} parent=1 // pred_check_branch
      %85 = sbr.rel (0) target = $region49
    $region48: #{tpu_custom_call.1} parent=1 // pred_region
      %86 = dma.done [#allocation4], 6144
    $region49: #{tpu_custom_call.1} parent=1 // pred_fallthru
      _
    // Predicated region
    $region50: #{tpu_custom_call.1} parent=1 // pred_check
      _
    $region51: #{tpu_custom_call.1} parent=1 // pred_check_branch
      %88 = sbr.rel (0) target = $region53
    $region52: #{tpu_custom_call.1} parent=1 // pred_region
      %89 = dma.done [#allocation7], 6144
    $region53: #{tpu_custom_call.1} parent=1 // pred_fallthru
      _
    // Predicated region
    $region54: #{tpu_custom_call.1} parent=1 // pred_check
      _
    $region55: #{tpu_custom_call.1} parent=1 // pred_check_branch
      %91 = sbr.rel (0) target = $region57
    $region56: #{tpu_custom_call.1} parent=1 // pred_region
      %92 = dma.done [#allocation7], 6144
    $region57: #{tpu_custom_call.1} parent=1 // pred_fallthru
      _
    // Predicated region
    $region58: #{tpu_custom_call.1} parent=1 // pred_check
      _
    $region59: #{tpu_custom_call.1} parent=1 // pred_check_branch
      %94 = sbr.rel (0) target = $region61
    $region60: #{tpu_custom_call.1} parent=1 // pred_region
      %95 = dma.done [#allocation10], 8192
    $region61: #{tpu_custom_call.1} parent=1 // pred_fallthru
      _
    %v96 = vld [vmem:[%s0] sm:$0xff]
    %v97 = vld [vmem:[%s0 + $0x8] sm:$0xff]
    %v98 = vld [vmem:[%s0 + $0x10] sm:$0xff]
    %v99 = vld [vmem:[%s0 + $0x18] sm:$0xff]
    %v100 = vld [vmem:[%s3] sm:$0x1]
    %v101 = vld [vmem:[#allocation2] sm:$0x1]
    %103 = vset.pattern.permute.xlu0 0
    %104 = vperm.xlu0 %103, %v101
    %v105 = vpop.permute.xlu0 %104
    %v107 = vlaneseq
    %v108 = vshrl.u32 %v107, 7
    %v109 = vsub.s32 0, %v108
    %v110 = vrot.slane %v105, %v109
    %vm111 = vcmask 785408
    %v113 = vsel %vm111, %v100, 0
    %v116 = vsel %vm111, %v96, 0
    %v119 = vsel %vm111, %v97, 0
    %121 = vmatprep.subr.mxu0 0.0
    %122 = vmatpush1.xpose.msra.mxu0 %v116
    %123 = vmatprep.subr.mxu0 0.0
    %124 = vmatpush1.xpose.msra.mxu0 %v119
    %125 = vmatprep.subr.mxu0 0.0
    %126 = vmatpush1.xpose.msra.mxu0 0.0
    %127 = vmatprep.subr.mxu0 0.0
    %128 = vmatpush1.xpose.msra.mxu0 0.0
    %129 = vmatprep.subr.mxu0 0.0
    %130 = vmatpush1.xpose.msra.mxu0 0.0
    %131 = vmatprep.subr.mxu0 0.0
    %132 = vmatpush1.xpose.msra.mxu0 0.0
    %133 = vmatprep.subr.mxu0 0.0
    %134 = vmatpush1.xpose.msra.mxu0 0.0
    %135 = vmatprep.subr.mxu0 0.0
    %136 = vmatpush1.xpose.msra.mxu0 0.0
    %137 = vmatprep.subr.mxu0 0.0
    %138 = vmatpush1.xpose.msra.mxu0 0.0
    %139 = vmatprep.subr.mxu0 0.0
    %140 = vmatpush1.xpose.msra.mxu0 0.0
    %141 = vmatprep.subr.mxu0 0.0
    %142 = vmatpush1.xpose.msra.mxu0 0.0
    %143 = vmatprep.subr.mxu0 0.0
    %144 = vmatpush1.xpose.msra.mxu0 0.0
    %145 = vmatprep.subr.mxu0 0.0
    %146 = vmatpush1.xpose.msra.mxu0 0.0
    %147 = vmatprep.subr.mxu0 0.0
    %148 = vmatpush1.xpose.msra.mxu0 0.0
    %149 = vmatprep.subr.mxu0 0.0
    %150 = vmatpush1.xpose.msra.mxu0 0.0
    %151 = vmatprep.subr.mxu0 0.0
    %152 = vmatpush1.xpose.msra.mxu0 0.0
    %153 = vmatprep.subr.mxu0 0.0
    %154 = vmatpush1.xpose.msra.mxu0 0.0
    %155 = vmatprep.subr.mxu0 0.0
    %156 = vmatpush1.xpose.msra.mxu0 0.0
    %157 = vmatprep.subr.mxu0 0.0
    %158 = vmatpush1.xpose.msra.mxu0 0.0
    %159 = vmatprep.subr.mxu0 0.0
    %160 = vmatpush1.xpose.msra.mxu0 0.0
    %161 = vmatprep.subr.mxu0 0.0
    %162 = vmatpush1.xpose.msra.mxu0 0.0
    %163 = vmatprep.subr.mxu0 0.0
    %164 = vmatpush1.xpose.msra.mxu0 0.0
    %165 = vmatprep.subr.mxu0 0.0
    %166 = vmatpush1.xpose.msra.mxu0 0.0
    %167 = vmatprep.subr.mxu0 0.0
    %168 = vmatpush1.xpose.msra.mxu0 0.0
    %169 = vmatprep.subr.mxu0 0.0
    %170 = vmatpush1.xpose.msra.mxu0 0.0
    %171 = vmatprep.subr.mxu0 0.0
    %172 = vmatpush1.xpose.msra.mxu0 0.0
    %173 = vmatprep.subr.mxu0 0.0
    %174 = vmatpush1.xpose.msra.mxu0 0.0
    %175 = vmatprep.subr.mxu0 0.0
    %176 = vmatpush1.xpose.msra.mxu0 0.0
    %177 = vmatprep.subr.mxu0 0.0
    %178 = vmatpush1.xpose.msra.mxu0 0.0
    %179 = vmatprep.subr.mxu0 0.0
    %180 = vmatpush1.xpose.msra.mxu0 0.0
    %181 = vmatprep.subr.mxu0 0.0
    %182 = vmatpush1.xpose.msra.mxu0 0.0
    %183 = vmatprep.subr.mxu0 0.0
    %184 = vmatpush1.xpose.msra.mxu0 0.0
    %185 = vmatprep.mubr.f32.mxu0 0.0
    %186 = vmatmul.mubr.f32.gmra.mrb[0].mxu0 %v113
    %v187 = vpop.f32.mrb[0].mxu0
    %v188 = vadd.f32 %v110, %v187
    %v189 = vpop.f32.mrb[0].mxu0
    %190 = vdwg.mxu0
    %v192 = vsel %vm111, %v98, 0
    %v195 = vsel %vm111, %v99, 0
    %197 = vmatprep.subr.mxu0 0.0
    %198 = vmatpush1.xpose.msra.mxu0 %v192
    %199 = vmatprep.subr.mxu0 0.0
    %200 = vmatpush1.xpose.msra.mxu0 %v195
    %201 = vmatprep.subr.mxu0 0.0
    %202 = vmatpush1.xpose.msra.mxu0 0.0
    %203 = vmatprep.subr.mxu0 0.0
    %204 = vmatpush1.xpose.msra.mxu0 0.0
    %205 = vmatprep.subr.mxu0 0.0
    %206 = vmatpush1.xpose.msra.mxu0 0.0
    %207 = vmatprep.subr.mxu0 0.0
    %208 = vmatpush1.xpose.msra.mxu0 0.0
    %209 = vmatprep.subr.mxu0 0.0
    %210 = vmatpush1.xpose.msra.mxu0 0.0
    %211 = vmatprep.subr.mxu0 0.0
    %212 = vmatpush1.xpose.msra.mxu0 0.0
    %213 = vmatprep.subr.mxu0 0.0
    %214 = vmatpush1.xpose.msra.mxu0 0.0
    %215 = vmatprep.subr.mxu0 0.0
    %216 = vmatpush1.xpose.msra.mxu0 0.0
    %217 = vmatprep.subr.mxu0 0.0
    %218 = vmatpush1.xpose.msra.mxu0 0.0
    %219 = vmatprep.subr.mxu0 0.0
    %220 = vmatpush1.xpose.msra.mxu0 0.0
    %221 = vmatprep.subr.mxu0 0.0
    %222 = vmatpush1.xpose.msra.mxu0 0.0
    %223 = vmatprep.subr.mxu0 0.0
    %224 = vmatpush1.xpose.msra.mxu0 0.0
    %225 = vmatprep.subr.mxu0 0.0
    %226 = vmatpush1.xpose.msra.mxu0 0.0
    %227 = vmatprep.subr.mxu0 0.0
    %228 = vmatpush1.xpose.msra.mxu0 0.0
    %229 = vmatprep.subr.mxu0 0.0
    %230 = vmatpush1.xpose.msra.mxu0 0.0
    %231 = vmatprep.subr.mxu0 0.0
    %232 = vmatpush1.xpose.msra.mxu0 0.0
    %233 = vmatprep.subr.mxu0 0.0
    %234 = vmatpush1.xpose.msra.mxu0 0.0
    %235 = vmatprep.subr.mxu0 0.0
    %236 = vmatpush1.xpose.msra.mxu0 0.0
    %237 = vmatprep.subr.mxu0 0.0
    %238 = vmatpush1.xpose.msra.mxu0 0.0
    %239 = vmatprep.subr.mxu0 0.0
    %240 = vmatpush1.xpose.msra.mxu0 0.0
    %241 = vmatprep.subr.mxu0 0.0
    %242 = vmatpush1.xpose.msra.mxu0 0.0
    %243 = vmatprep.subr.mxu0 0.0
    %244 = vmatpush1.xpose.msra.mxu0 0.0
    %245 = vmatprep.subr.mxu0 0.0
    %246 = vmatpush1.xpose.msra.mxu0 0.0
    %247 = vmatprep.subr.mxu0 0.0
    %248 = vmatpush1.xpose.msra.mxu0 0.0
    %249 = vmatprep.subr.mxu0 0.0
    %250 = vmatpush1.xpose.msra.mxu0 0.0
    %251 = vmatprep.subr.mxu0 0.0
    %252 = vmatpush1.xpose.msra.mxu0 0.0
    %253 = vmatprep.subr.mxu0 0.0
    %254 = vmatpush1.xpose.msra.mxu0 0.0
    %255 = vmatprep.subr.mxu0 0.0
    %256 = vmatpush1.xpose.msra.mxu0 0.0
    %257 = vmatprep.subr.mxu0 0.0
    %258 = vmatpush1.xpose.msra.mxu0 0.0
    %259 = vmatprep.subr.mxu0 0.0
    %260 = vmatpush1.xpose.msra.mxu0 0.0
    %261 = vmatprep.mubr.f32.mxu0 0.0
    %262 = vmatmul.mubr.f32.gmra.mrb[0].mxu0 %v113
    %v263 = vpop.f32.mrb[0].mxu0
    %v264 = vadd.f32 %v110, %v263
    %v265 = vpop.f32.mrb[0].mxu0
    %266 = vdwg.mxu0
    %v267 = vlaneseq
    %v268 = vand.u32 %v267, 127
    %v269 = vld [vmem:[%s1] sm:$0xff]
    %v270 = vld [vmem:[%s1 + $0x8] sm:$0xff]
    %271 = vset.pattern.permute.xlu0 0
    %272 = vperm.xlu0 %271, %v269
    %v273 = vpop.permute.xlu0 %272
    %274 = vset.pattern.permute.xlu0 0
    %275 = vperm.xlu0 %274, %v270
    %v276 = vpop.permute.xlu0 %275
    %vm277 = vcmp.ge.s32.totalorder %v268, %v273
    %vm278 = vcmp.ge.s32.totalorder %v268, %v276
    %v279 = vld [vmem:[%s2] sm:$0xff]
    %v280 = vld [vmem:[%s2 + $0x8] sm:$0xff]
    %281 = vset.pattern.permute.xlu0 0
    %282 = vperm.xlu0 %281, %v279
    %v283 = vpop.permute.xlu0 %282
    %284 = vset.pattern.permute.xlu0 0
    %285 = vperm.xlu0 %284, %v280
    %v286 = vpop.permute.xlu0 %285
    %vm287 = vcmp.le.s32.totalorder %v268, %v283
    %vm288 = vcmp.le.s32.totalorder %v268, %v286
    %vm289 = vmand %vm277, %vm287
    %vm290 = vmand %vm278, %vm288
    %v291 = vlaneseq
    %v292 = vshrl.u32 %v291, 7
    %v293 = vsub.s32 0, %v292
    %v294 = vrot.slane %v188, %v293
    %v295 = vlaneseq
    %v296 = vshrl.u32 %v295, 7
    %v297 = vsub.s32 0, %v296
    %v298 = vrot.slane %v264, %v297
    %v299 = vsel %vm289, %v294, -inf
    %v300 = vsel %vm290, %v298, -inf
    %vm301 = vcmask 130048
    %v302 = vsel %vm301, %v299, -inf
    %303 = vmax.xlane.f32.xlu0 %v302
    %v304 = vpop.xlane.xlu0 %303
    %v305 = vsel %vm301, %v300, -inf
    %306 = vmax.xlane.f32.xlu0 %v305
    %v307 = vpop.xlane.xlu0 %306
    %v308 = vsub.f32 %v299, %v304
    %v309 = vsub.f32 %v300, %v307
    %v310 = vmul.f32 %v308, 1.442695
    %v311 = vpow.pop %v310
    %v312 = vmul.f32 %v309, 1.442695
    %v313 = vpow.pop %v312
    %v314 = vsel %vm289, %v311, 0.0
    %v315 = vsel %vm290, %v313, 0.0
    %v316 = vsel %vm301, %v314, 0.0
    %317 = vadd.xlane.f32.xlu0 %v316
    %v318 = vpop.xlane.xlu0 %317
    %v319 = vsel %vm301, %v315, 0.0
    %320 = vadd.xlane.f32.xlu0 %v319
    %v321 = vpop.xlane.xlu0 %320
    %v322 = vrcp.pop %v318
    %v323 = vmul.f32 %v314, %v322
    %v324 = vrcp.pop %v321
    %v325 = vmul.f32 %v315, %v324
    %v327 = vsel %vm301, %v323, 0
    %329 = vmatprep.subr.mxu0 0.0
    %330 = vmatpush1.msra.mxu0 %v96
    %331 = vmatprep.subr.mxu0 0.0
    %332 = vmatpush1.msra.mxu0 %v97
    %333 = vmatprep.subr.mxu0 0.0
    %334 = vmatpush1.msra.mxu0 0.0
    %335 = vmatprep.subr.mxu0 0.0
    %336 = vmatpush1.msra.mxu0 0.0
    %337 = vmatprep.subr.mxu0 0.0
    %338 = vmatpush1.msra.mxu0 0.0
    %339 = vmatprep.subr.mxu0 0.0
    %340 = vmatpush1.msra.mxu0 0.0
    %341 = vmatprep.subr.mxu0 0.0
    %342 = vmatpush1.msra.mxu0 0.0
    %343 = vmatprep.subr.mxu0 0.0
    %344 = vmatpush1.msra.mxu0 0.0
    %345 = vmatprep.subr.mxu0 0.0
    %346 = vmatpush1.msra.mxu0 0.0
    %347 = vmatprep.subr.mxu0 0.0
    %348 = vmatpush1.msra.mxu0 0.0
    %349 = vmatprep.subr.mxu0 0.0
    %350 = vmatpush1.msra.mxu0 0.0
    %351 = vmatprep.subr.mxu0 0.0
    %352 = vmatpush1.msra.mxu0 0.0
    %353 = vmatprep.subr.mxu0 0.0
    %354 = vmatpush1.msra.mxu0 0.0
    %355 = vmatprep.subr.mxu0 0.0
    %356 = vmatpush1.msra.mxu0 0.0
    %357 = vmatprep.subr.mxu0 0.0
    %358 = vmatpush1.msra.mxu0 0.0
    %359 = vmatprep.subr.mxu0 0.0
    %360 = vmatpush1.msra.mxu0 0.0
    %361 = vmatprep.subr.mxu0 0.0
    %362 = vmatpush1.msra.mxu0 0.0
    %363 = vmatprep.subr.mxu0 0.0
    %364 = vmatpush1.msra.mxu0 0.0
    %365 = vmatprep.subr.mxu0 0.0
    %366 = vmatpush1.msra.mxu0 0.0
    %367 = vmatprep.subr.mxu0 0.0
    %368 = vmatpush1.msra.mxu0 0.0
    %369 = vmatprep.subr.mxu0 0.0
    %370 = vmatpush1.msra.mxu0 0.0
    %371 = vmatprep.subr.mxu0 0.0
    %372 = vmatpush1.msra.mxu0 0.0
    %373 = vmatprep.subr.mxu0 0.0
    %374 = vmatpush1.msra.mxu0 0.0
    %375 = vmatprep.subr.mxu0 0.0
    %376 = vmatpush1.msra.mxu0 0.0
    %377 = vmatprep.subr.mxu0 0.0
    %378 = vmatpush1.msra.mxu0 0.0
    %379 = vmatprep.subr.mxu0 0.0
    %380 = vmatpush1.msra.mxu0 0.0
    %381 = vmatprep.subr.mxu0 0.0
    %382 = vmatpush1.msra.mxu0 0.0
    %383 = vmatprep.subr.mxu0 0.0
    %384 = vmatpush1.msra.mxu0 0.0
    %385 = vmatprep.subr.mxu0 0.0
    %386 = vmatpush1.msra.mxu0 0.0
    %387 = vmatprep.subr.mxu0 0.0
    %388 = vmatpush1.msra.mxu0 0.0
    %389 = vmatprep.subr.mxu0 0.0
    %390 = vmatpush1.msra.mxu0 0.0
    %391 = vmatprep.subr.mxu0 0.0
    %392 = vmatpush1.msra.mxu0 0.0
    %393 = vmatprep.mubr.f32.mxu0 0.0
    %394 = vmatmul.mubr.f32.gmra.mrb[0].mxu0 %v327
    %v395 = vpop.f32.mrb[0].mxu0
    %v396 = vadd.f32 0.0, %v395
    %v397 = vpop.f32.mrb[0].mxu0
    %398 = vdwg.mxu0
    %v400 = vsel %vm301, %v325, 0
    %402 = vmatprep.subr.mxu0 0.0
    %403 = vmatpush1.msra.mxu0 %v98
    %404 = vmatprep.subr.mxu0 0.0
    %405 = vmatpush1.msra.mxu0 %v99
    %406 = vmatprep.subr.mxu0 0.0
    %407 = vmatpush1.msra.mxu0 0.0
    %408 = vmatprep.subr.mxu0 0.0
    %409 = vmatpush1.msra.mxu0 0.0
    %410 = vmatprep.subr.mxu0 0.0
    %411 = vmatpush1.msra.mxu0 0.0
    %412 = vmatprep.subr.mxu0 0.0
    %413 = vmatpush1.msra.mxu0 0.0
    %414 = vmatprep.subr.mxu0 0.0
    %415 = vmatpush1.msra.mxu0 0.0
    %416 = vmatprep.subr.mxu0 0.0
    %417 = vmatpush1.msra.mxu0 0.0
    %418 = vmatprep.subr.mxu0 0.0
    %419 = vmatpush1.msra.mxu0 0.0
    %420 = vmatprep.subr.mxu0 0.0
    %421 = vmatpush1.msra.mxu0 0.0
    %422 = vmatprep.subr.mxu0 0.0
    %423 = vmatpush1.msra.mxu0 0.0
    %424 = vmatprep.subr.mxu0 0.0
    %425 = vmatpush1.msra.mxu0 0.0
    %426 = vmatprep.subr.mxu0 0.0
    %427 = vmatpush1.msra.mxu0 0.0
    %428 = vmatprep.subr.mxu0 0.0
    %429 = vmatpush1.msra.mxu0 0.0
    %430 = vmatprep.subr.mxu0 0.0
    %431 = vmatpush1.msra.mxu0 0.0
    %432 = vmatprep.subr.mxu0 0.0
    %433 = vmatpush1.msra.mxu0 0.0
    %434 = vmatprep.subr.mxu0 0.0
    %435 = vmatpush1.msra.mxu0 0.0
    %436 = vmatprep.subr.mxu0 0.0
    %437 = vmatpush1.msra.mxu0 0.0
    %438 = vmatprep.subr.mxu0 0.0
    %439 = vmatpush1.msra.mxu0 0.0
    %440 = vmatprep.subr.mxu0 0.0
    %441 = vmatpush1.msra.mxu0 0.0
    %442 = vmatprep.subr.mxu0 0.0
    %443 = vmatpush1.msra.mxu0 0.0
    %444 = vmatprep.subr.mxu0 0.0
    %445 = vmatpush1.msra.mxu0 0.0
    %446 = vmatprep.subr.mxu0 0.0
    %447 = vmatpush1.msra.mxu0 0.0
    %448 = vmatprep.subr.mxu0 0.0
    %449 = vmatpush1.msra.mxu0 0.0
    %450 = vmatprep.subr.mxu0 0.0
    %451 = vmatpush1.msra.mxu0 0.0
    %452 = vmatprep.subr.mxu0 0.0
    %453 = vmatpush1.msra.mxu0 0.0
    %454 = vmatprep.subr.mxu0 0.0
    %455 = vmatpush1.msra.mxu0 0.0
    %456 = vmatprep.subr.mxu0 0.0
    %457 = vmatpush1.msra.mxu0 0.0
    %458 = vmatprep.subr.mxu0 0.0
    %459 = vmatpush1.msra.mxu0 0.0
    %460 = vmatprep.subr.mxu0 0.0
    %461 = vmatpush1.msra.mxu0 0.0
    %462 = vmatprep.subr.mxu0 0.0
    %463 = vmatpush1.msra.mxu0 0.0
    %464 = vmatprep.subr.mxu0 0.0
    %465 = vmatpush1.msra.mxu0 0.0
    %466 = vmatprep.mubr.f32.mxu0 0.0
    %467 = vmatmul.mubr.f32.gmra.mrb[0].mxu0 %v400
    %v468 = vpop.f32.mrb[0].mxu0
    %v469 = vadd.f32 0.0, %v468
    %v470 = vpop.f32.mrb[0].mxu0
    %471 = vdwg.mxu0
    %v472 = vld [vmem:[#allocation3] sm:$0xff]
    %v473 = vld [vmem:[#allocation3 + $0x8] sm:$0xff]
    %v474 = vld [vmem:[#allocation3 + $0x10] sm:$0xff]
    %v475 = vld [vmem:[#allocation3 + $0x18] sm:$0xff]
    %v476 = vld [vmem:[#allocation3 + $0x20] sm:$0xff]
    %v477 = vld [vmem:[#allocation3 + $0x28] sm:$0xff]
    %v478 = vld [vmem:[#allocation3 + $0x30] sm:$0xff]
    %v479 = vld [vmem:[#allocation3 + $0x38] sm:$0xff]
    %v480 = vld [vmem:[#allocation3 + $0x40] sm:$0xff]
    %v481 = vld [vmem:[#allocation3 + $0x48] sm:$0xff]
    %v482 = vld [vmem:[#allocation3 + $0x50] sm:$0xff]
    %v483 = vld [vmem:[#allocation3 + $0x58] sm:$0xff]
    %v484 = vld [vmem:[#allocation3 + $0x60] sm:$0xff]
    %v485 = vld [vmem:[#allocation3 + $0x68] sm:$0xff]
    %v486 = vld [vmem:[#allocation3 + $0x70] sm:$0xff]
    %v487 = vld [vmem:[#allocation3 + $0x78] sm:$0xff]
    %v488 = vld [vmem:[#allocation3 + $0x80] sm:$0xff]
    %v489 = vld [vmem:[#allocation3 + $0x88] sm:$0xff]
    %v490 = vld [vmem:[#allocation3 + $0x90] sm:$0xff]
    %v491 = vld [vmem:[#allocation3 + $0x98] sm:$0xff]
    %v492 = vld [vmem:[#allocation3 + $0xa0] sm:$0xff]
    %v493 = vld [vmem:[#allocation3 + $0xa8] sm:$0xff]
    %v494 = vld [vmem:[#allocation3 + $0xb0] sm:$0xff]
    %v495 = vld [vmem:[#allocation3 + $0xb8] sm:$0xff]
    %v496 = vld [vmem:[#allocation3 + $0xc0] sm:$0xff]
    %v497 = vld [vmem:[#allocation3 + $0xc8] sm:$0xff]
    %v498 = vld [vmem:[#allocation3 + $0xd0] sm:$0xff]
    %v499 = vld [vmem:[#allocation3 + $0xd8] sm:$0xff]
    %v500 = vld [vmem:[#allocation3 + $0xe0] sm:$0xff]
    %v501 = vld [vmem:[#allocation3 + $0xe8] sm:$0xff]
    %v502 = vld [vmem:[#allocation3 + $0xf0] sm:$0xff]
    %v503 = vld [vmem:[#allocation3 + $0xf8] sm:$0xff]
    %v504 = vld [vmem:[#allocation3 + $0x100] sm:$0xff]
    %v505 = vld [vmem:[#allocation3 + $0x108] sm:$0xff]
    %v506 = vld [vmem:[#allocation3 + $0x110] sm:$0xff]
    %v507 = vld [vmem:[#allocation3 + $0x118] sm:$0xff]
    %v508 = vld [vmem:[#allocation3 + $0x120] sm:$0xff]
    %v509 = vld [vmem:[#allocation3 + $0x128] sm:$0xff]
    %v510 = vld [vmem:[#allocation3 + $0x130] sm:$0xff]
    %v511 = vld [vmem:[#allocation3 + $0x138] sm:$0xff]
    %v512 = vld [vmem:[#allocation3 + $0x140] sm:$0xff]
    %v513 = vld [vmem:[#allocation3 + $0x148] sm:$0xff]
    %v514 = vld [vmem:[#allocation3 + $0x150] sm:$0xff]
    %v515 = vld [vmem:[#allocation3 + $0x158] sm:$0xff]
    %v516 = vld [vmem:[#allocation3 + $0x160] sm:$0xff]
    %v517 = vld [vmem:[#allocation3 + $0x168] sm:$0xff]
    %v518 = vld [vmem:[#allocation3 + $0x170] sm:$0xff]
    %v519 = vld [vmem:[#allocation3 + $0x178] sm:$0xff]
    %v520 = vld [vmem:[#allocation6] sm:$0xff]
    %v521 = vld [vmem:[#allocation6 + $0x8] sm:$0xff]
    %v522 = vld [vmem:[#allocation6 + $0x10] sm:$0xff]
    %v523 = vld [vmem:[#allocation6 + $0x18] sm:$0xff]
    %v524 = vld [vmem:[#allocation6 + $0x20] sm:$0xff]
    %v525 = vld [vmem:[#allocation6 + $0x28] sm:$0xff]
    %v526 = vld [vmem:[#allocation6 + $0x30] sm:$0xff]
    %v527 = vld [vmem:[#allocation6 + $0x38] sm:$0xff]
    %v528 = vld [vmem:[#allocation6 + $0x40] sm:$0xff]
    %v529 = vld [vmem:[#allocation6 + $0x48] sm:$0xff]
    %v530 = vld [vmem:[#allocation6 + $0x50] sm:$0xff]
    %v531 = vld [vmem:[#allocation6 + $0x58] sm:$0xff]
    %v532 = vld [vmem:[#allocation6 + $0x60] sm:$0xff]
    %v533 = vld [vmem:[#allocation6 + $0x68] sm:$0xff]
    %v534 = vld [vmem:[#allocation6 + $0x70] sm:$0xff]
    %v535 = vld [vmem:[#allocation6 + $0x78] sm:$0xff]
    %v536 = vld [vmem:[#allocation6 + $0x80] sm:$0xff]
    %v537 = vld [vmem:[#allocation6 + $0x88] sm:$0xff]
    %v538 = vld [vmem:[#allocation6 + $0x90] sm:$0xff]
    %v539 = vld [vmem:[#allocation6 + $0x98] sm:$0xff]
    %v540 = vld [vmem:[#allocation6 + $0xa0] sm:$0xff]
    %v541 = vld [vmem:[#allocation6 + $0xa8] sm:$0xff]
    %v542 = vld [vmem:[#allocation6 + $0xb0] sm:$0xff]
    %v543 = vld [vmem:[#allocation6 + $0xb8] sm:$0xff]
    %v544 = vld [vmem:[#allocation6 + $0xc0] sm:$0xff]
    %v545 = vld [vmem:[#allocation6 + $0xc8] sm:$0xff]
    %v546 = vld [vmem:[#allocation6 + $0xd0] sm:$0xff]
    %v547 = vld [vmem:[#allocation6 + $0xd8] sm:$0xff]
    %v548 = vld [vmem:[#allocation6 + $0xe0] sm:$0xff]
    %v549 = vld [vmem:[#allocation6 + $0xe8] sm:$0xff]
    %v550 = vld [vmem:[#allocation6 + $0xf0] sm:$0xff]
    %v551 = vld [vmem:[#allocation6 + $0xf8] sm:$0xff]
    %v552 = vld [vmem:[#allocation6 + $0x100] sm:$0xff]
    %v553 = vld [vmem:[#allocation6 + $0x108] sm:$0xff]
    %v554 = vld [vmem:[#allocation6 + $0x110] sm:$0xff]
    %v555 = vld [vmem:[#allocation6 + $0x118] sm:$0xff]
    %v556 = vld [vmem:[#allocation6 + $0x120] sm:$0xff]
    %v557 = vld [vmem:[#allocation6 + $0x128] sm:$0xff]
    %v558 = vld [vmem:[#allocation6 + $0x130] sm:$0xff]
    %v559 = vld [vmem:[#allocation6 + $0x138] sm:$0xff]
    %v560 = vld [vmem:[#allocation6 + $0x140] sm:$0xff]
    %v561 = vld [vmem:[#allocation6 + $0x148] sm:$0xff]
    %v562 = vld [vmem:[#allocation6 + $0x150] sm:$0xff]
    %v563 = vld [vmem:[#allocation6 + $0x158] sm:$0xff]
    %v564 = vld [vmem:[#allocation6 + $0x160] sm:$0xff]
    %v565 = vld [vmem:[#allocation6 + $0x168] sm:$0xff]
    %v566 = vld [vmem:[#allocation6 + $0x170] sm:$0xff]
    %v567 = vld [vmem:[#allocation6 + $0x178] sm:$0xff]
    %v570 = vrot.slane %v396, 1
    %vm571 = vcmask 1041409
    %v572 = vsel %vm571, %v469, %v570
    %v573 = vsel %vm111, %v572, 0
    %575 = vmatprep.subr.mxu0 %v521
    %576 = vmatpush1.msra.mxu0 %v520
    %577 = vmatprep.subr.mxu0 %v525
    %578 = vmatpush1.msra.mxu0 %v524
    %579 = vmatprep.subr.mxu0 %v529
    %580 = vmatpush1.msra.mxu0 %v528
    %581 = vmatprep.subr.mxu0 %v533
    %582 = vmatpush1.msra.mxu0 %v532
    %583 = vmatprep.subr.mxu0 %v537
    %584 = vmatpush1.msra.mxu0 %v536
    %585 = vmatprep.subr.mxu0 %v541
    %586 = vmatpush1.msra.mxu0 %v540
    %587 = vmatprep.subr.mxu0 %v545
    %588 = vmatpush1.msra.mxu0 %v544
    %589 = vmatprep.subr.mxu0 %v549
    %590 = vmatpush1.msra.mxu0 %v548
    %591 = vmatprep.subr.mxu0 %v553
    %592 = vmatpush1.msra.mxu0 %v552
    %593 = vmatprep.subr.mxu0 %v557
    %594 = vmatpush1.msra.mxu0 %v556
    %595 = vmatprep.subr.mxu0 %v561
    %596 = vmatpush1.msra.mxu0 %v560
    %597 = vmatprep.subr.mxu0 %v565
    %598 = vmatpush1.msra.mxu0 %v564
    %599 = vmatprep.subr.mxu0 0.0
    %600 = vmatpush1.msra.mxu0 0.0
    %601 = vmatprep.subr.mxu0 0.0
    %602 = vmatpush1.msra.mxu0 0.0
    %603 = vmatprep.subr.mxu0 0.0
    %604 = vmatpush1.msra.mxu0 0.0
    %605 = vmatprep.subr.mxu0 0.0
    %606 = vmatpush1.msra.mxu0 0.0
    %607 = vmatprep.subr.mxu0 0.0
    %608 = vmatpush1.msra.mxu0 0.0
    %609 = vmatprep.subr.mxu0 0.0
    %610 = vmatpush1.msra.mxu0 0.0
    %611 = vmatprep.subr.mxu0 0.0
    %612 = vmatpush1.msra.mxu0 0.0
    %613 = vmatprep.subr.mxu0 0.0
    %614 = vmatpush1.msra.mxu0 0.0
    %615 = vmatprep.subr.mxu0 0.0
    %616 = vmatpush1.msra.mxu0 0.0
    %617 = vmatprep.subr.mxu0 0.0
    %618 = vmatpush1.msra.mxu0 0.0
    %619 = vmatprep.subr.mxu0 0.0
    %620 = vmatpush1.msra.mxu0 0.0
    %621 = vmatprep.subr.mxu0 0.0
    %622 = vmatpush1.msra.mxu0 0.0
    %623 = vmatprep.subr.mxu0 0.0
    %624 = vmatpush1.msra.mxu0 0.0
    %625 = vmatprep.subr.mxu0 0.0
    %626 = vmatpush1.msra.mxu0 0.0
    %627 = vmatprep.subr.mxu0 0.0
    %628 = vmatpush1.msra.mxu0 0.0
    %629 = vmatprep.subr.mxu0 0.0
    %630 = vmatpush1.msra.mxu0 0.0
    %631 = vmatprep.subr.mxu0 0.0
    %632 = vmatpush1.msra.mxu0 0.0
    %633 = vmatprep.subr.mxu0 0.0
    %634 = vmatpush1.msra.mxu0 0.0
    %635 = vmatprep.subr.mxu0 0.0
    %636 = vmatpush1.msra.mxu0 0.0
    %637 = vmatprep.subr.mxu0 0.0
    %638 = vmatpush1.msra.mxu0 0.0
    %639 = vmatprep.mubr.f32.mxu0 0.0
    %640 = vmatmul.mubr.f32.gmra.mrb[0].mxu0 %v573
    %v641 = vpop.f32.mrb[0].mxu0
    %v642 = vadd.f32 0.0, %v641
    %v643 = vpop.f32.mrb[0].mxu0
    %v644 = vadd.f32 0.0, %v643
    %645 = vdwg.mxu0
    %646 = vmatprep.subr.mxu0 %v523
    %647 = vmatpush1.msra.mxu0 %v522
    %648 = vmatprep.subr.mxu0 %v527
    %649 = vmatpush1.msra.mxu0 %v526
    %650 = vmatprep.subr.mxu0 %v531
    %651 = vmatpush1.msra.mxu0 %v530
    %652 = vmatprep.subr.mxu0 %v535
    %653 = vmatpush1.msra.mxu0 %v534
    %654 = vmatprep.subr.mxu0 %v539
    %655 = vmatpush1.msra.mxu0 %v538
    %656 = vmatprep.subr.mxu0 %v543
    %657 = vmatpush1.msra.mxu0 %v542
    %658 = vmatprep.subr.mxu0 %v547
    %659 = vmatpush1.msra.mxu0 %v546
    %660 = vmatprep.subr.mxu0 %v551
    %661 = vmatpush1.msra.mxu0 %v550
    %662 = vmatprep.subr.mxu0 %v555
    %663 = vmatpush1.msra.mxu0 %v554
    %664 = vmatprep.subr.mxu0 %v559
    %665 = vmatpush1.msra.mxu0 %v558
    %666 = vmatprep.subr.mxu0 %v563
    %667 = vmatpush1.msra.mxu0 %v562
    %668 = vmatprep.subr.mxu0 %v567
    %669 = vmatpush1.msra.mxu0 %v566
    %670 = vmatprep.subr.mxu0 0.0
    %671 = vmatpush1.msra.mxu0 0.0
    %672 = vmatprep.subr.mxu0 0.0
    %673 = vmatpush1.msra.mxu0 0.0
    %674 = vmatprep.subr.mxu0 0.0
    %675 = vmatpush1.msra.mxu0 0.0
    %676 = vmatprep.subr.mxu0 0.0
    %677 = vmatpush1.msra.mxu0 0.0
    %678 = vmatprep.subr.mxu0 0.0
    %679 = vmatpush1.msra.mxu0 0.0
    %680 = vmatprep.subr.mxu0 0.0
    %681 = vmatpush1.msra.mxu0 0.0
    %682 = vmatprep.subr.mxu0 0.0
    %683 = vmatpush1.msra.mxu0 0.0
    %684 = vmatprep.subr.mxu0 0.0
    %685 = vmatpush1.msra.mxu0 0.0
    %686 = vmatprep.subr.mxu0 0.0
    %687 = vmatpush1.msra.mxu0 0.0
    %688 = vmatprep.subr.mxu0 0.0
    %689 = vmatpush1.msra.mxu0 0.0
    %690 = vmatprep.subr.mxu0 0.0
    %691 = vmatpush1.msra.mxu0 0.0
    %692 = vmatprep.subr.mxu0 0.0
    %693 = vmatpush1.msra.mxu0 0.0
    %694 = vmatprep.subr.mxu0 0.0
    %695 = vmatpush1.msra.mxu0 0.0
    %696 = vmatprep.subr.mxu0 0.0
    %697 = vmatpush1.msra.mxu0 0.0
    %698 = vmatprep.subr.mxu0 0.0
    %699 = vmatpush1.msra.mxu0 0.0
    %700 = vmatprep.subr.mxu0 0.0
    %701 = vmatpush1.msra.mxu0 0.0
    %702 = vmatprep.subr.mxu0 0.0
    %703 = vmatpush1.msra.mxu0 0.0
    %704 = vmatprep.subr.mxu0 0.0
    %705 = vmatpush1.msra.mxu0 0.0
    %706 = vmatprep.subr.mxu0 0.0
    %707 = vmatpush1.msra.mxu0 0.0
    %708 = vmatprep.subr.mxu0 0.0
    %709 = vmatpush1.msra.mxu0 0.0
    %710 = vmatprep.mubr.f32.mxu0 0.0
    %711 = vmatmul.mubr.f32.gmra.mrb[0].mxu0 %v573
    %v712 = vpop.f32.mrb[0].mxu0
    %v713 = vadd.f32 0.0, %v712
    %v714 = vpop.f32.mrb[0].mxu0
    %v715 = vadd.f32 0.0, %v714
    %716 = vdwg.mxu0
    %v717 = vrot.slane %v469, 7
    %v718 = vsel %vm571, %v717, %v396
    %v719 = vsel %vm111, %v718, 0
    %721 = vmatprep.subr.mxu0 %v473
    %722 = vmatpush1.msra.mxu0 %v472
    %723 = vmatprep.subr.mxu0 %v477
    %724 = vmatpush1.msra.mxu0 %v476
    %725 = vmatprep.subr.mxu0 %v481
    %726 = vmatpush1.msra.mxu0 %v480
    %727 = vmatprep.subr.mxu0 %v485
    %728 = vmatpush1.msra.mxu0 %v484
    %729 = vmatprep.subr.mxu0 %v489
    %730 = vmatpush1.msra.mxu0 %v488
    %731 = vmatprep.subr.mxu0 %v493
    %732 = vmatpush1.msra.mxu0 %v492
    %733 = vmatprep.subr.mxu0 %v497
    %734 = vmatpush1.msra.mxu0 %v496
    %735 = vmatprep.subr.mxu0 %v501
    %736 = vmatpush1.msra.mxu0 %v500
    %737 = vmatprep.subr.mxu0 %v505
    %738 = vmatpush1.msra.mxu0 %v504
    %739 = vmatprep.subr.mxu0 %v509
    %740 = vmatpush1.msra.mxu0 %v508
    %741 = vmatprep.subr.mxu0 %v513
    %742 = vmatpush1.msra.mxu0 %v512
    %743 = vmatprep.subr.mxu0 %v517
    %744 = vmatpush1.msra.mxu0 %v516
    %745 = vmatprep.subr.mxu0 0.0
    %746 = vmatpush1.msra.mxu0 0.0
    %747 = vmatprep.subr.mxu0 0.0
    %748 = vmatpush1.msra.mxu0 0.0
    %749 = vmatprep.subr.mxu0 0.0
    %750 = vmatpush1.msra.mxu0 0.0
    %751 = vmatprep.subr.mxu0 0.0
    %752 = vmatpush1.msra.mxu0 0.0
    %753 = vmatprep.subr.mxu0 0.0
    %754 = vmatpush1.msra.mxu0 0.0
    %755 = vmatprep.subr.mxu0 0.0
    %756 = vmatpush1.msra.mxu0 0.0
    %757 = vmatprep.subr.mxu0 0.0
    %758 = vmatpush1.msra.mxu0 0.0
    %759 = vmatprep.subr.mxu0 0.0
    %760 = vmatpush1.msra.mxu0 0.0
    %761 = vmatprep.subr.mxu0 0.0
    %762 = vmatpush1.msra.mxu0 0.0
    %763 = vmatprep.subr.mxu0 0.0
    %764 = vmatpush1.msra.mxu0 0.0
    %765 = vmatprep.subr.mxu0 0.0
    %766 = vmatpush1.msra.mxu0 0.0
    %767 = vmatprep.subr.mxu0 0.0
    %768 = vmatpush1.msra.mxu0 0.0
    %769 = vmatprep.subr.mxu0 0.0
    %770 = vmatpush1.msra.mxu0 0.0
    %771 = vmatprep.subr.mxu0 0.0
    %772 = vmatpush1.msra.mxu0 0.0
    %773 = vmatprep.subr.mxu0 0.0
    %774 = vmatpush1.msra.mxu0 0.0
    %775 = vmatprep.subr.mxu0 0.0
    %776 = vmatpush1.msra.mxu0 0.0
    %777 = vmatprep.subr.mxu0 0.0
    %778 = vmatpush1.msra.mxu0 0.0
    %779 = vmatprep.subr.mxu0 0.0
    %780 = vmatpush1.msra.mxu0 0.0
    %781 = vmatprep.subr.mxu0 0.0
    %782 = vmatpush1.msra.mxu0 0.0
    %783 = vmatprep.subr.mxu0 0.0
    %784 = vmatpush1.msra.mxu0 0.0
    %785 = vmatprep.mubr.f32.mxu0 0.0
    %786 = vmatmul.mubr.f32.gmra.mrb[0].mxu0 %v719
    %v787 = vpop.f32.mrb[0].mxu0
    %v788 = vadd.f32 %v642, %v787
    %v789 = vpop.f32.mrb[0].mxu0
    %v790 = vadd.f32 %v644, %v789
    %791 = vdwg.mxu0
    %792 = vmatprep.subr.mxu0 %v475
    %793 = vmatpush1.msra.mxu0 %v474
    %794 = vmatprep.subr.mxu0 %v479
    %795 = vmatpush1.msra.mxu0 %v478
    %796 = vmatprep.subr.mxu0 %v483
    %797 = vmatpush1.msra.mxu0 %v482
    %798 = vmatprep.subr.mxu0 %v487
    %799 = vmatpush1.msra.mxu0 %v486
    %800 = vmatprep.subr.mxu0 %v491
    %801 = vmatpush1.msra.mxu0 %v490
    %802 = vmatprep.subr.mxu0 %v495
    %803 = vmatpush1.msra.mxu0 %v494
    %804 = vmatprep.subr.mxu0 %v499
    %805 = vmatpush1.msra.mxu0 %v498
    %806 = vmatprep.subr.mxu0 %v503
    %807 = vmatpush1.msra.mxu0 %v502
    %808 = vmatprep.subr.mxu0 %v507
    %809 = vmatpush1.msra.mxu0 %v506
    %810 = vmatprep.subr.mxu0 %v511
    %811 = vmatpush1.msra.mxu0 %v510
    %812 = vmatprep.subr.mxu0 %v515
    %813 = vmatpush1.msra.mxu0 %v514
    %814 = vmatprep.subr.mxu0 %v519
    %815 = vmatpush1.msra.mxu0 %v518
    %816 = vmatprep.subr.mxu0 0.0
    %817 = vmatpush1.msra.mxu0 0.0
    %818 = vmatprep.subr.mxu0 0.0
    %819 = vmatpush1.msra.mxu0 0.0
    %820 = vmatprep.subr.mxu0 0.0
    %821 = vmatpush1.msra.mxu0 0.0
    %822 = vmatprep.subr.mxu0 0.0
    %823 = vmatpush1.msra.mxu0 0.0
    %824 = vmatprep.subr.mxu0 0.0
    %825 = vmatpush1.msra.mxu0 0.0
    %826 = vmatprep.subr.mxu0 0.0
    %827 = vmatpush1.msra.mxu0 0.0
    %828 = vmatprep.subr.mxu0 0.0
    %829 = vmatpush1.msra.mxu0 0.0
    %830 = vmatprep.subr.mxu0 0.0
    %831 = vmatpush1.msra.mxu0 0.0
    %832 = vmatprep.subr.mxu0 0.0
    %833 = vmatpush1.msra.mxu0 0.0
    %834 = vmatprep.subr.mxu0 0.0
    %835 = vmatpush1.msra.mxu0 0.0
    %836 = vmatprep.subr.mxu0 0.0
    %837 = vmatpush1.msra.mxu0 0.0
    %838 = vmatprep.subr.mxu0 0.0
    %839 = vmatpush1.msra.mxu0 0.0
    %840 = vmatprep.subr.mxu0 0.0
    %841 = vmatpush1.msra.mxu0 0.0
    %842 = vmatprep.subr.mxu0 0.0
    %843 = vmatpush1.msra.mxu0 0.0
    %844 = vmatprep.subr.mxu0 0.0
    %845 = vmatpush1.msra.mxu0 0.0
    %846 = vmatprep.subr.mxu0 0.0
    %847 = vmatpush1.msra.mxu0 0.0
    %848 = vmatprep.subr.mxu0 0.0
    %849 = vmatpush1.msra.mxu0 0.0
    %850 = vmatprep.subr.mxu0 0.0
    %851 = vmatpush1.msra.mxu0 0.0
    %852 = vmatprep.subr.mxu0 0.0
    %853 = vmatpush1.msra.mxu0 0.0
    %854 = vmatprep.subr.mxu0 0.0
    %855 = vmatpush1.msra.mxu0 0.0
    %856 = vmatprep.mubr.f32.mxu0 0.0
    %857 = vmatmul.mubr.f32.gmra.mrb[0].mxu0 %v719
    %v858 = vpop.f32.mrb[0].mxu0
    %v859 = vadd.f32 %v713, %v858
    %v860 = vpop.f32.mrb[0].mxu0
    %v861 = vadd.f32 %v715, %v860
    %862 = vdwg.mxu0
    %v863 = vld [vmem:[#allocation8] sm:$0xff]
    %v864 = vld [vmem:[#allocation8 + $0x8] sm:$0xff]
    %v865 = vld [vmem:[#allocation8 + $0x10] sm:$0xff]
    %v866 = vld [vmem:[#allocation8 + $0x18] sm:$0xff]
    %v867 = vld [vmem:[#allocation8 + $0x20] sm:$0xff]
    %v868 = vld [vmem:[#allocation8 + $0x28] sm:$0xff]
    %v869 = vld [vmem:[#allocation8 + $0x30] sm:$0xff]
    %v870 = vld [vmem:[#allocation8 + $0x38] sm:$0xff]
    %v871 = vld [vmem:[#allocation8 + $0x40] sm:$0xff]
    %v872 = vld [vmem:[#allocation8 + $0x48] sm:$0xff]
    %v873 = vld [vmem:[#allocation8 + $0x50] sm:$0xff]
    %v874 = vld [vmem:[#allocation8 + $0x58] sm:$0xff]
    %v875 = vld [vmem:[#allocation8 + $0x60] sm:$0xff]
    %v876 = vld [vmem:[#allocation8 + $0x68] sm:$0xff]
    %v877 = vld [vmem:[#allocation8 + $0x70] sm:$0xff]
    %v878 = vld [vmem:[#allocation8 + $0x78] sm:$0xff]
    %v879 = vld [vmem:[#allocation8 + $0x80] sm:$0xff]
    %v880 = vld [vmem:[#allocation8 + $0x88] sm:$0xff]
    %v881 = vld [vmem:[#allocation8 + $0x90] sm:$0xff]
    %v882 = vld [vmem:[#allocation8 + $0x98] sm:$0xff]
    %v883 = vld [vmem:[#allocation8 + $0xa0] sm:$0xff]
    %v884 = vld [vmem:[#allocation8 + $0xa8] sm:$0xff]
    %v885 = vld [vmem:[#allocation8 + $0xb0] sm:$0xff]
    %v886 = vld [vmem:[#allocation8 + $0xb8] sm:$0xff]
    %v887 = vld [vmem:[#allocation8 + $0xc0] sm:$0xff]
    %v888 = vld [vmem:[#allocation8 + $0xc8] sm:$0xff]
    %v889 = vld [vmem:[#allocation8 + $0xd0] sm:$0xff]
    %v890 = vld [vmem:[#allocation8 + $0xd8] sm:$0xff]
    %v891 = vld [vmem:[#allocation8 + $0xe0] sm:$0xff]
    %v892 = vld [vmem:[#allocation8 + $0xe8] sm:$0xff]
    %v893 = vld [vmem:[#allocation8 + $0xf0] sm:$0xff]
    %v894 = vld [vmem:[#allocation8 + $0xf8] sm:$0xff]
    %v895 = vld [vmem:[#allocation8 + $0x100] sm:$0xff]
    %v896 = vld [vmem:[#allocation8 + $0x108] sm:$0xff]
    %v897 = vld [vmem:[#allocation8 + $0x110] sm:$0xff]
    %v898 = vld [vmem:[#allocation8 + $0x118] sm:$0xff]
    %v899 = vld [vmem:[#allocation8 + $0x120] sm:$0xff]
    %v900 = vld [vmem:[#allocation8 + $0x128] sm:$0xff]
    %v901 = vld [vmem:[#allocation8 + $0x130] sm:$0xff]
    %v902 = vld [vmem:[#allocation8 + $0x138] sm:$0xff]
    %v903 = vld [vmem:[#allocation8 + $0x140] sm:$0xff]
    %v904 = vld [vmem:[#allocation8 + $0x148] sm:$0xff]
    %v905 = vld [vmem:[#allocation8 + $0x150] sm:$0xff]
    %v906 = vld [vmem:[#allocation8 + $0x158] sm:$0xff]
    %v907 = vld [vmem:[#allocation8 + $0x160] sm:$0xff]
    %v908 = vld [vmem:[#allocation8 + $0x168] sm:$0xff]
    %v909 = vld [vmem:[#allocation8 + $0x170] sm:$0xff]
    %v910 = vld [vmem:[#allocation8 + $0x178] sm:$0xff]
    %v911 = vrot.slane %v396, 2
    %v912 = vrot.slane %v469, 1
    %v913 = vsel %vm571, %v912, %v911
    %v914 = vsel %vm111, %v913, 0
    %916 = vmatprep.subr.mxu0 %v864
    %917 = vmatpush1.msra.mxu0 %v863
    %918 = vmatprep.subr.mxu0 %v868
    %919 = vmatpush1.msra.mxu0 %v867
    %920 = vmatprep.subr.mxu0 %v872
    %921 = vmatpush1.msra.mxu0 %v871
    %922 = vmatprep.subr.mxu0 %v876
    %923 = vmatpush1.msra.mxu0 %v875
    %924 = vmatprep.subr.mxu0 %v880
    %925 = vmatpush1.msra.mxu0 %v879
    %926 = vmatprep.subr.mxu0 %v884
    %927 = vmatpush1.msra.mxu0 %v883
    %928 = vmatprep.subr.mxu0 %v888
    %929 = vmatpush1.msra.mxu0 %v887
    %930 = vmatprep.subr.mxu0 %v892
    %931 = vmatpush1.msra.mxu0 %v891
    %932 = vmatprep.subr.mxu0 %v896
    %933 = vmatpush1.msra.mxu0 %v895
    %934 = vmatprep.subr.mxu0 %v900
    %935 = vmatpush1.msra.mxu0 %v899
    %936 = vmatprep.subr.mxu0 %v904
    %937 = vmatpush1.msra.mxu0 %v903
    %938 = vmatprep.subr.mxu0 %v908
    %939 = vmatpush1.msra.mxu0 %v907
    %940 = vmatprep.subr.mxu0 0.0
    %941 = vmatpush1.msra.mxu0 0.0
    %942 = vmatprep.subr.mxu0 0.0
    %943 = vmatpush1.msra.mxu0 0.0
    %944 = vmatprep.subr.mxu0 0.0
    %945 = vmatpush1.msra.mxu0 0.0
    %946 = vmatprep.subr.mxu0 0.0
    %947 = vmatpush1.msra.mxu0 0.0
    %948 = vmatprep.subr.mxu0 0.0
    %949 = vmatpush1.msra.mxu0 0.0
    %950 = vmatprep.subr.mxu0 0.0
    %951 = vmatpush1.msra.mxu0 0.0
    %952 = vmatprep.subr.mxu0 0.0
    %953 = vmatpush1.msra.mxu0 0.0
    %954 = vmatprep.subr.mxu0 0.0
    %955 = vmatpush1.msra.mxu0 0.0
    %956 = vmatprep.subr.mxu0 0.0
    %957 = vmatpush1.msra.mxu0 0.0
    %958 = vmatprep.subr.mxu0 0.0
    %959 = vmatpush1.msra.mxu0 0.0
    %960 = vmatprep.subr.mxu0 0.0
    %961 = vmatpush1.msra.mxu0 0.0
    %962 = vmatprep.subr.mxu0 0.0
    %963 = vmatpush1.msra.mxu0 0.0
    %964 = vmatprep.subr.mxu0 0.0
    %965 = vmatpush1.msra.mxu0 0.0
    %966 = vmatprep.subr.mxu0 0.0
    %967 = vmatpush1.msra.mxu0 0.0
    %968 = vmatprep.subr.mxu0 0.0
    %969 = vmatpush1.msra.mxu0 0.0
    %970 = vmatprep.subr.mxu0 0.0
    %971 = vmatpush1.msra.mxu0 0.0
    %972 = vmatprep.subr.mxu0 0.0
    %973 = vmatpush1.msra.mxu0 0.0
    %974 = vmatprep.subr.mxu0 0.0
    %975 = vmatpush1.msra.mxu0 0.0
    %976 = vmatprep.subr.mxu0 0.0
    %977 = vmatpush1.msra.mxu0 0.0
    %978 = vmatprep.subr.mxu0 0.0
    %979 = vmatpush1.msra.mxu0 0.0
    %980 = vmatprep.mubr.f32.mxu0 0.0
    %981 = vmatmul.mubr.f32.gmra.mrb[0].mxu0 %v914
    %v982 = vpop.f32.mrb[0].mxu0
    %v983 = vadd.f32 0.0, %v982
    %v984 = vpop.f32.mrb[0].mxu0
    %v985 = vadd.f32 0.0, %v984
    %986 = vdwg.mxu0
    %987 = vmatprep.subr.mxu0 %v866
    %988 = vmatpush1.msra.mxu0 %v865
    %989 = vmatprep.subr.mxu0 %v870
    %990 = vmatpush1.msra.mxu0 %v869
    %991 = vmatprep.subr.mxu0 %v874
    %992 = vmatpush1.msra.mxu0 %v873
    %993 = vmatprep.subr.mxu0 %v878
    %994 = vmatpush1.msra.mxu0 %v877
    %995 = vmatprep.subr.mxu0 %v882
    %996 = vmatpush1.msra.mxu0 %v881
    %997 = vmatprep.subr.mxu0 %v886
    %998 = vmatpush1.msra.mxu0 %v885
    %999 = vmatprep.subr.mxu0 %v890
    %1000 = vmatpush1.msra.mxu0 %v889
    %1001 = vmatprep.subr.mxu0 %v894
    %1002 = vmatpush1.msra.mxu0 %v893
    %1003 = vmatprep.subr.mxu0 %v898
    %1004 = vmatpush1.msra.mxu0 %v897
    %1005 = vmatprep.subr.mxu0 %v902
    %1006 = vmatpush1.msra.mxu0 %v901
    %1007 = vmatprep.subr.mxu0 %v906
    %1008 = vmatpush1.msra.mxu0 %v905
    %1009 = vmatprep.subr.mxu0 %v910
    %1010 = vmatpush1.msra.mxu0 %v909
    %1011 = vmatprep.subr.mxu0 0.0
    %1012 = vmatpush1.msra.mxu0 0.0
    %1013 = vmatprep.subr.mxu0 0.0
    %1014 = vmatpush1.msra.mxu0 0.0
    %1015 = vmatprep.subr.mxu0 0.0
    %1016 = vmatpush1.msra.mxu0 0.0
    %1017 = vmatprep.subr.mxu0 0.0
    %1018 = vmatpush1.msra.mxu0 0.0
    %1019 = vmatprep.subr.mxu0 0.0
    %1020 = vmatpush1.msra.mxu0 0.0
    %1021 = vmatprep.subr.mxu0 0.0
    %1022 = vmatpush1.msra.mxu0 0.0
    %1023 = vmatprep.subr.mxu0 0.0
    %1024 = vmatpush1.msra.mxu0 0.0
    %1025 = vmatprep.subr.mxu0 0.0
    %1026 = vmatpush1.msra.mxu0 0.0
    %1027 = vmatprep.subr.mxu0 0.0
    %1028 = vmatpush1.msra.mxu0 0.0
    %1029 = vmatprep.subr.mxu0 0.0
    %1030 = vmatpush1.msra.mxu0 0.0
    %1031 = vmatprep.subr.mxu0 0.0
    %1032 = vmatpush1.msra.mxu0 0.0
    %1033 = vmatprep.subr.mxu0 0.0
    %1034 = vmatpush1.msra.mxu0 0.0
    %1035 = vmatprep.subr.mxu0 0.0
    %1036 = vmatpush1.msra.mxu0 0.0
    %1037 = vmatprep.subr.mxu0 0.0
    %1038 = vmatpush1.msra.mxu0 0.0
    %1039 = vmatprep.subr.mxu0 0.0
    %1040 = vmatpush1.msra.mxu0 0.0
    %1041 = vmatprep.subr.mxu0 0.0
    %1042 = vmatpush1.msra.mxu0 0.0
    %1043 = vmatprep.subr.mxu0 0.0
    %1044 = vmatpush1.msra.mxu0 0.0
    %1045 = vmatprep.subr.mxu0 0.0
    %1046 = vmatpush1.msra.mxu0 0.0
    %1047 = vmatprep.subr.mxu0 0.0
    %1048 = vmatpush1.msra.mxu0 0.0
    %1049 = vmatprep.subr.mxu0 0.0
    %1050 = vmatpush1.msra.mxu0 0.0
    %1051 = vmatprep.mubr.f32.mxu0 0.0
    %1052 = vmatmul.mubr.f32.gmra.mrb[0].mxu0 %v914
    %v1053 = vpop.f32.mrb[0].mxu0
    %v1054 = vadd.f32 0.0, %v1053
    %v1055 = vpop.f32.mrb[0].mxu0
    %v1056 = vadd.f32 0.0, %v1055
    %1057 = vdwg.mxu0
    %v1058 = vadd.f32 %v788, %v983
    %v1059 = vadd.f32 %v790, %v985
    %v1060 = vadd.f32 %v859, %v1054
    %v1061 = vadd.f32 %v861, %v1056
    %v1062 = vld [vmem:[%s8] sm:$0xf]
    %v1064 = vlaneseq
    %v1065 = vshrl.u32 %v1064, 7
    %v1066 = vsub.s32 0, %v1065
    %v1067 = vrot.slane %v1062, %v1066
    %v1068 = vlaneseq
    %v1069 = vshrl.u32 %v1068, 7
    %v1070 = vsub.s32 1, %v1069
    %v1071 = vrot.slane %v1062, %v1070
    %v1072 = vlaneseq
    %v1073 = vshrl.u32 %v1072, 7
    %v1074 = vsub.s32 2, %v1073
    %v1075 = vrot.slane %v1062, %v1074
    %v1076 = vlaneseq
    %v1077 = vshrl.u32 %v1076, 7
    %v1078 = vsub.s32 3, %v1077
    %v1079 = vrot.slane %v1062, %v1078
    %v1084 = vadd.f32 %v1058, %v1067
    %v1085 = vadd.f32 %v1059, %v1071
    %v1086 = vadd.f32 %v1060, %v1075
    %v1087 = vadd.f32 %v1061, %v1079
    %v1088 = vmax.f32 %v1084, 0.0
    %v1089 = vmax.f32 %v1085, 0.0
    %v1090 = vmax.f32 %v1086, 0.0
    %v1091 = vmax.f32 %v1087, 0.0
    %v1092 = vld [vmem:[#allocation9] sm:$0xff]
    %v1093 = vld [vmem:[#allocation9 + $0x8] sm:$0xff]
    %v1094 = vld [vmem:[#allocation9 + $0x10] sm:$0xff]
    %v1095 = vld [vmem:[#allocation9 + $0x18] sm:$0xff]
    %v1096 = vld [vmem:[#allocation9 + $0x20] sm:$0xff]
    %v1097 = vld [vmem:[#allocation9 + $0x28] sm:$0xff]
    %v1098 = vld [vmem:[#allocation9 + $0x30] sm:$0xff]
    %v1099 = vld [vmem:[#allocation9 + $0x38] sm:$0xff]
    %v1100 = vld [vmem:[#allocation9 + $0x40] sm:$0xff]
    %v1101 = vld [vmem:[#allocation9 + $0x48] sm:$0xff]
    %v1102 = vld [vmem:[#allocation9 + $0x50] sm:$0xff]
    %v1103 = vld [vmem:[#allocation9 + $0x58] sm:$0xff]
    %v1104 = vld [vmem:[#allocation9 + $0x60] sm:$0xff]
    %v1105 = vld [vmem:[#allocation9 + $0x68] sm:$0xff]
    %v1106 = vld [vmem:[#allocation9 + $0x70] sm:$0xff]
    %v1107 = vld [vmem:[#allocation9 + $0x78] sm:$0xff]
    %v1108 = vld [vmem:[#allocation9 + $0x80] sm:$0xff]
    %v1109 = vld [vmem:[#allocation9 + $0x88] sm:$0xff]
    %v1110 = vld [vmem:[#allocation9 + $0x90] sm:$0xff]
    %v1111 = vld [vmem:[#allocation9 + $0x98] sm:$0xff]
    %v1112 = vld [vmem:[#allocation9 + $0xa0] sm:$0xff]
    %v1113 = vld [vmem:[#allocation9 + $0xa8] sm:$0xff]
    %v1114 = vld [vmem:[#allocation9 + $0xb0] sm:$0xff]
    %v1115 = vld [vmem:[#allocation9 + $0xb8] sm:$0xff]
    %v1116 = vld [vmem:[#allocation9 + $0xc0] sm:$0xff]
    %v1117 = vld [vmem:[#allocation9 + $0xc8] sm:$0xff]
    %v1118 = vld [vmem:[#allocation9 + $0xd0] sm:$0xff]
    %v1119 = vld [vmem:[#allocation9 + $0xd8] sm:$0xff]
    %v1120 = vld [vmem:[#allocation9 + $0xe0] sm:$0xff]
    %v1121 = vld [vmem:[#allocation9 + $0xe8] sm:$0xff]
    %v1122 = vld [vmem:[#allocation9 + $0xf0] sm:$0xff]
    %v1123 = vld [vmem:[#allocation9 + $0xf8] sm:$0xff]
    %v1124 = vld [vmem:[#allocation9 + $0x100] sm:$0xff]
    %v1125 = vld [vmem:[#allocation9 + $0x108] sm:$0xff]
    %v1126 = vld [vmem:[#allocation9 + $0x110] sm:$0xff]
    %v1127 = vld [vmem:[#allocation9 + $0x118] sm:$0xff]
    %v1128 = vld [vmem:[#allocation9 + $0x120] sm:$0xff]
    %v1129 = vld [vmem:[#allocation9 + $0x128] sm:$0xff]
    %v1130 = vld [vmem:[#allocation9 + $0x130] sm:$0xff]
    %v1131 = vld [vmem:[#allocation9 + $0x138] sm:$0xff]
    %v1132 = vld [vmem:[#allocation9 + $0x140] sm:$0xff]
    %v1133 = vld [vmem:[#allocation9 + $0x148] sm:$0xff]
    %v1134 = vld [vmem:[#allocation9 + $0x150] sm:$0xff]
    %v1135 = vld [vmem:[#allocation9 + $0x158] sm:$0xff]
    %v1136 = vld [vmem:[#allocation9 + $0x160] sm:$0xff]
    %v1137 = vld [vmem:[#allocation9 + $0x168] sm:$0xff]
    %v1138 = vld [vmem:[#allocation9 + $0x170] sm:$0xff]
    %v1139 = vld [vmem:[#allocation9 + $0x178] sm:$0xff]
    %v1140 = vld [vmem:[#allocation9 + $0x180] sm:$0xff]
    %v1141 = vld [vmem:[#allocation9 + $0x188] sm:$0xff]
    %v1142 = vld [vmem:[#allocation9 + $0x190] sm:$0xff]
    %v1143 = vld [vmem:[#allocation9 + $0x198] sm:$0xff]
    %v1144 = vld [vmem:[#allocation9 + $0x1a0] sm:$0xff]
    %v1145 = vld [vmem:[#allocation9 + $0x1a8] sm:$0xff]
    %v1146 = vld [vmem:[#allocation9 + $0x1b0] sm:$0xff]
    %v1147 = vld [vmem:[#allocation9 + $0x1b8] sm:$0xff]
    %v1148 = vld [vmem:[#allocation9 + $0x1c0] sm:$0xff]
    %v1149 = vld [vmem:[#allocation9 + $0x1c8] sm:$0xff]
    %v1150 = vld [vmem:[#allocation9 + $0x1d0] sm:$0xff]
    %v1151 = vld [vmem:[#allocation9 + $0x1d8] sm:$0xff]
    %v1152 = vld [vmem:[#allocation9 + $0x1e0] sm:$0xff]
    %v1153 = vld [vmem:[#allocation9 + $0x1e8] sm:$0xff]
    %v1154 = vld [vmem:[#allocation9 + $0x1f0] sm:$0xff]
    %v1155 = vld [vmem:[#allocation9 + $0x1f8] sm:$0xff]
    %v1156 = vld [vmem:[%s10] sm:$0x1]
    %v1158 = vlaneseq
    %v1159 = vshrl.u32 %v1158, 7
    %v1160 = vsub.s32 0, %v1159
    %v1161 = vrot.slane %v1156, %v1160
    %1163 = vmatprep.subr.mxu0 0.0
    %1164 = vmatpush1.msra.mxu0 %v1092
    %1165 = vmatprep.subr.mxu0 0.0
    %1166 = vmatpush1.msra.mxu0 %v1093
    %1167 = vmatprep.subr.mxu0 0.0
    %1168 = vmatpush1.msra.mxu0 %v1094
    %1169 = vmatprep.subr.mxu0 0.0
    %1170 = vmatpush1.msra.mxu0 %v1095
    %1171 = vmatprep.subr.mxu0 0.0
    %1172 = vmatpush1.msra.mxu0 %v1096
    %1173 = vmatprep.subr.mxu0 0.0
    %1174 = vmatpush1.msra.mxu0 %v1097
    %1175 = vmatprep.subr.mxu0 0.0
    %1176 = vmatpush1.msra.mxu0 %v1098
    %1177 = vmatprep.subr.mxu0 0.0
    %1178 = vmatpush1.msra.mxu0 %v1099
    %1179 = vmatprep.subr.mxu0 0.0
    %1180 = vmatpush1.msra.mxu0 %v1100
    %1181 = vmatprep.subr.mxu0 0.0
    %1182 = vmatpush1.msra.mxu0 %v1101
    %1183 = vmatprep.subr.mxu0 0.0
    %1184 = vmatpush1.msra.mxu0 %v1102
    %1185 = vmatprep.subr.mxu0 0.0
    %1186 = vmatpush1.msra.mxu0 %v1103
    %1187 = vmatprep.subr.mxu0 0.0
    %1188 = vmatpush1.msra.mxu0 %v1104
    %1189 = vmatprep.subr.mxu0 0.0
    %1190 = vmatpush1.msra.mxu0 %v1105
    %1191 = vmatprep.subr.mxu0 0.0
    %1192 = vmatpush1.msra.mxu0 %v1106
    %1193 = vmatprep.subr.mxu0 0.0
    %1194 = vmatpush1.msra.mxu0 %v1107
    %1195 = vmatprep.subr.mxu0 0.0
    %1196 = vmatpush1.msra.mxu0 %v1108
    %1197 = vmatprep.subr.mxu0 0.0
    %1198 = vmatpush1.msra.mxu0 %v1109
    %1199 = vmatprep.subr.mxu0 0.0
    %1200 = vmatpush1.msra.mxu0 %v1110
    %1201 = vmatprep.subr.mxu0 0.0
    %1202 = vmatpush1.msra.mxu0 %v1111
    %1203 = vmatprep.subr.mxu0 0.0
    %1204 = vmatpush1.msra.mxu0 %v1112
    %1205 = vmatprep.subr.mxu0 0.0
    %1206 = vmatpush1.msra.mxu0 %v1113
    %1207 = vmatprep.subr.mxu0 0.0
    %1208 = vmatpush1.msra.mxu0 %v1114
    %1209 = vmatprep.subr.mxu0 0.0
    %1210 = vmatpush1.msra.mxu0 %v1115
    %1211 = vmatprep.subr.mxu0 0.0
    %1212 = vmatpush1.msra.mxu0 %v1116
    %1213 = vmatprep.subr.mxu0 0.0
    %1214 = vmatpush1.msra.mxu0 %v1117
    %1215 = vmatprep.subr.mxu0 0.0
    %1216 = vmatpush1.msra.mxu0 %v1118
    %1217 = vmatprep.subr.mxu0 0.0
    %1218 = vmatpush1.msra.mxu0 %v1119
    %1219 = vmatprep.subr.mxu0 0.0
    %1220 = vmatpush1.msra.mxu0 %v1120
    %1221 = vmatprep.subr.mxu0 0.0
    %1222 = vmatpush1.msra.mxu0 %v1121
    %1223 = vmatprep.subr.mxu0 0.0
    %1224 = vmatpush1.msra.mxu0 %v1122
    %1225 = vmatprep.subr.mxu0 0.0
    %1226 = vmatpush1.msra.mxu0 %v1123
    %1227 = vmatprep.mubr.f32.mxu0 %v1089
    %1228 = vmatmul.mubr.f32.gmra.mrb[0].mxu0 %v1088
    %v1229 = vpop.f32.mrb[0].mxu0
    %v1230 = vadd.f32 %v1161, %v1229
    %v1231 = vpop.f32.mrb[0].mxu0
    %1232 = vdwg.mxu0
    %1233 = vmatprep.subr.mxu0 0.0
    %1234 = vmatpush1.msra.mxu0 %v1124
    %1235 = vmatprep.subr.mxu0 0.0
    %1236 = vmatpush1.msra.mxu0 %v1125
    %1237 = vmatprep.subr.mxu0 0.0
    %1238 = vmatpush1.msra.mxu0 %v1126
    %1239 = vmatprep.subr.mxu0 0.0
    %1240 = vmatpush1.msra.mxu0 %v1127
    %1241 = vmatprep.subr.mxu0 0.0
    %1242 = vmatpush1.msra.mxu0 %v1128
    %1243 = vmatprep.subr.mxu0 0.0
    %1244 = vmatpush1.msra.mxu0 %v1129
    %1245 = vmatprep.subr.mxu0 0.0
    %1246 = vmatpush1.msra.mxu0 %v1130
    %1247 = vmatprep.subr.mxu0 0.0
    %1248 = vmatpush1.msra.mxu0 %v1131
    %1249 = vmatprep.subr.mxu0 0.0
    %1250 = vmatpush1.msra.mxu0 %v1132
    %1251 = vmatprep.subr.mxu0 0.0
    %1252 = vmatpush1.msra.mxu0 %v1133
    %1253 = vmatprep.subr.mxu0 0.0
    %1254 = vmatpush1.msra.mxu0 %v1134
    %1255 = vmatprep.subr.mxu0 0.0
    %1256 = vmatpush1.msra.mxu0 %v1135
    %1257 = vmatprep.subr.mxu0 0.0
    %1258 = vmatpush1.msra.mxu0 %v1136
    %1259 = vmatprep.subr.mxu0 0.0
    %1260 = vmatpush1.msra.mxu0 %v1137
    %1261 = vmatprep.subr.mxu0 0.0
    %1262 = vmatpush1.msra.mxu0 %v1138
    %1263 = vmatprep.subr.mxu0 0.0
    %1264 = vmatpush1.msra.mxu0 %v1139
    %1265 = vmatprep.subr.mxu0 0.0
    %1266 = vmatpush1.msra.mxu0 %v1140
    %1267 = vmatprep.subr.mxu0 0.0
    %1268 = vmatpush1.msra.mxu0 %v1141
    %1269 = vmatprep.subr.mxu0 0.0
    %1270 = vmatpush1.msra.mxu0 %v1142
    %1271 = vmatprep.subr.mxu0 0.0
    %1272 = vmatpush1.msra.mxu0 %v1143
    %1273 = vmatprep.subr.mxu0 0.0
    %1274 = vmatpush1.msra.mxu0 %v1144
    %1275 = vmatprep.subr.mxu0 0.0
    %1276 = vmatpush1.msra.mxu0 %v1145
    %1277 = vmatprep.subr.mxu0 0.0
    %1278 = vmatpush1.msra.mxu0 %v1146
    %1279 = vmatprep.subr.mxu0 0.0
    %1280 = vmatpush1.msra.mxu0 %v1147
    %1281 = vmatprep.subr.mxu0 0.0
    %1282 = vmatpush1.msra.mxu0 %v1148
    %1283 = vmatprep.subr.mxu0 0.0
    %1284 = vmatpush1.msra.mxu0 %v1149
    %1285 = vmatprep.subr.mxu0 0.0
    %1286 = vmatpush1.msra.mxu0 %v1150
    %1287 = vmatprep.subr.mxu0 0.0
    %1288 = vmatpush1.msra.mxu0 %v1151
    %1289 = vmatprep.subr.mxu0 0.0
    %1290 = vmatpush1.msra.mxu0 %v1152
    %1291 = vmatprep.subr.mxu0 0.0
    %1292 = vmatpush1.msra.mxu0 %v1153
    %1293 = vmatprep.subr.mxu0 0.0
    %1294 = vmatpush1.msra.mxu0 %v1154
    %1295 = vmatprep.subr.mxu0 0.0
    %1296 = vmatpush1.msra.mxu0 %v1155
    %1297 = vmatprep.mubr.f32.mxu0 %v1091
    %1298 = vmatmul.mubr.f32.gmra.mrb[0].mxu0 %v1090
    %v1299 = vpop.f32.mrb[0].mxu0
    %v1300 = vadd.f32 %v1230, %v1299
    %v1301 = vpop.f32.mrb[0].mxu0
    %1302 = vdwg.mxu0
    %1303 = vst [vmem:[#allocation11] sm:$0x3] %v1300
    // Predicated region
    $region62: #{tpu_custom_call.1} parent=1 // pred_check
      _
    $region63: #{tpu_custom_call.1} parent=1 // pred_check_branch
      %1305 = sbr.rel (0) target = $region65
    $region64: #{tpu_custom_call.1} parent=1 // pred_region
      %s1307 = ssub.s32 32, 32
      %1308 = vsyncadd [#allocation5], %s1307
      %s1310 = sshll.u32 [#allocation11], 4
      %s1311 = int_to_ptr.vmem [resolvable:$true] %s1310
      %1313 = dma.vmem_to_hbm [thread:$0]  %s1311, 32, %s11, [#allocation5]
    $region65: #{tpu_custom_call.1} parent=1 // pred_fallthru
      _
    // Predicated region
    $region66: #{tpu_custom_call.1} parent=1 // pred_check
      _
    $region67: #{tpu_custom_call.1} parent=1 // pred_check_branch
      %1315 = sbr.rel (0) target = $region69
    $region68: #{tpu_custom_call.1} parent=1 // pred_region
      %1316 = dma.done [#allocation5], 32
    $region69: #{tpu_custom_call.1} parent=1 // pred_fallthru
      _
    %1317 = vsyncpa [#allocation4], 1
    %1318 = vsyncpa [#allocation7], 1
    %1319 = vsyncpa [#allocation10], 1
    %1320 = vsyncpa [#allocation5], 1

</llo_original>
